<compile_context>
chip_gen: v7x
topology: tpu7x:2x2x1
jax: 0.10.0
libtpu: 0.0.40
codegen_flags: <defaults>
</compile_context>

<pallas_src>
import functools

import jax
import jax.numpy as jnp
import numpy as np
from jax.experimental import pallas as pl
from jax.experimental.pallas import tpu as pltpu

EPS = 1e-5            # nn.BatchNorm2d default eps
LANE = 128            # TPU lane width -> channel padding target
TILE_M_TARGET = 1024  # rows per tile in the elementwise pass (review: 1024-2048)


# ----------------------------- helpers -------------------------------------------------

def _round_up(n, m):
    return ((n + m - 1) // m) * m


def _pad_axis(x, target, axis):
    pad = target - x.shape[axis]
    if pad == 0:
        return x
    widths = [(0, 0)] * x.ndim
    widths[axis] = (0, pad)
    return jnp.pad(x, widths)


def _pick_tile_m(M, target):
    """Largest multiple-of-8 divisor of M that is <= target; fall back to the whole
    array (block dims == array dims is always legal) if M has no such divisor."""
    t = min(M, target)
    t -= t % 8
    while t >= 8:
        if M % t == 0:
            return t
        t -= 8
    return M


def _vmem_limit(needed_bytes):
    """Generation-aware VMEM limit: ~1.5x the tile working set, capped at 3/4 of the
    physical VMEM of the chip we are actually compiling for (128 MiB on v5e/v6e,
    64 MiB on v7x)."""
    try:
        cap = int(pltpu.get_tpu_info().vmem_capacity_bytes)
    except Exception:  # pragma: no cover - conservative fallback
        cap = 64 * 2**20
    limit = int(needed_bytes * 1.5) + (2 << 20)
    return int(max(8 << 20, min(limit, (cap * 3) // 4)))


def _swish(y, approx):
    # Swish = y * sigmoid(y); exp goes to the EUP, and with approx=True the reciprocal
    # also lands on the EUP slot (used for the bf16 path where it is accuracy-free).
    return y * pl.reciprocal(1.0 + jnp.exp(-y), approx=approx)


# ----------------------------- Pallas kernels ------------------------------------------

def _conv3x3_kernel(*refs, H, W, fuse_preact, approx):
    """One image per grid step.

    Optionally applies the previous block's folded BN+Swish (a_pre, c_pre) to the loaded
    tile, builds the 1-pixel zero halo in a VMEM scratch (no HBM pad pass), gathers an
    in-VMEM im2col once, and issues a single MXU dot with K = 9*Cin_p.  Emits the raw
    activation plus per-image Welford partials (mean, M2) for the batch statistics.
    Conv bias is intentionally omitted: training-mode BatchNorm subtracts the batch mean
    of (conv + bias), so the bias cancels exactly.
    """
    if fuse_preact:
        x_ref, a_ref, c_ref, w_ref, h_ref, st_ref, xpad_ref = refs
    else:
        x_ref, w_ref, h_ref, st_ref, xpad_ref = refs

    cin = xpad_ref.shape[-1]
    op_dtype = xpad_ref.dtype

    x = x_ref[0]                                          # (H, W, Cin_p)
    if fuse_preact:
        a = a_ref[...].reshape(1, 1, cin)                 # hoisted broadcasts
        c = c_ref[...].reshape(1, 1, cin)
        x = _swish(x.astype(jnp.float32) * a + c, approx)
    interior = x.astype(op_dtype)

    # In-VMEM halo: zero the scratch, overwrite the interior (no HBM jnp.pad pass).
    xpad_ref[...] = jnp.zeros(xpad_ref.shape, xpad_ref.dtype)
    xpad_ref[1:H + 1, 1:W + 1, :] = interior

    # im2col built once -> single dot, contraction depth 9*Cin_p (>= 256 for Cin_p>=32).
    xpad = xpad_ref[...]
    cols = []
    for dh in range(3):                                   # statically unrolled taps
        for dw in range(3):
            cols.append(xpad[dh:dh + H, dw:dw + W, :].reshape(H * W, cin))
    patches = jnp.concatenate(cols, axis=1)               # (H*W, 9*Cin_p)
    acc = jnp.dot(patches, w_ref[...], preferred_element_type=jnp.float32)  # (H*W, Cp)

    # Per-image Welford partials (combined with Chan's formula in the JAX glue).
    inv_m = 1.0 / float(H * W)
    mean_i = jnp.sum(acc, axis=0, keepdims=True) * inv_m  # (1, Cp)
    dev = acc - mean_i
    m2_i = jnp.sum(dev * dev, axis=0, keepdims=True)      # (1, Cp)
    st_ref[0, 0:1, :] = mean_i                            # two direct row stores
    st_ref[0, 1:2, :] = m2_i

    h_ref[0] = acc.astype(h_ref.dtype)                    # bf16 by default


def _bn_swish_kernel(*refs, has_residual, approx):
    """Tiled elementwise pass: y = h*a + c (folded BN), Swish, optional residual add."""
    if has_residual:
        h_ref, a_ref, c_ref, r_ref, o_ref = refs
    else:
        h_ref, a_ref, c_ref, o_ref = refs
    y = h_ref[...].astype(jnp.float32) * a_ref[...] + c_ref[...]
    s = _swish(y, approx)
    if has_residual:
        s = s + r_ref[...].astype(jnp.float32)
    o_ref[...] = s.astype(o_ref.dtype)


# ----------------------------- pallas_call wrappers ------------------------------------

def conv3x3_stats(x_nhwc, w_flat, a_pre=None, c_pre=None, *, op_dtype, out_dtype, approx):
    """x_nhwc: (N, H, W, Cin_p) unpadded image; w_flat: (9*Cin_p, Cp) tap-major weights.
    a_pre/c_pre: optional (1, Cin_p) folded BN+Swish of the previous block (fused).
    Returns raw activation (N, H*W, Cp) in out_dtype and per-image stats (N, 2, Cp) f32."""
    N, H, W, cin_p = x_nhwc.shape
    cp = w_flat.shape[-1]
    fuse = a_pre is not None

    in_specs = [pl.BlockSpec((1, H, W, cin_p), lambda n: (n, 0, 0, 0))]
    inputs = [x_nhwc]
    if fuse:
        in_specs += [pl.BlockSpec((1, cin_p), lambda n: (0, 0)),
                     pl.BlockSpec((1, cin_p), lambda n: (0, 0))]
        inputs += [a_pre, c_pre]
    in_specs.append(pl.BlockSpec((9 * cin_p, cp), lambda n: (0, 0)))
    inputs.append(w_flat)

    op_b = jnp.dtype(op_dtype).itemsize
    out_b = jnp.dtype(out_dtype).itemsize
    xb = H * W * cin_p * x_nhwc.dtype.itemsize
    wb = 9 * cin_p * cp * op_b
    hb = H * W * cp * out_b
    padb = (H + 2) * (W + 2) * cin_p * op_b
    patchesb = H * W * 9 * cin_p * op_b
    accb = H * W * cp * 4
    needed = 2 * (xb + wb + hb) + padb + patchesb + 3 * accb + 2 * H * W * cin_p * 4

    flops = 2 * N * H * W * 9 * cin_p * cp
    bytes_accessed = N * (xb + hb + 2 * cp * 4) + wb
    transcendentals = N * H * W * cin_p if fuse else 0

    h, st = pl.pallas_call(
        functools.partial(_conv3x3_kernel, H=H, W=W, fuse_preact=fuse, approx=approx),
        grid=(N,),
        in_specs=in_specs,
        out_specs=(
            pl.BlockSpec((1, H * W, cp), lambda n: (n, 0, 0)),
            pl.BlockSpec((1, 2, cp), lambda n: (n, 0, 0)),
        ),
        out_shape=(
            jax.ShapeDtypeStruct((N, H * W, cp), out_dtype),
            jax.ShapeDtypeStruct((N, 2, cp), jnp.float32),
        ),
        scratch_shapes=[pltpu.VMEM((H + 2, W + 2, cin_p), op_dtype)],
        compiler_params=pltpu.CompilerParams(
            dimension_semantics=("parallel",),
            vmem_limit_bytes=_vmem_limit(needed)),
        cost_estimate=pl.CostEstimate(
            flops=flops, transcendentals=transcendentals, bytes_accessed=bytes_accessed),
    )(*inputs)
    return h, st


def _fold_bn(stats, gamma_p, beta_p, m_per_image):
    """Chan-combine per-image (mean, M2) partials -> folded per-channel scale/shift.
    Numerically robust (no E[h^2]-E[h]^2 cancellation); biased batch variance as in
    training-mode nn.BatchNorm2d."""
    means = stats[:, 0, :]                                  # (N, Cp)
    m2s = stats[:, 1, :]
    n_img = stats.shape[0]
    mean = jnp.mean(means, axis=0)
    m2 = jnp.sum(m2s, axis=0) + m_per_image * jnp.sum((means - mean[None, :]) ** 2, axis=0)
    var = m2 / (n_img * m_per_image)
    a = gamma_p * jax.lax.rsqrt(var + EPS)
    c = beta_p - mean * a
    return a.reshape(1, -1).astype(jnp.float32), c.reshape(1, -1).astype(jnp.float32)


def bn_swish(h_flat, a, c, residual=None, tile_m=TILE_M_TARGET, approx=False):
    """h_flat: (M, Cp) raw conv output; a/c: (1, Cp) folded BN; residual: (M, Cp)|None."""
    M, cp = h_flat.shape
    tm = _pick_tile_m(M, tile_m)
    has_residual = residual is not None

    row_spec = pl.BlockSpec((tm, cp), lambda i: (i, 0))
    vec_spec = pl.BlockSpec((1, cp), lambda i: (0, 0))
    inputs = [h_flat, a, c]
    in_specs = [row_spec, vec_spec, vec_spec]
    if has_residual:
        inputs.append(residual)
        in_specs.append(row_spec)

    h_b = h_flat.dtype.itemsize
    r_b = residual.dtype.itemsize if has_residual else 0
    needed = 2 * tm * cp * (h_b + r_b + 4) + 3 * tm * cp * 4 + 8 * cp * 4
    bytes_accessed = M * cp * (h_b + r_b + 4) + 2 * cp * 4

    return pl.pallas_call(
        functools.partial(_bn_swish_kernel, has_residual=has_residual, approx=approx),
        grid=(M // tm,),
        in_specs=in_specs,
        out_specs=row_spec,
        out_shape=jax.ShapeDtypeStruct((M, cp), jnp.float32),
        compiler_params=pltpu.CompilerParams(
            dimension_semantics=("parallel",),
            vmem_limit_bytes=_vmem_limit(needed)),
        cost_estimate=pl.CostEstimate(
            flops=6 * M * cp, transcendentals=M * cp, bytes_accessed=bytes_accessed),
    )(*inputs)


# ----------------------------- ResBlock forward ----------------------------------------

def res_block_forward_nhwc(x_nhwc, params, residual=True, tile_m=TILE_M_TARGET,
                           compute_dtype=jnp.bfloat16):
    """Pallas-backed ResBlock forward on NHWC input (preferred boundary: no transposes).

    compute_dtype controls the MXU operand dtype and the dtype of the HBM-resident raw
    activations (bf16 by default: half the inter-pass HBM traffic, f32 accumulation and
    f32 batch statistics throughout).  Use jnp.float32 for bit-accurate validation.
    """
    w1, b1, g1, be1, w2, b2, g2, be2 = params               # conv weights in HWIO layout
    N, H, W, Cin = x_nhwc.shape
    Cout = w1.shape[-1]
    if w1.shape[0] != 3 or w1.shape[1] != 3:
        raise NotImplementedError("only kernel_size=3, stride=1 is implemented")
    if residual and Cin != Cout:
        raise ValueError("residual add requires in_channel == out_channel")

    cin_p = _round_up(Cin, LANE)
    cp = _round_up(Cout, LANE)
    M = N * H * W
    op_dtype = jnp.dtype(compute_dtype)
    approx = op_dtype == jnp.dtype(jnp.bfloat16)

    # x stays f32 in HBM: it is read once by conv1 (cast to bf16 in-kernel) and once as
    # the residual in the final elementwise pass, so no extra cast pass is needed.
    x = _pad_axis(x_nhwc.astype(jnp.float32), cin_p, axis=3)

    def prep_w(w, ci, co):
        wp = _pad_axis(_pad_axis(w.astype(jnp.float32), ci, axis=2), co, axis=3)
        return wp.reshape(9 * ci, co).astype(op_dtype)      # tap-major, matches im2col

    w1p = prep_w(w1, cin_p, cp)
    w2p = prep_w(w2, cp, cp)
    g1p, be1p = _pad_axis(g1, cp, 0), _pad_axis(be1, cp, 0)
    g2p, be2p = _pad_axis(g2, cp, 0), _pad_axis(be2, cp, 0)
    # Conv biases b1/b2 are absorbed exactly by the training-mode BatchNorm that follows
    # each conv (BN subtracts the batch mean of conv+bias), so they never touch the chip.
    del b1, b2

    # ---- block 1: conv1 + per-image BN partials (raw activation kept in compute dtype)
    h1, st1 = conv3x3_stats(x, w1p, op_dtype=op_dtype, out_dtype=op_dtype, approx=approx)
    a1, c1 = _fold_bn(st1, g1p, be1p, H * W)

    # ---- block 2: BN1+Swish fused into the conv2 kernel (no standalone elementwise pass)
    h2, st2 = conv3x3_stats(h1.reshape(N, H, W, cp), w2p, a_pre=a1, c_pre=c1,
                            op_dtype=op_dtype, out_dtype=op_dtype, approx=approx)
    a2, c2 = _fold_bn(st2, g2p, be2p, H * W)

    # ---- final BN2 + Swish (+ residual) elementwise pass, large lane-dense tiles
    res = x.reshape(M, cin_p) if residual else None
    out = bn_swish(h2.reshape(M, cp), a2, c2, residual=res, tile_m=tile_m, approx=approx)

    return out[:, :Cout].reshape(N, H, W, Cout)


def res_block_forward(x_nchw, params, residual=True, tile_m=TILE_M_TARGET,
                      compute_dtype=jnp.bfloat16):
    """PyTorch-facing wrapper (NCHW like nn.Conv2d).  Prefer res_block_forward_nhwc to
    avoid the two layout transposes when the surrounding model is already NHWC."""
    x = jnp.transpose(x_nchw, (0, 2, 3, 1))
    out = res_block_forward_nhwc(x, params, residual=residual, tile_m=tile_m,
                                 compute_dtype=compute_dtype)
    return jnp.transpose(out, (0, 3, 1, 2))


# ----------------------------- pure-JAX reference --------------------------------------

def ref_forward(x_nchw, params, residual=True):
    """Independent reference mirroring the PyTorch module (BN in training mode)."""
    w1, b1, g1, be1, w2, b2, g2, be2 = params

    def conv(x, w, b):
        y = jax.lax.conv_general_dilated(
            x, w, window_strides=(1, 1), padding="SAME",
            dimension_numbers=("NCHW", "HWIO", "NCHW"))
        return y + b[None, :, None, None]

    def bn_swish_ref(h, g, be):
        mu = jnp.mean(h, axis=(0, 2, 3), keepdims=True)
        var = jnp.mean((h - mu) ** 2, axis=(0, 2, 3), keepdims=True)
        hn = (h - mu) * jax.lax.rsqrt(var + EPS)
        hn = hn * g[None, :, None, None] + be[None, :, None, None]
        return hn * jax.nn.sigmoid(hn)

    h1 = bn_swish_ref(conv(x_nchw, w1, b1), g1, be1)
    out = bn_swish_ref(conv(h1, w2, b2), g2, be2)
    if residual:
        out = out + x_nchw
    return out


# ----------------------------- main -----------------------------------------------------

if __name__ == "__main__":
    N, C, H, W = 2, 4, 16, 16        # in_channel == out_channel so the residual add is valid
    K = 3

    key = jax.random.PRNGKey(0)
    k_x, k_w1, k_b1, k_w2, k_b2, k_g1, k_be1, k_g2, k_be2 = jax.random.split(key, 9)

    fan_in = C * K * K
    w1 = jax.random.normal(k_w1, (K, K, C, C), jnp.float32) / np.sqrt(fan_in)
    b1 = jax.random.normal(k_b1, (C,), jnp.float32) / np.sqrt(fan_in)
    w2 = jax.random.normal(k_w2, (K, K, C, C), jnp.float32) / np.sqrt(fan_in)
    b2 = jax.random.normal(k_b2, (C,), jnp.float32) / np.sqrt(fan_in)
    g1 = 1.0 + 0.1 * jax.random.normal(k_g1, (C,), jnp.float32)
    be1 = 0.1 * jax.random.normal(k_be1, (C,), jnp.float32)
    g2 = 1.0 + 0.1 * jax.random.normal(k_g2, (C,), jnp.float32)
    be2 = 0.1 * jax.random.normal(k_be2, (C,), jnp.float32)
    params = (w1, b1, g1, be1, w2, b2, g2, be2)

    x = jax.random.normal(k_x, (N, C, H, W), jnp.float32)

    ref = np.asarray(ref_forward(x, params, residual=True))
    ref_nr = np.asarray(ref_forward(x, params, residual=False))

    # f32 path: tight tolerance (validates the fused-kernel math end to end)
    fwd_f32 = jax.jit(functools.partial(res_block_forward, residual=True,
                                        compute_dtype=jnp.float32))
    out_f32 = jax.block_until_ready(fwd_f32(x, params))
    np.testing.assert_allclose(np.asarray(out_f32), ref, rtol=2e-3, atol=2e-3)
    assert out_f32.shape == (N, C, H, W)

    # bf16 path (default): HBM-optimized intermediates/operands, bf16-level tolerance
    fwd_bf16 = jax.jit(functools.partial(res_block_forward, residual=True))
    out_bf16 = jax.block_until_ready(fwd_bf16(x, params))
    np.testing.assert_allclose(np.asarray(out_bf16), ref, rtol=5e-2, atol=5e-2)

    # no-residual kernel variant
    fwd_nr = jax.jit(functools.partial(res_block_forward, residual=False,
                                       compute_dtype=jnp.float32))
    out_nr = jax.block_until_ready(fwd_nr(x, params))
    np.testing.assert_allclose(np.asarray(out_nr), ref_nr, rtol=2e-3, atol=2e-3)

    print("KERNEL_OK")
</pallas_src>

<mosaic_0001>
module attributes {stable_mosaic.version = 11 : i64} {
  func.func @_conv3x3_kernel(%arg0: i32, %arg1: memref<1x16x16x128xf32, #tpu.memory_space<vmem>>, %arg2: memref<1152x128xf32, #tpu.memory_space<vmem>>, %arg3: memref<1x256x128xf32, #tpu.memory_space<vmem>>, %arg4: memref<1x2x128xf32, #tpu.memory_space<vmem>>, %arg5: memref<18x18x128xf32, #tpu.memory_space<vmem>>) attributes {dimension_semantics = [#tpu.dimension_semantics<parallel>], iteration_bounds = array<i64: 2>, scalar_prefetch = 0 : i64, scratch_operands = 1 : i64, tpu.core_type = #tpu.core_type<tc>, window_params = [{transform_indices = @transform_0, window_bounds = array<i64: 1, 16, 16, 128>}, {pipeline_mode = #tpu.pipeline_mode<synchronous>, transform_indices = @transform_1, window_bounds = array<i64: 1152, 128>}, {transform_indices = @transform_2, window_bounds = array<i64: 1, 256, 128>}, {transform_indices = @transform_3, window_bounds = array<i64: 1, 2, 128>}]} {
    %c0 = arith.constant 0 : index
    %c0_0 = arith.constant 0 : index
    %c0_1 = arith.constant 0 : index
    %c0_2 = arith.constant 0 : index
    %0 = vector.load %arg1[%c0, %c0_0, %c0_1, %c0_2] : memref<1x16x16x128xf32, #tpu.memory_space<vmem>>, vector<1x16x16x128xf32>
    %1 = vector.shape_cast %0 : vector<1x16x16x128xf32> to vector<16x16x128xf32>
    %cst = arith.constant 0.000000e+00 : f32
    %2 = vector.broadcast %cst : f32 to vector<18x18x128xf32>
    %c0_3 = arith.constant 0 : index
    %c0_4 = arith.constant 0 : index
    %c0_5 = arith.constant 0 : index
    %3 = vector.load %arg5[%c0_3, %c0_4, %c0_5] : memref<18x18x128xf32, #tpu.memory_space<vmem>>, vector<18x18x128xf32>
    tpu.vector_store %arg5[%c0_3, %c0_4, %c0_5], %2 {strides = array<i32>} : memref<18x18x128xf32, #tpu.memory_space<vmem>>, vector<18x18x128xf32>,
    %c1 = arith.constant 1 : index
    %c1_6 = arith.constant 1 : index
    %c0_7 = arith.constant 0 : index
    %4 = vector.load %arg5[%c1, %c1_6, %c0_7] : memref<18x18x128xf32, #tpu.memory_space<vmem>>, vector<16x16x128xf32>
    tpu.vector_store %arg5[%c1, %c1_6, %c0_7], %1 {strides = array<i32>} : memref<18x18x128xf32, #tpu.memory_space<vmem>>, vector<16x16x128xf32>,
    %c0_8 = arith.constant 0 : index
    %c0_9 = arith.constant 0 : index
    %c0_10 = arith.constant 0 : index
    %5 = vector.load %arg5[%c0_8, %c0_9, %c0_10] : memref<18x18x128xf32, #tpu.memory_space<vmem>>, vector<18x18x128xf32>
    %6 = vector.extract_strided_slice %5 {offsets = [0, 0, 0], sizes = [16, 16, 128], strides = [1, 1, 1]} : vector<18x18x128xf32> to vector<16x16x128xf32>
    %7 = vector.shape_cast %6 : vector<16x16x128xf32> to vector<256x128xf32>
    %8 = vector.extract_strided_slice %5 {offsets = [0, 1, 0], sizes = [16, 16, 128], strides = [1, 1, 1]} : vector<18x18x128xf32> to vector<16x16x128xf32>
    %9 = vector.shape_cast %8 : vector<16x16x128xf32> to vector<256x128xf32>
    %10 = vector.extract_strided_slice %5 {offsets = [0, 2, 0], sizes = [16, 16, 128], strides = [1, 1, 1]} : vector<18x18x128xf32> to vector<16x16x128xf32>
    %11 = vector.shape_cast %10 : vector<16x16x128xf32> to vector<256x128xf32>
    %12 = vector.extract_strided_slice %5 {offsets = [1, 0, 0], sizes = [16, 16, 128], strides = [1, 1, 1]} : vector<18x18x128xf32> to vector<16x16x128xf32>
    %13 = vector.shape_cast %12 : vector<16x16x128xf32> to vector<256x128xf32>
    %14 = vector.extract_strided_slice %5 {offsets = [1, 1, 0], sizes = [16, 16, 128], strides = [1, 1, 1]} : vector<18x18x128xf32> to vector<16x16x128xf32>
    %15 = vector.shape_cast %14 : vector<16x16x128xf32> to vector<256x128xf32>
    %16 = vector.extract_strided_slice %5 {offsets = [1, 2, 0], sizes = [16, 16, 128], strides = [1, 1, 1]} : vector<18x18x128xf32> to vector<16x16x128xf32>
    %17 = vector.shape_cast %16 : vector<16x16x128xf32> to vector<256x128xf32>
    %18 = vector.extract_strided_slice %5 {offsets = [2, 0, 0], sizes = [16, 16, 128], strides = [1, 1, 1]} : vector<18x18x128xf32> to vector<16x16x128xf32>
    %19 = vector.shape_cast %18 : vector<16x16x128xf32> to vector<256x128xf32>
    %20 = vector.extract_strided_slice %5 {offsets = [2, 1, 0], sizes = [16, 16, 128], strides = [1, 1, 1]} : vector<18x18x128xf32> to vector<16x16x128xf32>
    %21 = vector.shape_cast %20 : vector<16x16x128xf32> to vector<256x128xf32>
    %22 = vector.extract_strided_slice %5 {offsets = [2, 2, 0], sizes = [16, 16, 128], strides = [1, 1, 1]} : vector<18x18x128xf32> to vector<16x16x128xf32>
    %23 = vector.shape_cast %22 : vector<16x16x128xf32> to vector<256x128xf32>
    %24 = tpu.concatenate %7, %9, %11, %13, %15, %17, %19, %21, %23 in 1 : vector<256x128xf32>, vector<256x128xf32>, vector<256x128xf32>, vector<256x128xf32>, vector<256x128xf32>, vector<256x128xf32>, vector<256x128xf32>, vector<256x128xf32>, vector<256x128xf32> -> vector<256x1152xf32>
    %c0_11 = arith.constant 0 : index
    %c0_12 = arith.constant 0 : index
    %25 = vector.load %arg2[%c0_11, %c0_12] : memref<1152x128xf32, #tpu.memory_space<vmem>>, vector<1152x128xf32>
    %cst_13 = arith.constant dense<0.000000e+00> : vector<256x128xf32>
    %26 = tpu.matmul %24, %25, %cst_13 {dimension_numbers = #tpu.dot_dimension_numbers<[1], [0], [0], [1], [0, 0, 1, 1], [], []>} : vector<256x1152xf32>, vector<1152x128xf32>, vector<256x128xf32> -> vector<256x128xf32>
    %cst_14 = arith.constant dense<0.000000e+00> : vector<128xf32>
    %27 = vector.multi_reduction <add>, %26, %cst_14 [0] : vector<256x128xf32> to vector<128xf32>
    %28 = vector.shape_cast %27 : vector<128xf32> to vector<1x128xf32>
    %cst_15 = arith.constant 3.906250e-03 : f32
    %29 = vector.broadcast %cst_15 : f32 to vector<1x128xf32>
    %30 = arith.mulf %28, %29 : vector<1x128xf32>
    %31 = vector.broadcast %30 : vector<1x128xf32> to vector<256x128xf32>
    %32 = arith.subf %26, %31 : vector<256x128xf32>
    %33 = arith.mulf %32, %32 : vector<256x128xf32>
    %cst_16 = arith.constant dense<0.000000e+00> : vector<128xf32>
    %34 = vector.multi_reduction <add>, %33, %cst_16 [0] : vector<256x128xf32> to vector<128xf32>
    %35 = vector.shape_cast %34 : vector<128xf32> to vector<1x128xf32>
    %c0_17 = arith.constant 0 : index
    %c0_18 = arith.constant 0 : index
    %c0_19 = arith.constant 0 : index
    %36 = vector.load %arg4[%c0_17, %c0_18, %c0_19] : memref<1x2x128xf32, #tpu.memory_space<vmem>>, vector<1x1x128xf32>
    %37 = vector.shape_cast %36 : vector<1x1x128xf32> to vector<1x128xf32>
    %38 = vector.shape_cast %30 : vector<1x128xf32> to vector<1x1x128xf32>
    tpu.vector_store %arg4[%c0_17, %c0_18, %c0_19], %38 {strides = array<i32>} : memref<1x2x128xf32, #tpu.memory_space<vmem>>, vector<1x1x128xf32>,
    %c0_20 = arith.constant 0 : index
    %c1_21 = arith.constant 1 : index
    %c0_22 = arith.constant 0 : index
    %39 = vector.load %arg4[%c0_20, %c1_21, %c0_22] : memref<1x2x128xf32, #tpu.memory_space<vmem>>, vector<1x1x128xf32>
    %40 = vector.shape_cast %39 : vector<1x1x128xf32> to vector<1x128xf32>
    %41 = vector.shape_cast %35 : vector<1x128xf32> to vector<1x1x128xf32>
    tpu.vector_store %arg4[%c0_20, %c1_21, %c0_22], %41 {strides = array<i32>} : memref<1x2x128xf32, #tpu.memory_space<vmem>>, vector<1x1x128xf32>,
    %c0_23 = arith.constant 0 : index
    %c0_24 = arith.constant 0 : index
    %c0_25 = arith.constant 0 : index
    %42 = vector.load %arg3[%c0_23, %c0_24, %c0_25] : memref<1x256x128xf32, #tpu.memory_space<vmem>>, vector<1x256x128xf32>
    %43 = vector.shape_cast %42 : vector<1x256x128xf32> to vector<256x128xf32>
    %44 = vector.shape_cast %26 : vector<256x128xf32> to vector<1x256x128xf32>
    tpu.vector_store %arg3[%c0_23, %c0_24, %c0_25], %44 {strides = array<i32>} : memref<1x256x128xf32, #tpu.memory_space<vmem>>, vector<1x256x128xf32>,
    return
  }
  func.func @transform_0(%arg0: i32) -> (i32, i32, i32, i32) {
    %c0_i32 = arith.constant 0 : i32
    %c0_i32_0 = arith.constant 0 : i32
    %c0_i32_1 = arith.constant 0 : i32
    %c0_i32_2 = arith.constant 0 : i32
    return %arg0, %c0_i32, %c0_i32_0, %c0_i32_1 : i32, i32, i32, i32
  }
  func.func @transform_1(%arg0: i32) -> (i32, i32) {
    %c0_i32 = arith.constant 0 : i32
    %c0_i32_0 = arith.constant 0 : i32
    %c0_i32_1 = arith.constant 0 : i32
    return %c0_i32, %c0_i32_0 : i32, i32
  }
  func.func @transform_2(%arg0: i32) -> (i32, i32, i32) {
    %c0_i32 = arith.constant 0 : i32
    %c0_i32_0 = arith.constant 0 : i32
    %c0_i32_1 = arith.constant 0 : i32
    return %arg0, %c0_i32, %c0_i32_0 : i32, i32, i32
  }
  func.func @transform_3(%arg0: i32) -> (i32, i32, i32) {
    %c0_i32 = arith.constant 0 : i32
    %c0_i32_0 = arith.constant 0 : i32
    %c0_i32_1 = arith.constant 0 : i32
    return %arg0, %c0_i32, %c0_i32_0 : i32, i32, i32
  }
}

module attributes {stable_mosaic.version = 11 : i64} {
  func.func @_bn_swish_kernel(%arg0: i32, %arg1: memref<512x128xf32, #tpu.memory_space<vmem>>, %arg2: memref<1x128xf32, #tpu.memory_space<vmem>>, %arg3: memref<1x128xf32, #tpu.memory_space<vmem>>, %arg4: memref<512x128xf32, #tpu.memory_space<vmem>>, %arg5: memref<512x128xf32, #tpu.memory_space<vmem>>) attributes {dimension_semantics = [#tpu.dimension_semantics<parallel>], iteration_bounds = array<i64: 1>, scalar_prefetch = 0 : i64, scratch_operands = 0 : i64, tpu.core_type = #tpu.core_type<tc>, window_params = [{transform_indices = @transform_0, window_bounds = array<i64: 512, 128>}, {pipeline_mode = #tpu.pipeline_mode<synchronous>, transform_indices = @transform_1, window_bounds = array<i64: 1, 128>}, {pipeline_mode = #tpu.pipeline_mode<synchronous>, transform_indices = @transform_2, window_bounds = array<i64: 1, 128>}, {transform_indices = @transform_3, window_bounds = array<i64: 512, 128>}, {transform_indices = @transform_4, window_bounds = array<i64: 512, 128>}]} {
    %c0 = arith.constant 0 : index
    %c0_0 = arith.constant 0 : index
    %0 = vector.load %arg1[%c0, %c0_0] : memref<512x128xf32, #tpu.memory_space<vmem>>, vector<512x128xf32>
    %c0_1 = arith.constant 0 : index
    %c0_2 = arith.constant 0 : index
    %1 = vector.load %arg2[%c0_1, %c0_2] : memref<1x128xf32, #tpu.memory_space<vmem>>, vector<1x128xf32>
    %2 = vector.broadcast %1 : vector<1x128xf32> to vector<512x128xf32>
    %3 = arith.mulf %0, %2 : vector<512x128xf32>
    %c0_3 = arith.constant 0 : index
    %c0_4 = arith.constant 0 : index
    %4 = vector.load %arg3[%c0_3, %c0_4] : memref<1x128xf32, #tpu.memory_space<vmem>>, vector<1x128xf32>
    %5 = vector.broadcast %4 : vector<1x128xf32> to vector<512x128xf32>
    %6 = arith.addf %3, %5 : vector<512x128xf32>
    %cst = arith.constant 0.000000e+00 : f32
    %7 = vector.broadcast %cst : f32 to vector<512x128xf32>
    %8 = arith.subf %7, %6 : vector<512x128xf32>
    %9 = math.exp %8 : vector<512x128xf32>
    %cst_5 = arith.constant 1.000000e+00 : f32
    %10 = vector.broadcast %cst_5 : f32 to vector<512x128xf32>
    %11 = arith.addf %10, %9 : vector<512x128xf32>
    %12 = tpu.reciprocal %11 : vector<512x128xf32> -> vector<512x128xf32>
    %13 = arith.mulf %6, %12 : vector<512x128xf32>
    %c0_6 = arith.constant 0 : index
    %c0_7 = arith.constant 0 : index
    %14 = vector.load %arg4[%c0_6, %c0_7] : memref<512x128xf32, #tpu.memory_space<vmem>>, vector<512x128xf32>
    %15 = arith.addf %13, %14 : vector<512x128xf32>
    %c0_8 = arith.constant 0 : index
    %c0_9 = arith.constant 0 : index
    %16 = vector.load %arg5[%c0_8, %c0_9] : memref<512x128xf32, #tpu.memory_space<vmem>>, vector<512x128xf32>
    tpu.vector_store %arg5[%c0_8, %c0_9], %15 {strides = array<i32>} : memref<512x128xf32, #tpu.memory_space<vmem>>, vector<512x128xf32>,
    return
  }
  func.func @transform_0(%arg0: i32) -> (i32, i32) {
    %c0_i32 = arith.constant 0 : i32
    %c0_i32_0 = arith.constant 0 : i32
    return %arg0, %c0_i32 : i32, i32
  }
  func.func @transform_1(%arg0: i32) -> (i32, i32) {
    %c0_i32 = arith.constant 0 : i32
    %c0_i32_0 = arith.constant 0 : i32
    %c0_i32_1 = arith.constant 0 : i32
    return %c0_i32, %c0_i32_0 : i32, i32
  }
  func.func @transform_2(%arg0: i32) -> (i32, i32) {
    %c0_i32 = arith.constant 0 : i32
    %c0_i32_0 = arith.constant 0 : i32
    %c0_i32_1 = arith.constant 0 : i32
    return %c0_i32, %c0_i32_0 : i32, i32
  }
  func.func @transform_3(%arg0: i32) -> (i32, i32) {
    %c0_i32 = arith.constant 0 : i32
    %c0_i32_0 = arith.constant 0 : i32
    return %arg0, %c0_i32 : i32, i32
  }
  func.func @transform_4(%arg0: i32) -> (i32, i32) {
    %c0_i32 = arith.constant 0 : i32
    %c0_i32_0 = arith.constant 0 : i32
    return %arg0, %c0_i32 : i32, i32
  }
}

module attributes {stable_mosaic.version = 11 : i64} {
  func.func @_conv3x3_kernel(%arg0: i32, %arg1: memref<1x16x16x128xf32, #tpu.memory_space<vmem>>, %arg2: memref<1x128xf32, #tpu.memory_space<vmem>>, %arg3: memref<1x128xf32, #tpu.memory_space<vmem>>, %arg4: memref<1152x128xf32, #tpu.memory_space<vmem>>, %arg5: memref<1x256x128xf32, #tpu.memory_space<vmem>>, %arg6: memref<1x2x128xf32, #tpu.memory_space<vmem>>, %arg7: memref<18x18x128xf32, #tpu.memory_space<vmem>>) attributes {dimension_semantics = [#tpu.dimension_semantics<parallel>], iteration_bounds = array<i64: 2>, scalar_prefetch = 0 : i64, scratch_operands = 1 : i64, tpu.core_type = #tpu.core_type<tc>, window_params = [{transform_indices = @transform_0, window_bounds = array<i64: 1, 16, 16, 128>}, {pipeline_mode = #tpu.pipeline_mode<synchronous>, transform_indices = @transform_1, window_bounds = array<i64: 1, 128>}, {pipeline_mode = #tpu.pipeline_mode<synchronous>, transform_indices = @transform_2, window_bounds = array<i64: 1, 128>}, {pipeline_mode = #tpu.pipeline_mode<synchronous>, transform_indices = @transform_3, window_bounds = array<i64: 1152, 128>}, {transform_indices = @transform_4, window_bounds = array<i64: 1, 256, 128>}, {transform_indices = @transform_5, window_bounds = array<i64: 1, 2, 128>}]} {
    %c0 = arith.constant 0 : index
    %c0_0 = arith.constant 0 : index
    %c0_1 = arith.constant 0 : index
    %c0_2 = arith.constant 0 : index
    %0 = vector.load %arg1[%c0, %c0_0, %c0_1, %c0_2] : memref<1x16x16x128xf32, #tpu.memory_space<vmem>>, vector<1x16x16x128xf32>
    %1 = vector.shape_cast %0 : vector<1x16x16x128xf32> to vector<16x16x128xf32>
    %c0_3 = arith.constant 0 : index
    %c0_4 = arith.constant 0 : index
    %2 = vector.load %arg2[%c0_3, %c0_4] : memref<1x128xf32, #tpu.memory_space<vmem>>, vector<1x128xf32>
    %3 = vector.shape_cast %2 : vector<1x128xf32> to vector<1x1x128xf32>
    %c0_5 = arith.constant 0 : index
    %c0_6 = arith.constant 0 : index
    %4 = vector.load %arg3[%c0_5, %c0_6] : memref<1x128xf32, #tpu.memory_space<vmem>>, vector<1x128xf32>
    %5 = vector.shape_cast %4 : vector<1x128xf32> to vector<1x1x128xf32>
    %6 = vector.broadcast %3 : vector<1x1x128xf32> to vector<16x16x128xf32>
    %7 = arith.mulf %1, %6 : vector<16x16x128xf32>
    %8 = vector.broadcast %5 : vector<1x1x128xf32> to vector<16x16x128xf32>
    %9 = arith.addf %7, %8 : vector<16x16x128xf32>
    %cst = arith.constant 0.000000e+00 : f32
    %10 = vector.broadcast %cst : f32 to vector<16x16x128xf32>
    %11 = arith.subf %10, %9 : vector<16x16x128xf32>
    %12 = math.exp %11 : vector<16x16x128xf32>
    %cst_7 = arith.constant 1.000000e+00 : f32
    %13 = vector.broadcast %cst_7 : f32 to vector<16x16x128xf32>
    %14 = arith.addf %13, %12 : vector<16x16x128xf32>
    %15 = tpu.reciprocal %14 : vector<16x16x128xf32> -> vector<16x16x128xf32>
    %16 = arith.mulf %9, %15 : vector<16x16x128xf32>
    %cst_8 = arith.constant 0.000000e+00 : f32
    %17 = vector.broadcast %cst_8 : f32 to vector<18x18x128xf32>
    %c0_9 = arith.constant 0 : index
    %c0_10 = arith.constant 0 : index
    %c0_11 = arith.constant 0 : index
    %18 = vector.load %arg7[%c0_9, %c0_10, %c0_11] : memref<18x18x128xf32, #tpu.memory_space<vmem>>, vector<18x18x128xf32>
    tpu.vector_store %arg7[%c0_9, %c0_10, %c0_11], %17 {strides = array<i32>} : memref<18x18x128xf32, #tpu.memory_space<vmem>>, vector<18x18x128xf32>,
    %c1 = arith.constant 1 : index
    %c1_12 = arith.constant 1 : index
    %c0_13 = arith.constant 0 : index
    %19 = vector.load %arg7[%c1, %c1_12, %c0_13] : memref<18x18x128xf32, #tpu.memory_space<vmem>>, vector<16x16x128xf32>
    tpu.vector_store %arg7[%c1, %c1_12, %c0_13], %16 {strides = array<i32>} : memref<18x18x128xf32, #tpu.memory_space<vmem>>, vector<16x16x128xf32>,
    %c0_14 = arith.constant 0 : index
    %c0_15 = arith.constant 0 : index
    %c0_16 = arith.constant 0 : index
    %20 = vector.load %arg7[%c0_14, %c0_15, %c0_16] : memref<18x18x128xf32, #tpu.memory_space<vmem>>, vector<18x18x128xf32>
    %21 = vector.extract_strided_slice %20 {offsets = [0, 0, 0], sizes = [16, 16, 128], strides = [1, 1, 1]} : vector<18x18x128xf32> to vector<16x16x128xf32>
    %22 = vector.shape_cast %21 : vector<16x16x128xf32> to vector<256x128xf32>
    %23 = vector.extract_strided_slice %20 {offsets = [0, 1, 0], sizes = [16, 16, 128], strides = [1, 1, 1]} : vector<18x18x128xf32> to vector<16x16x128xf32>
    %24 = vector.shape_cast %23 : vector<16x16x128xf32> to vector<256x128xf32>
    %25 = vector.extract_strided_slice %20 {offsets = [0, 2, 0], sizes = [16, 16, 128], strides = [1, 1, 1]} : vector<18x18x128xf32> to vector<16x16x128xf32>
    %26 = vector.shape_cast %25 : vector<16x16x128xf32> to vector<256x128xf32>
    %27 = vector.extract_strided_slice %20 {offsets = [1, 0, 0], sizes = [16, 16, 128], strides = [1, 1, 1]} : vector<18x18x128xf32> to vector<16x16x128xf32>
    %28 = vector.shape_cast %27 : vector<16x16x128xf32> to vector<256x128xf32>
    %29 = vector.extract_strided_slice %20 {offsets = [1, 1, 0], sizes = [16, 16, 128], strides = [1, 1, 1]} : vector<18x18x128xf32> to vector<16x16x128xf32>
    %30 = vector.shape_cast %29 : vector<16x16x128xf32> to vector<256x128xf32>
    %31 = vector.extract_strided_slice %20 {offsets = [1, 2, 0], sizes = [16, 16, 128], strides = [1, 1, 1]} : vector<18x18x128xf32> to vector<16x16x128xf32>
    %32 = vector.shape_cast %31 : vector<16x16x128xf32> to vector<256x128xf32>
    %33 = vector.extract_strided_slice %20 {offsets = [2, 0, 0], sizes = [16, 16, 128], strides = [1, 1, 1]} : vector<18x18x128xf32> to vector<16x16x128xf32>
    %34 = vector.shape_cast %33 : vector<16x16x128xf32> to vector<256x128xf32>
    %35 = vector.extract_strided_slice %20 {offsets = [2, 1, 0], sizes = [16, 16, 128], strides = [1, 1, 1]} : vector<18x18x128xf32> to vector<16x16x128xf32>
    %36 = vector.shape_cast %35 : vector<16x16x128xf32> to vector<256x128xf32>
    %37 = vector.extract_strided_slice %20 {offsets = [2, 2, 0], sizes = [16, 16, 128], strides = [1, 1, 1]} : vector<18x18x128xf32> to vector<16x16x128xf32>
    %38 = vector.shape_cast %37 : vector<16x16x128xf32> to vector<256x128xf32>
    %39 = tpu.concatenate %22, %24, %26, %28, %30, %32, %34, %36, %38 in 1 : vector<256x128xf32>, vector<256x128xf32>, vector<256x128xf32>, vector<256x128xf32>, vector<256x128xf32>, vector<256x128xf32>, vector<256x128xf32>, vector<256x128xf32>, vector<256x128xf32> -> vector<256x1152xf32>
    %c0_17 = arith.constant 0 : index
    %c0_18 = arith.constant 0 : index
    %40 = vector.load %arg4[%c0_17, %c0_18] : memref<1152x128xf32, #tpu.memory_space<vmem>>, vector<1152x128xf32>
    %cst_19 = arith.constant dense<0.000000e+00> : vector<256x128xf32>
    %41 = tpu.matmul %39, %40, %cst_19 {dimension_numbers = #tpu.dot_dimension_numbers<[1], [0], [0], [1], [0, 0, 1, 1], [], []>} : vector<256x1152xf32>, vector<1152x128xf32>, vector<256x128xf32> -> vector<256x128xf32>
    %cst_20 = arith.constant dense<0.000000e+00> : vector<128xf32>
    %42 = vector.multi_reduction <add>, %41, %cst_20 [0] : vector<256x128xf32> to vector<128xf32>
    %43 = vector.shape_cast %42 : vector<128xf32> to vector<1x128xf32>
    %cst_21 = arith.constant 3.906250e-03 : f32
    %44 = vector.broadcast %cst_21 : f32 to vector<1x128xf32>
    %45 = arith.mulf %43, %44 : vector<1x128xf32>
    %46 = vector.broadcast %45 : vector<1x128xf32> to vector<256x128xf32>
    %47 = arith.subf %41, %46 : vector<256x128xf32>
    %48 = arith.mulf %47, %47 : vector<256x128xf32>
    %cst_22 = arith.constant dense<0.000000e+00> : vector<128xf32>
    %49 = vector.multi_reduction <add>, %48, %cst_22 [0] : vector<256x128xf32> to vector<128xf32>
    %50 = vector.shape_cast %49 : vector<128xf32> to vector<1x128xf32>
    %c0_23 = arith.constant 0 : index
    %c0_24 = arith.constant 0 : index
    %c0_25 = arith.constant 0 : index
    %51 = vector.load %arg6[%c0_23, %c0_24, %c0_25] : memref<1x2x128xf32, #tpu.memory_space<vmem>>, vector<1x1x128xf32>
    %52 = vector.shape_cast %51 : vector<1x1x128xf32> to vector<1x128xf32>
    %53 = vector.shape_cast %45 : vector<1x128xf32> to vector<1x1x128xf32>
    tpu.vector_store %arg6[%c0_23, %c0_24, %c0_25], %53 {strides = array<i32>} : memref<1x2x128xf32, #tpu.memory_space<vmem>>, vector<1x1x128xf32>,
    %c0_26 = arith.constant 0 : index
    %c1_27 = arith.constant 1 : index
    %c0_28 = arith.constant 0 : index
    %54 = vector.load %arg6[%c0_26, %c1_27, %c0_28] : memref<1x2x128xf32, #tpu.memory_space<vmem>>, vector<1x1x128xf32>
    %55 = vector.shape_cast %54 : vector<1x1x128xf32> to vector<1x128xf32>
    %56 = vector.shape_cast %50 : vector<1x128xf32> to vector<1x1x128xf32>
    tpu.vector_store %arg6[%c0_26, %c1_27, %c0_28], %56 {strides = array<i32>} : memref<1x2x128xf32, #tpu.memory_space<vmem>>, vector<1x1x128xf32>,
    %c0_29 = arith.constant 0 : index
    %c0_30 = arith.constant 0 : index
    %c0_31 = arith.constant 0 : index
    %57 = vector.load %arg5[%c0_29, %c0_30, %c0_31] : memref<1x256x128xf32, #tpu.memory_space<vmem>>, vector<1x256x128xf32>
    %58 = vector.shape_cast %57 : vector<1x256x128xf32> to vector<256x128xf32>
    %59 = vector.shape_cast %41 : vector<256x128xf32> to vector<1x256x128xf32>
    tpu.vector_store %arg5[%c0_29, %c0_30, %c0_31], %59 {strides = array<i32>} : memref<1x256x128xf32, #tpu.memory_space<vmem>>, vector<1x256x128xf32>,
    return
  }
  func.func @transform_0(%arg0: i32) -> (i32, i32, i32, i32) {
    %c0_i32 = arith.constant 0 : i32
    %c0_i32_0 = arith.constant 0 : i32
    %c0_i32_1 = arith.constant 0 : i32
    %c0_i32_2 = arith.constant 0 : i32
    return %arg0, %c0_i32, %c0_i32_0, %c0_i32_1 : i32, i32, i32, i32
  }
  func.func @transform_1(%arg0: i32) -> (i32, i32) {
    %c0_i32 = arith.constant 0 : i32
    %c0_i32_0 = arith.constant 0 : i32
    %c0_i32_1 = arith.constant 0 : i32
    return %c0_i32, %c0_i32_0 : i32, i32
  }
  func.func @transform_2(%arg0: i32) -> (i32, i32) {
    %c0_i32 = arith.constant 0 : i32
    %c0_i32_0 = arith.constant 0 : i32
    %c0_i32_1 = arith.constant 0 : i32
    return %c0_i32, %c0_i32_0 : i32, i32
  }
  func.func @transform_3(%arg0: i32) -> (i32, i32) {
    %c0_i32 = arith.constant 0 : i32
    %c0_i32_0 = arith.constant 0 : i32
    %c0_i32_1 = arith.constant 0 : i32
    return %c0_i32, %c0_i32_0 : i32, i32
  }
  func.func @transform_4(%arg0: i32) -> (i32, i32, i32) {
    %c0_i32 = arith.constant 0 : i32
    %c0_i32_0 = arith.constant 0 : i32
    %c0_i32_1 = arith.constant 0 : i32
    return %arg0, %c0_i32, %c0_i32_0 : i32, i32, i32
  }
  func.func @transform_5(%arg0: i32) -> (i32, i32, i32) {
    %c0_i32 = arith.constant 0 : i32
    %c0_i32_0 = arith.constant 0 : i32
    %c0_i32_1 = arith.constant 0 : i32
    return %arg0, %c0_i32, %c0_i32_0 : i32, i32, i32
  }
}

</mosaic_0001>

<llo_original>
// kernel: res_block_forward.5
$region0: #{res_block_forward.5}
  #allocation0 [shape = 'u32[]', space=smem, size = 0x4, offset = 0x4, fixed_abs, tag = 'smem constant byte address 0x4 - core index']
  #allocation1 [shape = 'u32[144,128]{1,0:T(1,128)}', space=vmem, size = 0x12000, scoped, tag = 'internal scratch']
  %s0 = inlined_call_operand.vmem [shape: f32[512,128], index: 0, kind: input, shape index: {}]
  %s1 = inlined_call_operand.vmem [shape: f32[1,128], index: 1, kind: input, shape index: {}]
  %s2 = inlined_call_operand.vmem [shape: f32[1,128], index: 2, kind: input, shape index: {}]
  %s3 = inlined_call_operand.vmem [shape: f32[512,128], index: 3, kind: input, shape index: {}]
  %s4 = inlined_call_operand.vmem [shape: f32[512,128], index: 4, kind: output, shape index: {}]
  %s5 = sld [smem:[#allocation0]]
  $region26: #{res_block_forward.5} parent=0
    _
  %s7 = ssub.s32 1, %s5
  %s8 = scalar_select 0, %s7, %s5
  // Predicated region
  $region2: #{res_block_forward.5} parent=0 // pred_check
    _
  $region3: #{res_block_forward.5} parent=0 // pred_check_branch
    %10 = sbr.rel (0) target = $region5
  $region4: #{res_block_forward.5} parent=0 // pred_region
    _
  $region5: #{res_block_forward.5} parent=0 // pred_fallthru
    _
  // Predicated region
  $region6: #{res_block_forward.5} parent=0 // pred_check
    _
  $region7: #{res_block_forward.5} parent=0 // pred_check_branch
    %12 = sbr.rel (0) target = $region9
  $region8: #{res_block_forward.5} parent=0 // pred_region
    _
  $region9: #{res_block_forward.5} parent=0 // pred_fallthru
    _
  // Predicated region
  $region10: #{res_block_forward.5} parent=0 // pred_check
    _
  $region11: #{res_block_forward.5} parent=0 // pred_check_branch
    %14 = sbr.rel (0) target = $region13
  $region12: #{res_block_forward.5} parent=0 // pred_region
    _
  $region13: #{res_block_forward.5} parent=0 // pred_fallthru
    _
  // Predicated region
  $region14: #{res_block_forward.5} parent=0 // pred_check
    _
  $region15: #{res_block_forward.5} parent=0 // pred_check_branch
    %16 = sbr.rel (0) target = $region17
  $region16: #{res_block_forward.5} parent=0 // pred_region
    _
  $region17: #{res_block_forward.5} parent=0 // pred_fallthru
    _
  %v17 = vld [vmem:[%s0] sm:$0xff]
  %v18 = vld [vmem:[%s0 + $0x8] sm:$0xff]
  %v19 = vld [vmem:[%s0 + $0x10] sm:$0xff]
  %v20 = vld [vmem:[%s0 + $0x18] sm:$0xff]
  %v21 = vld [vmem:[%s0 + $0x20] sm:$0xff]
  %v22 = vld [vmem:[%s0 + $0x28] sm:$0xff]
  %v23 = vld [vmem:[%s0 + $0x30] sm:$0xff]
  %v24 = vld [vmem:[%s0 + $0x38] sm:$0xff]
  %v25 = vld [vmem:[%s0 + $0x40] sm:$0xff]
  %v26 = vld [vmem:[%s0 + $0x48] sm:$0xff]
  %v27 = vld [vmem:[%s0 + $0x50] sm:$0xff]
  %v28 = vld [vmem:[%s0 + $0x58] sm:$0xff]
  %v29 = vld [vmem:[%s0 + $0x60] sm:$0xff]
  %v30 = vld [vmem:[%s0 + $0x68] sm:$0xff]
  %v31 = vld [vmem:[%s0 + $0x70] sm:$0xff]
  %v32 = vld [vmem:[%s0 + $0x78] sm:$0xff]
  %v33 = vld [vmem:[%s0 + $0x80] sm:$0xff]
  %v34 = vld [vmem:[%s0 + $0x88] sm:$0xff]
  %v35 = vld [vmem:[%s0 + $0x90] sm:$0xff]
  %v36 = vld [vmem:[%s0 + $0x98] sm:$0xff]
  %v37 = vld [vmem:[%s0 + $0xa0] sm:$0xff]
  %v38 = vld [vmem:[%s0 + $0xa8] sm:$0xff]
  %v39 = vld [vmem:[%s0 + $0xb0] sm:$0xff]
  %v40 = vld [vmem:[%s0 + $0xb8] sm:$0xff]
  %v41 = vld [vmem:[%s0 + $0xc0] sm:$0xff]
  %v42 = vld [vmem:[%s0 + $0xc8] sm:$0xff]
  %v43 = vld [vmem:[%s0 + $0xd0] sm:$0xff]
  %v44 = vld [vmem:[%s0 + $0xd8] sm:$0xff]
  %v45 = vld [vmem:[%s0 + $0xe0] sm:$0xff]
  %v46 = vld [vmem:[%s0 + $0xe8] sm:$0xff]
  %v47 = vld [vmem:[%s0 + $0xf0] sm:$0xff]
  %v48 = vld [vmem:[%s0 + $0xf8] sm:$0xff]
  %v49 = vld [vmem:[%s0 + $0x100] sm:$0xff]
  %v50 = vld [vmem:[%s0 + $0x108] sm:$0xff]
  %v51 = vld [vmem:[%s0 + $0x110] sm:$0xff]
  %v52 = vld [vmem:[%s0 + $0x118] sm:$0xff]
  %v53 = vld [vmem:[%s0 + $0x120] sm:$0xff]
  %v54 = vld [vmem:[%s0 + $0x128] sm:$0xff]
  %v55 = vld [vmem:[%s0 + $0x130] sm:$0xff]
  %v56 = vld [vmem:[%s0 + $0x138] sm:$0xff]
  %v57 = vld [vmem:[%s0 + $0x140] sm:$0xff]
  %v58 = vld [vmem:[%s0 + $0x148] sm:$0xff]
  %v59 = vld [vmem:[%s0 + $0x150] sm:$0xff]
  %v60 = vld [vmem:[%s0 + $0x158] sm:$0xff]
  %v61 = vld [vmem:[%s0 + $0x160] sm:$0xff]
  %v62 = vld [vmem:[%s0 + $0x168] sm:$0xff]
  %v63 = vld [vmem:[%s0 + $0x170] sm:$0xff]
  %v64 = vld [vmem:[%s0 + $0x178] sm:$0xff]
  %v65 = vld [vmem:[%s0 + $0x180] sm:$0xff]
  %v66 = vld [vmem:[%s0 + $0x188] sm:$0xff]
  %v67 = vld [vmem:[%s0 + $0x190] sm:$0xff]
  %v68 = vld [vmem:[%s0 + $0x198] sm:$0xff]
  %v69 = vld [vmem:[%s0 + $0x1a0] sm:$0xff]
  %v70 = vld [vmem:[%s0 + $0x1a8] sm:$0xff]
  %v71 = vld [vmem:[%s0 + $0x1b0] sm:$0xff]
  %v72 = vld [vmem:[%s0 + $0x1b8] sm:$0xff]
  %v73 = vld [vmem:[%s0 + $0x1c0] sm:$0xff]
  %v74 = vld [vmem:[%s0 + $0x1c8] sm:$0xff]
  %v75 = vld [vmem:[%s0 + $0x1d0] sm:$0xff]
  %v76 = vld [vmem:[%s0 + $0x1d8] sm:$0xff]
  %v77 = vld [vmem:[%s0 + $0x1e0] sm:$0xff]
  %v78 = vld [vmem:[%s0 + $0x1e8] sm:$0xff]
  %v79 = vld [vmem:[%s0 + $0x1f0] sm:$0xff]
  %v80 = vld [vmem:[%s0 + $0x1f8] sm:$0xff]
  %v81 = vld [vmem:[%s1] sm:$0x1]
  %v83 = vlaneseq
  %v84 = vshrl.u32 %v83, 7
  %v85 = vsub.s32 0, %v84
  %v86 = vrot.slane %v81, %v85
  %v88 = vmul.f32 %v17, %v86
  %v89 = vmul.f32 %v18, %v86
  %v90 = vmul.f32 %v19, %v86
  %v91 = vmul.f32 %v20, %v86
  %v92 = vmul.f32 %v21, %v86
  %v93 = vmul.f32 %v22, %v86
  %v94 = vmul.f32 %v23, %v86
  %v95 = vmul.f32 %v24, %v86
  %v96 = vmul.f32 %v25, %v86
  %v97 = vmul.f32 %v26, %v86
  %v98 = vmul.f32 %v27, %v86
  %v99 = vmul.f32 %v28, %v86
  %v100 = vmul.f32 %v29, %v86
  %v101 = vmul.f32 %v30, %v86
  %v102 = vmul.f32 %v31, %v86
  %v103 = vmul.f32 %v32, %v86
  %v104 = vmul.f32 %v33, %v86
  %v105 = vmul.f32 %v34, %v86
  %v106 = vmul.f32 %v35, %v86
  %v107 = vmul.f32 %v36, %v86
  %v108 = vmul.f32 %v37, %v86
  %v109 = vmul.f32 %v38, %v86
  %v110 = vmul.f32 %v39, %v86
  %v111 = vmul.f32 %v40, %v86
  %v112 = vmul.f32 %v41, %v86
  %v113 = vmul.f32 %v42, %v86
  %v114 = vmul.f32 %v43, %v86
  %v115 = vmul.f32 %v44, %v86
  %v116 = vmul.f32 %v45, %v86
  %v117 = vmul.f32 %v46, %v86
  %v118 = vmul.f32 %v47, %v86
  %v119 = vmul.f32 %v48, %v86
  %v120 = vmul.f32 %v49, %v86
  %v121 = vmul.f32 %v50, %v86
  %v122 = vmul.f32 %v51, %v86
  %v123 = vmul.f32 %v52, %v86
  %v124 = vmul.f32 %v53, %v86
  %v125 = vmul.f32 %v54, %v86
  %v126 = vmul.f32 %v55, %v86
  %v127 = vmul.f32 %v56, %v86
  %v128 = vmul.f32 %v57, %v86
  %v129 = vmul.f32 %v58, %v86
  %v130 = vmul.f32 %v59, %v86
  %v131 = vmul.f32 %v60, %v86
  %v132 = vmul.f32 %v61, %v86
  %v133 = vmul.f32 %v62, %v86
  %v134 = vmul.f32 %v63, %v86
  %v135 = vmul.f32 %v64, %v86
  %v136 = vmul.f32 %v65, %v86
  %v137 = vmul.f32 %v66, %v86
  %v138 = vmul.f32 %v67, %v86
  %v139 = vmul.f32 %v68, %v86
  %v140 = vmul.f32 %v69, %v86
  %v141 = vmul.f32 %v70, %v86
  %v142 = vmul.f32 %v71, %v86
  %v143 = vmul.f32 %v72, %v86
  %v144 = vmul.f32 %v73, %v86
  %v145 = vmul.f32 %v74, %v86
  %v146 = vmul.f32 %v75, %v86
  %v147 = vmul.f32 %v76, %v86
  %v148 = vmul.f32 %v77, %v86
  %v149 = vmul.f32 %v78, %v86
  %v150 = vmul.f32 %v79, %v86
  %v151 = vmul.f32 %v80, %v86
  %v152 = vld [vmem:[%s2] sm:$0x1]
  %v154 = vlaneseq
  %v155 = vshrl.u32 %v154, 7
  %v156 = vsub.s32 0, %v155
  %v157 = vrot.slane %v152, %v156
  %v159 = vadd.f32 %v88, %v157
  %v160 = vadd.f32 %v89, %v157
  %v161 = vadd.f32 %v90, %v157
  %v162 = vadd.f32 %v91, %v157
  %v163 = vadd.f32 %v92, %v157
  %v164 = vadd.f32 %v93, %v157
  %v165 = vadd.f32 %v94, %v157
  %v166 = vadd.f32 %v95, %v157
  %v167 = vadd.f32 %v96, %v157
  %v168 = vadd.f32 %v97, %v157
  %v169 = vadd.f32 %v98, %v157
  %v170 = vadd.f32 %v99, %v157
  %v171 = vadd.f32 %v100, %v157
  %v172 = vadd.f32 %v101, %v157
  %v173 = vadd.f32 %v102, %v157
  %v174 = vadd.f32 %v103, %v157
  %v175 = vadd.f32 %v104, %v157
  %v176 = vadd.f32 %v105, %v157
  %v177 = vadd.f32 %v106, %v157
  %v178 = vadd.f32 %v107, %v157
  %v179 = vadd.f32 %v108, %v157
  %v180 = vadd.f32 %v109, %v157
  %v181 = vadd.f32 %v110, %v157
  %v182 = vadd.f32 %v111, %v157
  %v183 = vadd.f32 %v112, %v157
  %v184 = vadd.f32 %v113, %v157
  %v185 = vadd.f32 %v114, %v157
  %v186 = vadd.f32 %v115, %v157
  %v187 = vadd.f32 %v116, %v157
  %v188 = vadd.f32 %v117, %v157
  %v189 = vadd.f32 %v118, %v157
  %v190 = vadd.f32 %v119, %v157
  %v191 = vadd.f32 %v120, %v157
  %v192 = vadd.f32 %v121, %v157
  %v193 = vadd.f32 %v122, %v157
  %v194 = vadd.f32 %v123, %v157
  %v195 = vadd.f32 %v124, %v157
  %v196 = vadd.f32 %v125, %v157
  %v197 = vadd.f32 %v126, %v157
  %v198 = vadd.f32 %v127, %v157
  %v199 = vadd.f32 %v128, %v157
  %v200 = vadd.f32 %v129, %v157
  %v201 = vadd.f32 %v130, %v157
  %v202 = vadd.f32 %v131, %v157
  %v203 = vadd.f32 %v132, %v157
  %v204 = vadd.f32 %v133, %v157
  %v205 = vadd.f32 %v134, %v157
  %v206 = vadd.f32 %v135, %v157
  %v207 = vadd.f32 %v136, %v157
  %v208 = vadd.f32 %v137, %v157
  %v209 = vadd.f32 %v138, %v157
  %v210 = vadd.f32 %v139, %v157
  %v211 = vadd.f32 %v140, %v157
  %v212 = vadd.f32 %v141, %v157
  %v213 = vadd.f32 %v142, %v157
  %v214 = vadd.f32 %v143, %v157
  %v215 = vadd.f32 %v144, %v157
  %v216 = vadd.f32 %v145, %v157
  %v217 = vadd.f32 %v146, %v157
  %v218 = vadd.f32 %v147, %v157
  %v219 = vadd.f32 %v148, %v157
  %v220 = vadd.f32 %v149, %v157
  %v221 = vadd.f32 %v150, %v157
  %v222 = vadd.f32 %v151, %v157
  %v223 = vsub.f32 0.0, %v159
  %v224 = vsub.f32 0.0, %v160
  %v225 = vsub.f32 0.0, %v161
  %v226 = vsub.f32 0.0, %v162
  %v227 = vsub.f32 0.0, %v163
  %v228 = vsub.f32 0.0, %v164
  %v229 = vsub.f32 0.0, %v165
  %v230 = vsub.f32 0.0, %v166
  %v231 = vsub.f32 0.0, %v167
  %v232 = vsub.f32 0.0, %v168
  %v233 = vsub.f32 0.0, %v169
  %v234 = vsub.f32 0.0, %v170
  %v235 = vsub.f32 0.0, %v171
  %v236 = vsub.f32 0.0, %v172
  %v237 = vsub.f32 0.0, %v173
  %v238 = vsub.f32 0.0, %v174
  %v239 = vsub.f32 0.0, %v175
  %v240 = vsub.f32 0.0, %v176
  %v241 = vsub.f32 0.0, %v177
  %v242 = vsub.f32 0.0, %v178
  %v243 = vsub.f32 0.0, %v179
  %v244 = vsub.f32 0.0, %v180
  %v245 = vsub.f32 0.0, %v181
  %v246 = vsub.f32 0.0, %v182
  %v247 = vsub.f32 0.0, %v183
  %v248 = vsub.f32 0.0, %v184
  %v249 = vsub.f32 0.0, %v185
  %v250 = vsub.f32 0.0, %v186
  %v251 = vsub.f32 0.0, %v187
  %v252 = vsub.f32 0.0, %v188
  %v253 = vsub.f32 0.0, %v189
  %v254 = vsub.f32 0.0, %v190
  %v255 = vsub.f32 0.0, %v191
  %v256 = vsub.f32 0.0, %v192
  %v257 = vsub.f32 0.0, %v193
  %v258 = vsub.f32 0.0, %v194
  %v259 = vsub.f32 0.0, %v195
  %v260 = vsub.f32 0.0, %v196
  %v261 = vsub.f32 0.0, %v197
  %v262 = vsub.f32 0.0, %v198
  %v263 = vsub.f32 0.0, %v199
  %v264 = vsub.f32 0.0, %v200
  %v265 = vsub.f32 0.0, %v201
  %v266 = vsub.f32 0.0, %v202
  %v267 = vsub.f32 0.0, %v203
  %v268 = vsub.f32 0.0, %v204
  %v269 = vsub.f32 0.0, %v205
  %v270 = vsub.f32 0.0, %v206
  %v271 = vsub.f32 0.0, %v207
  %v272 = vsub.f32 0.0, %v208
  %v273 = vsub.f32 0.0, %v209
  %v274 = vsub.f32 0.0, %v210
  %v275 = vsub.f32 0.0, %v211
  %v276 = vsub.f32 0.0, %v212
  %v277 = vsub.f32 0.0, %v213
  %v278 = vsub.f32 0.0, %v214
  %v279 = vsub.f32 0.0, %v215
  %v280 = vsub.f32 0.0, %v216
  %v281 = vsub.f32 0.0, %v217
  %v282 = vsub.f32 0.0, %v218
  %v283 = vsub.f32 0.0, %v219
  %v284 = vsub.f32 0.0, %v220
  %v285 = vsub.f32 0.0, %v221
  %v286 = vsub.f32 0.0, %v222
  %v287 = vmul.f32 %v223, 1.442695
  %v288 = vpow.pop %v287
  %v289 = vmul.f32 %v224, 1.442695
  %v290 = vpow.pop %v289
  %v291 = vmul.f32 %v225, 1.442695
  %v292 = vpow.pop %v291
  %v293 = vmul.f32 %v226, 1.442695
  %v294 = vpow.pop %v293
  %v295 = vmul.f32 %v227, 1.442695
  %v296 = vpow.pop %v295
  %v297 = vmul.f32 %v228, 1.442695
  %v298 = vpow.pop %v297
  %v299 = vmul.f32 %v229, 1.442695
  %v300 = vpow.pop %v299
  %v301 = vmul.f32 %v230, 1.442695
  %v302 = vpow.pop %v301
  %v303 = vmul.f32 %v231, 1.442695
  %v304 = vpow.pop %v303
  %v305 = vmul.f32 %v232, 1.442695
  %v306 = vpow.pop %v305
  %v307 = vmul.f32 %v233, 1.442695
  %v308 = vpow.pop %v307
  %v309 = vmul.f32 %v234, 1.442695
  %v310 = vpow.pop %v309
  %v311 = vmul.f32 %v235, 1.442695
  %v312 = vpow.pop %v311
  %v313 = vmul.f32 %v236, 1.442695
  %v314 = vpow.pop %v313
  %v315 = vmul.f32 %v237, 1.442695
  %v316 = vpow.pop %v315
  %v317 = vmul.f32 %v238, 1.442695
  %v318 = vpow.pop %v317
  %v319 = vmul.f32 %v239, 1.442695
  %v320 = vpow.pop %v319
  %v321 = vmul.f32 %v240, 1.442695
  %v322 = vpow.pop %v321
  %v323 = vmul.f32 %v241, 1.442695
  %v324 = vpow.pop %v323
  %v325 = vmul.f32 %v242, 1.442695
  %v326 = vpow.pop %v325
  %v327 = vmul.f32 %v243, 1.442695
  %v328 = vpow.pop %v327
  %v329 = vmul.f32 %v244, 1.442695
  %v330 = vpow.pop %v329
  %v331 = vmul.f32 %v245, 1.442695
  %v332 = vpow.pop %v331
  %v333 = vmul.f32 %v246, 1.442695
  %v334 = vpow.pop %v333
  %v335 = vmul.f32 %v247, 1.442695
  %v336 = vpow.pop %v335
  %v337 = vmul.f32 %v248, 1.442695
  %v338 = vpow.pop %v337
  %v339 = vmul.f32 %v249, 1.442695
  %v340 = vpow.pop %v339
  %v341 = vmul.f32 %v250, 1.442695
  %v342 = vpow.pop %v341
  %v343 = vmul.f32 %v251, 1.442695
  %v344 = vpow.pop %v343
  %v345 = vmul.f32 %v252, 1.442695
  %v346 = vpow.pop %v345
  %v347 = vmul.f32 %v253, 1.442695
  %v348 = vpow.pop %v347
  %v349 = vmul.f32 %v254, 1.442695
  %v350 = vpow.pop %v349
  %v351 = vmul.f32 %v255, 1.442695
  %v352 = vpow.pop %v351
  %v353 = vmul.f32 %v256, 1.442695
  %v354 = vpow.pop %v353
  %v355 = vmul.f32 %v257, 1.442695
  %v356 = vpow.pop %v355
  %v357 = vmul.f32 %v258, 1.442695
  %v358 = vpow.pop %v357
  %v359 = vmul.f32 %v259, 1.442695
  %v360 = vpow.pop %v359
  %v361 = vmul.f32 %v260, 1.442695
  %v362 = vpow.pop %v361
  %v363 = vmul.f32 %v261, 1.442695
  %v364 = vpow.pop %v363
  %v365 = vmul.f32 %v262, 1.442695
  %v366 = vpow.pop %v365
  %v367 = vmul.f32 %v263, 1.442695
  %v368 = vpow.pop %v367
  %v369 = vmul.f32 %v264, 1.442695
  %v370 = vpow.pop %v369
  %v371 = vmul.f32 %v265, 1.442695
  %v372 = vpow.pop %v371
  %v373 = vmul.f32 %v266, 1.442695
  %v374 = vpow.pop %v373
  %v375 = vmul.f32 %v267, 1.442695
  %v376 = vpow.pop %v375
  %v377 = vmul.f32 %v268, 1.442695
  %v378 = vpow.pop %v377
  %v379 = vmul.f32 %v269, 1.442695
  %v380 = vpow.pop %v379
  %v381 = vmul.f32 %v270, 1.442695
  %v382 = vpow.pop %v381
  %v383 = vmul.f32 %v271, 1.442695
  %v384 = vpow.pop %v383
  %v385 = vmul.f32 %v272, 1.442695
  %v386 = vpow.pop %v385
  %v387 = vmul.f32 %v273, 1.442695
  %v388 = vpow.pop %v387
  %v389 = vmul.f32 %v274, 1.442695
  %v390 = vpow.pop %v389
  %v391 = vmul.f32 %v275, 1.442695
  %v392 = vpow.pop %v391
  %v393 = vmul.f32 %v276, 1.442695
  %v394 = vpow.pop %v393
  %v395 = vmul.f32 %v277, 1.442695
  %v396 = vpow.pop %v395
  %v397 = vmul.f32 %v278, 1.442695
  %v398 = vpow.pop %v397
  %v399 = vmul.f32 %v279, 1.442695
  %v400 = vpow.pop %v399
  %v401 = vmul.f32 %v280, 1.442695
  %v402 = vpow.pop %v401
  %v403 = vmul.f32 %v281, 1.442695
  %v404 = vpow.pop %v403
  %v405 = vmul.f32 %v282, 1.442695
  %v406 = vpow.pop %v405
  %v407 = vmul.f32 %v283, 1.442695
  %v408 = vpow.pop %v407
  %v409 = vmul.f32 %v284, 1.442695
  %v410 = vpow.pop %v409
  %v411 = vmul.f32 %v285, 1.442695
  %v412 = vpow.pop %v411
  %v413 = vmul.f32 %v286, 1.442695
  %v414 = vpow.pop %v413
  %v415 = vadd.f32 %v288, 1.0
  %v416 = vadd.f32 %v290, 1.0
  %v417 = vadd.f32 %v292, 1.0
  %v418 = vadd.f32 %v294, 1.0
  %v419 = vadd.f32 %v296, 1.0
  %v420 = vadd.f32 %v298, 1.0
  %v421 = vadd.f32 %v300, 1.0
  %v422 = vadd.f32 %v302, 1.0
  %v423 = vadd.f32 %v304, 1.0
  %v424 = vadd.f32 %v306, 1.0
  %v425 = vadd.f32 %v308, 1.0
  %v426 = vadd.f32 %v310, 1.0
  %v427 = vadd.f32 %v312, 1.0
  %v428 = vadd.f32 %v314, 1.0
  %v429 = vadd.f32 %v316, 1.0
  %v430 = vadd.f32 %v318, 1.0
  %v431 = vadd.f32 %v320, 1.0
  %v432 = vadd.f32 %v322, 1.0
  %v433 = vadd.f32 %v324, 1.0
  %v434 = vadd.f32 %v326, 1.0
  %v435 = vadd.f32 %v328, 1.0
  %v436 = vadd.f32 %v330, 1.0
  %v437 = vadd.f32 %v332, 1.0
  %v438 = vadd.f32 %v334, 1.0
  %v439 = vadd.f32 %v336, 1.0
  %v440 = vadd.f32 %v338, 1.0
  %v441 = vadd.f32 %v340, 1.0
  %v442 = vadd.f32 %v342, 1.0
  %v443 = vadd.f32 %v344, 1.0
  %v444 = vadd.f32 %v346, 1.0
  %v445 = vadd.f32 %v348, 1.0
  %v446 = vadd.f32 %v350, 1.0
  %v447 = vadd.f32 %v352, 1.0
  %v448 = vadd.f32 %v354, 1.0
  %v449 = vadd.f32 %v356, 1.0
  %v450 = vadd.f32 %v358, 1.0
  %v451 = vadd.f32 %v360, 1.0
  %v452 = vadd.f32 %v362, 1.0
  %v453 = vadd.f32 %v364, 1.0
  %v454 = vadd.f32 %v366, 1.0
  %v455 = vadd.f32 %v368, 1.0
  %v456 = vadd.f32 %v370, 1.0
  %v457 = vadd.f32 %v372, 1.0
  %v458 = vadd.f32 %v374, 1.0
  %v459 = vadd.f32 %v376, 1.0
  %v460 = vadd.f32 %v378, 1.0
  %v461 = vadd.f32 %v380, 1.0
  %v462 = vadd.f32 %v382, 1.0
  %v463 = vadd.f32 %v384, 1.0
  %v464 = vadd.f32 %v386, 1.0
  %v465 = vadd.f32 %v388, 1.0
  %v466 = vadd.f32 %v390, 1.0
  %v467 = vadd.f32 %v392, 1.0
  %v468 = vadd.f32 %v394, 1.0
  %v469 = vadd.f32 %v396, 1.0
  %v470 = vadd.f32 %v398, 1.0
  %v471 = vadd.f32 %v400, 1.0
  %v472 = vadd.f32 %v402, 1.0
  %v473 = vadd.f32 %v404, 1.0
  %v474 = vadd.f32 %v406, 1.0
  %v475 = vadd.f32 %v408, 1.0
  %v476 = vadd.f32 %v410, 1.0
  %v477 = vadd.f32 %v412, 1.0
  %v478 = vadd.f32 %v414, 1.0
  %v479 = vrcp.pop %v415
  %v480 = vrcp.pop %v416
  %v481 = vrcp.pop %v417
  %v482 = vrcp.pop %v418
  %v483 = vrcp.pop %v419
  %v484 = vrcp.pop %v420
  %v485 = vrcp.pop %v421
  %v486 = vrcp.pop %v422
  %v487 = vrcp.pop %v423
  %v488 = vrcp.pop %v424
  %v489 = vrcp.pop %v425
  %v490 = vrcp.pop %v426
  %v491 = vrcp.pop %v427
  %v492 = vrcp.pop %v428
  %v493 = vrcp.pop %v429
  %v494 = vrcp.pop %v430
  %v495 = vrcp.pop %v431
  %v496 = vrcp.pop %v432
  %v497 = vrcp.pop %v433
  %v498 = vrcp.pop %v434
  %v499 = vrcp.pop %v435
  %v500 = vrcp.pop %v436
  %v501 = vrcp.pop %v437
  %v502 = vrcp.pop %v438
  %v503 = vrcp.pop %v439
  %v504 = vrcp.pop %v440
  %v505 = vrcp.pop %v441
  %v506 = vrcp.pop %v442
  %v507 = vrcp.pop %v443
  %v508 = vrcp.pop %v444
  %v509 = vrcp.pop %v445
  %v510 = vrcp.pop %v446
  %v511 = vrcp.pop %v447
  %v512 = vrcp.pop %v448
  %v513 = vrcp.pop %v449
  %v514 = vrcp.pop %v450
  %v515 = vrcp.pop %v451
  %v516 = vrcp.pop %v452
  %v517 = vrcp.pop %v453
  %v518 = vrcp.pop %v454
  %v519 = vrcp.pop %v455
  %v520 = vrcp.pop %v456
  %v521 = vrcp.pop %v457
  %v522 = vrcp.pop %v458
  %v523 = vrcp.pop %v459
  %v524 = vrcp.pop %v460
  %v525 = vrcp.pop %v461
  %v526 = vrcp.pop %v462
  %v527 = vrcp.pop %v463
  %v528 = vrcp.pop %v464
  %v529 = vrcp.pop %v465
  %v530 = vrcp.pop %v466
  %v531 = vrcp.pop %v467
  %v532 = vrcp.pop %v468
  %v533 = vrcp.pop %v469
  %v534 = vrcp.pop %v470
  %v535 = vrcp.pop %v471
  %v536 = vrcp.pop %v472
  %v537 = vrcp.pop %v473
  %v538 = vrcp.pop %v474
  %v539 = vrcp.pop %v475
  %v540 = vrcp.pop %v476
  %v541 = vrcp.pop %v477
  %v542 = vrcp.pop %v478
  %v543 = vmul.f32 %v159, %v479
  %v544 = vmul.f32 %v160, %v480
  %v545 = vmul.f32 %v161, %v481
  %v546 = vmul.f32 %v162, %v482
  %v547 = vmul.f32 %v163, %v483
  %v548 = vmul.f32 %v164, %v484
  %v549 = vmul.f32 %v165, %v485
  %v550 = vmul.f32 %v166, %v486
  %v551 = vmul.f32 %v167, %v487
  %v552 = vmul.f32 %v168, %v488
  %v553 = vmul.f32 %v169, %v489
  %v554 = vmul.f32 %v170, %v490
  %v555 = vmul.f32 %v171, %v491
  %v556 = vmul.f32 %v172, %v492
  %v557 = vmul.f32 %v173, %v493
  %v558 = vmul.f32 %v174, %v494
  %v559 = vmul.f32 %v175, %v495
  %v560 = vmul.f32 %v176, %v496
  %v561 = vmul.f32 %v177, %v497
  %v562 = vmul.f32 %v178, %v498
  %v563 = vmul.f32 %v179, %v499
  %v564 = vmul.f32 %v180, %v500
  %v565 = vmul.f32 %v181, %v501
  %v566 = vmul.f32 %v182, %v502
  %v567 = vmul.f32 %v183, %v503
  %v568 = vmul.f32 %v184, %v504
  %v569 = vmul.f32 %v185, %v505
  %v570 = vmul.f32 %v186, %v506
  %v571 = vmul.f32 %v187, %v507
  %v572 = vmul.f32 %v188, %v508
  %v573 = vmul.f32 %v189, %v509
  %v574 = vmul.f32 %v190, %v510
  %v575 = vmul.f32 %v191, %v511
  %v576 = vmul.f32 %v192, %v512
  %v577 = vmul.f32 %v193, %v513
  %v578 = vmul.f32 %v194, %v514
  %v579 = vmul.f32 %v195, %v515
  %v580 = vmul.f32 %v196, %v516
  %v581 = vmul.f32 %v197, %v517
  %v582 = vmul.f32 %v198, %v518
  %v583 = vmul.f32 %v199, %v519
  %v584 = vmul.f32 %v200, %v520
  %v585 = vmul.f32 %v201, %v521
  %v586 = vmul.f32 %v202, %v522
  %v587 = vmul.f32 %v203, %v523
  %v588 = vmul.f32 %v204, %v524
  %v589 = vmul.f32 %v205, %v525
  %v590 = vmul.f32 %v206, %v526
  %v591 = vmul.f32 %v207, %v527
  %v592 = vmul.f32 %v208, %v528
  %v593 = vmul.f32 %v209, %v529
  %v594 = vmul.f32 %v210, %v530
  %v595 = vmul.f32 %v211, %v531
  %v596 = vmul.f32 %v212, %v532
  %v597 = vmul.f32 %v213, %v533
  %v598 = vmul.f32 %v214, %v534
  %v599 = vmul.f32 %v215, %v535
  %v600 = vmul.f32 %v216, %v536
  %v601 = vmul.f32 %v217, %v537
  %v602 = vmul.f32 %v218, %v538
  %v603 = vmul.f32 %v219, %v539
  %v604 = vmul.f32 %v220, %v540
  %v605 = vmul.f32 %v221, %v541
  %v606 = vmul.f32 %v222, %v542
  %v607 = vld [vmem:[%s3] sm:$0xff]
  %v608 = vld [vmem:[%s3 + $0x8] sm:$0xff]
  %v609 = vld [vmem:[%s3 + $0x10] sm:$0xff]
  %v610 = vld [vmem:[%s3 + $0x18] sm:$0xff]
  %v611 = vld [vmem:[%s3 + $0x20] sm:$0xff]
  %v612 = vld [vmem:[%s3 + $0x28] sm:$0xff]
  %v613 = vld [vmem:[%s3 + $0x30] sm:$0xff]
  %v614 = vld [vmem:[%s3 + $0x38] sm:$0xff]
  %v615 = vld [vmem:[%s3 + $0x40] sm:$0xff]
  %v616 = vld [vmem:[%s3 + $0x48] sm:$0xff]
  %v617 = vld [vmem:[%s3 + $0x50] sm:$0xff]
  %v618 = vld [vmem:[%s3 + $0x58] sm:$0xff]
  %v619 = vld [vmem:[%s3 + $0x60] sm:$0xff]
  %v620 = vld [vmem:[%s3 + $0x68] sm:$0xff]
  %v621 = vld [vmem:[%s3 + $0x70] sm:$0xff]
  %v622 = vld [vmem:[%s3 + $0x78] sm:$0xff]
  %v623 = vld [vmem:[%s3 + $0x80] sm:$0xff]
  %v624 = vld [vmem:[%s3 + $0x88] sm:$0xff]
  %v625 = vld [vmem:[%s3 + $0x90] sm:$0xff]
  %v626 = vld [vmem:[%s3 + $0x98] sm:$0xff]
  %v627 = vld [vmem:[%s3 + $0xa0] sm:$0xff]
  %v628 = vld [vmem:[%s3 + $0xa8] sm:$0xff]
  %v629 = vld [vmem:[%s3 + $0xb0] sm:$0xff]
  %v630 = vld [vmem:[%s3 + $0xb8] sm:$0xff]
  %v631 = vld [vmem:[%s3 + $0xc0] sm:$0xff]
  %v632 = vld [vmem:[%s3 + $0xc8] sm:$0xff]
  %v633 = vld [vmem:[%s3 + $0xd0] sm:$0xff]
  %v634 = vld [vmem:[%s3 + $0xd8] sm:$0xff]
  %v635 = vld [vmem:[%s3 + $0xe0] sm:$0xff]
  %v636 = vld [vmem:[%s3 + $0xe8] sm:$0xff]
  %v637 = vld [vmem:[%s3 + $0xf0] sm:$0xff]
  %v638 = vld [vmem:[%s3 + $0xf8] sm:$0xff]
  %v639 = vld [vmem:[%s3 + $0x100] sm:$0xff]
  %v640 = vld [vmem:[%s3 + $0x108] sm:$0xff]
  %v641 = vld [vmem:[%s3 + $0x110] sm:$0xff]
  %v642 = vld [vmem:[%s3 + $0x118] sm:$0xff]
  %v643 = vld [vmem:[%s3 + $0x120] sm:$0xff]
  %v644 = vld [vmem:[%s3 + $0x128] sm:$0xff]
  %v645 = vld [vmem:[%s3 + $0x130] sm:$0xff]
  %v646 = vld [vmem:[%s3 + $0x138] sm:$0xff]
  %v647 = vld [vmem:[%s3 + $0x140] sm:$0xff]
  %v648 = vld [vmem:[%s3 + $0x148] sm:$0xff]
  %v649 = vld [vmem:[%s3 + $0x150] sm:$0xff]
  %v650 = vld [vmem:[%s3 + $0x158] sm:$0xff]
  %v651 = vld [vmem:[%s3 + $0x160] sm:$0xff]
  %v652 = vld [vmem:[%s3 + $0x168] sm:$0xff]
  %v653 = vld [vmem:[%s3 + $0x170] sm:$0xff]
  %v654 = vld [vmem:[%s3 + $0x178] sm:$0xff]
  %v655 = vld [vmem:[%s3 + $0x180] sm:$0xff]
  %v656 = vld [vmem:[%s3 + $0x188] sm:$0xff]
  %v657 = vld [vmem:[%s3 + $0x190] sm:$0xff]
  %v658 = vld [vmem:[%s3 + $0x198] sm:$0xff]
  %v659 = vld [vmem:[%s3 + $0x1a0] sm:$0xff]
  %v660 = vld [vmem:[%s3 + $0x1a8] sm:$0xff]
  %v661 = vld [vmem:[%s3 + $0x1b0] sm:$0xff]
  %v662 = vld [vmem:[%s3 + $0x1b8] sm:$0xff]
  %v663 = vld [vmem:[%s3 + $0x1c0] sm:$0xff]
  %v664 = vld [vmem:[%s3 + $0x1c8] sm:$0xff]
  %v665 = vld [vmem:[%s3 + $0x1d0] sm:$0xff]
  %v666 = vld [vmem:[%s3 + $0x1d8] sm:$0xff]
  %v667 = vld [vmem:[%s3 + $0x1e0] sm:$0xff]
  %v668 = vld [vmem:[%s3 + $0x1e8] sm:$0xff]
  %v669 = vld [vmem:[%s3 + $0x1f0] sm:$0xff]
  %v670 = vld [vmem:[%s3 + $0x1f8] sm:$0xff]
  %v671 = vadd.f32 %v543, %v607
  %v672 = vadd.f32 %v544, %v608
  %v673 = vadd.f32 %v545, %v609
  %v674 = vadd.f32 %v546, %v610
  %v675 = vadd.f32 %v547, %v611
  %v676 = vadd.f32 %v548, %v612
  %v677 = vadd.f32 %v549, %v613
  %v678 = vadd.f32 %v550, %v614
  %v679 = vadd.f32 %v551, %v615
  %v680 = vadd.f32 %v552, %v616
  %v681 = vadd.f32 %v553, %v617
  %v682 = vadd.f32 %v554, %v618
  %v683 = vadd.f32 %v555, %v619
  %v684 = vadd.f32 %v556, %v620
  %v685 = vadd.f32 %v557, %v621
  %v686 = vadd.f32 %v558, %v622
  %v687 = vadd.f32 %v559, %v623
  %v688 = vadd.f32 %v560, %v624
  %v689 = vadd.f32 %v561, %v625
  %v690 = vadd.f32 %v562, %v626
  %v691 = vadd.f32 %v563, %v627
  %v692 = vadd.f32 %v564, %v628
  %v693 = vadd.f32 %v565, %v629
  %v694 = vadd.f32 %v566, %v630
  %v695 = vadd.f32 %v567, %v631
  %v696 = vadd.f32 %v568, %v632
  %v697 = vadd.f32 %v569, %v633
  %v698 = vadd.f32 %v570, %v634
  %v699 = vadd.f32 %v571, %v635
  %v700 = vadd.f32 %v572, %v636
  %v701 = vadd.f32 %v573, %v637
  %v702 = vadd.f32 %v574, %v638
  %v703 = vadd.f32 %v575, %v639
  %v704 = vadd.f32 %v576, %v640
  %v705 = vadd.f32 %v577, %v641
  %v706 = vadd.f32 %v578, %v642
  %v707 = vadd.f32 %v579, %v643
  %v708 = vadd.f32 %v580, %v644
  %v709 = vadd.f32 %v581, %v645
  %v710 = vadd.f32 %v582, %v646
  %v711 = vadd.f32 %v583, %v647
  %v712 = vadd.f32 %v584, %v648
  %v713 = vadd.f32 %v585, %v649
  %v714 = vadd.f32 %v586, %v650
  %v715 = vadd.f32 %v587, %v651
  %v716 = vadd.f32 %v588, %v652
  %v717 = vadd.f32 %v589, %v653
  %v718 = vadd.f32 %v590, %v654
  %v719 = vadd.f32 %v591, %v655
  %v720 = vadd.f32 %v592, %v656
  %v721 = vadd.f32 %v593, %v657
  %v722 = vadd.f32 %v594, %v658
  %v723 = vadd.f32 %v595, %v659
  %v724 = vadd.f32 %v596, %v660
  %v725 = vadd.f32 %v597, %v661
  %v726 = vadd.f32 %v598, %v662
  %v727 = vadd.f32 %v599, %v663
  %v728 = vadd.f32 %v600, %v664
  %v729 = vadd.f32 %v601, %v665
  %v730 = vadd.f32 %v602, %v666
  %v731 = vadd.f32 %v603, %v667
  %v732 = vadd.f32 %v604, %v668
  %v733 = vadd.f32 %v605, %v669
  %v734 = vadd.f32 %v606, %v670
  %735 = vst [vmem:[%s4] sm:$0xff] %v671
  %736 = vst [vmem:[%s4 + $0x8] sm:$0xff] %v672
  %737 = vst [vmem:[%s4 + $0x10] sm:$0xff] %v673
  %738 = vst [vmem:[%s4 + $0x18] sm:$0xff] %v674
  %739 = vst [vmem:[%s4 + $0x20] sm:$0xff] %v675
  %740 = vst [vmem:[%s4 + $0x28] sm:$0xff] %v676
  %741 = vst [vmem:[%s4 + $0x30] sm:$0xff] %v677
  %742 = vst [vmem:[%s4 + $0x38] sm:$0xff] %v678
  %743 = vst [vmem:[%s4 + $0x40] sm:$0xff] %v679
  %744 = vst [vmem:[%s4 + $0x48] sm:$0xff] %v680
  %745 = vst [vmem:[%s4 + $0x50] sm:$0xff] %v681
  %746 = vst [vmem:[%s4 + $0x58] sm:$0xff] %v682
  %747 = vst [vmem:[%s4 + $0x60] sm:$0xff] %v683
  %748 = vst [vmem:[%s4 + $0x68] sm:$0xff] %v684
  %749 = vst [vmem:[%s4 + $0x70] sm:$0xff] %v685
  %750 = vst [vmem:[%s4 + $0x78] sm:$0xff] %v686
  %751 = vst [vmem:[%s4 + $0x80] sm:$0xff] %v687
  %752 = vst [vmem:[%s4 + $0x88] sm:$0xff] %v688
  %753 = vst [vmem:[%s4 + $0x90] sm:$0xff] %v689
  %754 = vst [vmem:[%s4 + $0x98] sm:$0xff] %v690
  %755 = vst [vmem:[%s4 + $0xa0] sm:$0xff] %v691
  %756 = vst [vmem:[%s4 + $0xa8] sm:$0xff] %v692
  %757 = vst [vmem:[%s4 + $0xb0] sm:$0xff] %v693
  %758 = vst [vmem:[%s4 + $0xb8] sm:$0xff] %v694
  %759 = vst [vmem:[%s4 + $0xc0] sm:$0xff] %v695
  %760 = vst [vmem:[%s4 + $0xc8] sm:$0xff] %v696
  %761 = vst [vmem:[%s4 + $0xd0] sm:$0xff] %v697
  %762 = vst [vmem:[%s4 + $0xd8] sm:$0xff] %v698
  %763 = vst [vmem:[%s4 + $0xe0] sm:$0xff] %v699
  %764 = vst [vmem:[%s4 + $0xe8] sm:$0xff] %v700
  %765 = vst [vmem:[%s4 + $0xf0] sm:$0xff] %v701
  %766 = vst [vmem:[%s4 + $0xf8] sm:$0xff] %v702
  %767 = vst [vmem:[%s4 + $0x100] sm:$0xff] %v703
  %768 = vst [vmem:[%s4 + $0x108] sm:$0xff] %v704
  %769 = vst [vmem:[%s4 + $0x110] sm:$0xff] %v705
  %770 = vst [vmem:[%s4 + $0x118] sm:$0xff] %v706
  %771 = vst [vmem:[%s4 + $0x120] sm:$0xff] %v707
  %772 = vst [vmem:[%s4 + $0x128] sm:$0xff] %v708
  %773 = vst [vmem:[%s4 + $0x130] sm:$0xff] %v709
  %774 = vst [vmem:[%s4 + $0x138] sm:$0xff] %v710
  %775 = vst [vmem:[%s4 + $0x140] sm:$0xff] %v711
  %776 = vst [vmem:[%s4 + $0x148] sm:$0xff] %v712
  %777 = vst [vmem:[%s4 + $0x150] sm:$0xff] %v713
  %778 = vst [vmem:[%s4 + $0x158] sm:$0xff] %v714
  %779 = vst [vmem:[%s4 + $0x160] sm:$0xff] %v715
  %780 = vst [vmem:[%s4 + $0x168] sm:$0xff] %v716
  %781 = vst [vmem:[%s4 + $0x170] sm:$0xff] %v717
  %782 = vst [vmem:[%s4 + $0x178] sm:$0xff] %v718
  %783 = vst [vmem:[%s4 + $0x180] sm:$0xff] %v719
  %784 = vst [vmem:[%s4 + $0x188] sm:$0xff] %v720
  %785 = vst [vmem:[%s4 + $0x190] sm:$0xff] %v721
  %786 = vst [vmem:[%s4 + $0x198] sm:$0xff] %v722
  %787 = vst [vmem:[%s4 + $0x1a0] sm:$0xff] %v723
  %788 = vst [vmem:[%s4 + $0x1a8] sm:$0xff] %v724
  %789 = vst [vmem:[%s4 + $0x1b0] sm:$0xff] %v725
  %790 = vst [vmem:[%s4 + $0x1b8] sm:$0xff] %v726
  %791 = vst [vmem:[%s4 + $0x1c0] sm:$0xff] %v727
  %792 = vst [vmem:[%s4 + $0x1c8] sm:$0xff] %v728
  %793 = vst [vmem:[%s4 + $0x1d0] sm:$0xff] %v729
  %794 = vst [vmem:[%s4 + $0x1d8] sm:$0xff] %v730
  %795 = vst [vmem:[%s4 + $0x1e0] sm:$0xff] %v731
  %796 = vst [vmem:[%s4 + $0x1e8] sm:$0xff] %v732
  %797 = vst [vmem:[%s4 + $0x1f0] sm:$0xff] %v733
  %798 = vst [vmem:[%s4 + $0x1f8] sm:$0xff] %v734
  // Predicated region
  $region18: #{res_block_forward.5} parent=0 // pred_check
    _
  $region19: #{res_block_forward.5} parent=0 // pred_check_branch
    %800 = sbr.rel (0) target = $region21
  $region20: #{res_block_forward.5} parent=0 // pred_region
    _
  $region21: #{res_block_forward.5} parent=0 // pred_fallthru
    _
  // Predicated region
  $region22: #{res_block_forward.5} parent=0 // pred_check
    _
  $region23: #{res_block_forward.5} parent=0 // pred_check_branch
    %802 = sbr.rel (0) target = $region25
  $region24: #{res_block_forward.5} parent=0 // pred_region
    _
  $region25: #{res_block_forward.5} parent=0 // pred_fallthru
    _

// kernel: res_block_forward.3
$region0: #{res_block_forward.3}
  #allocation0 [shape = 'u32[]', space=smem, size = 0x4, offset = 0x4, fixed_abs, tag = 'smem constant byte address 0x4 - core index']
  #allocation1 [shape = 'u32[144,128]{1,0:T(1,128)}', space=vmem, size = 0x12000, scoped, tag = 'internal scratch']
  #allocation2 [shape = 'f32[18,18,128]{2,1,0:T(8,128)}', space=vmem, size = 0x36000, scoped, tag = 'scratch operand']
  %s0 = inlined_call_operand.vmem [shape: f32[2,16,16,128], index: 0, kind: input, shape index: {}]
  %s1 = inlined_call_operand.vmem [shape: f32[1152,128], index: 1, kind: input, shape index: {}]
  %s2 = inlined_call_operand.vmem [shape: f32[2,256,128], index: 2, kind: output, shape index: {0}]
  %s3 = inlined_call_operand.vmem [shape: f32[2,2,128], index: 3, kind: output, shape index: {1}]
  %4 = xla_tuple %s2, %s3
  %s5 = sld [smem:[#allocation0]]
  $region49: #{res_block_forward.3} parent=0
    _
  %s7 = ssub.s32 1, %s5
  %s8 = scalar_select 0, %s7, %s5
  loop: start=0, step=1, limit=4
  $region2: #{res_block_forward.3} parent=0 // loop_pre_header
    _
  $region3: #{res_block_forward.3} parent=0 // loop_header
    %s10 = sphi 0, %s14
    %p11 = scmp.ge.s32.totalorder %s10, 4
    %s20 = sphi 0, %s22
    %s23 = sphi 0, %s20
    %s24 = sphi 0, %s23
    %s40 = sphi 0, %s24
    %s44 = sphi 0, %s44
    %s46 = sphi 0, %s44
    %s47 = sphi 0, %s46
    %s61 = sphi 0, %s47
    %s67 = sphi 0, %s69
    %s70 = sphi 0, %s67
    %s71 = sphi 0, %s70
    %s87 = sphi 0, %s71
    %s93 = sphi 0, %s95
    %s96 = sphi 0, %s93
    %s97 = sphi 0, %s96
    %s113 = sphi 0, %s97
  $region4: #{res_block_forward.3} parent=0 // loop_header_branch
    %13 = sbr.rel (%p11) target = $region8
  $region5: #{res_block_forward.3} parent=0 // loop_body
    %s15 = ssub.s32 %s10, 1
    %s16 = ssub.s32 %s10, 2
    %s17 = sadd.s32 %s10, 1
    %s18 = ssub.s32 %s10, %s17
    %p19 = scmp.eq.s32.totalorder %s18, 0
    %s21 = sadd.s32 %s20, 1
    %s22 = scalar_select %p19, %s20, %s21
    %p25 = pneg %p19
    %p26 = scmp.eq.s32.totalorder %s10, 1
    %p27 = por %p25, %p26
    %p28 = scmp.ne.s32.totalorder %s20, %s23
    %p29 = scmp.eq.s32.totalorder %s10, 0
    %p30 = por %p28, %p29
    %p31 = scmp.ne.s32.totalorder %s20, %s23
    %p32 = scmp.eq.s32.totalorder %s15, 1
    %p33 = por %p31, %p32
    %p34 = scmp.ne.s32.totalorder %s23, %s24
    %p35 = scmp.eq.s32.totalorder %s15, 0
    %p36 = por %p34, %p35
    %p37 = scmp.ne.s32.totalorder %s23, %s24
    %p38 = scmp.eq.s32.totalorder %s16, 1
    %p39 = por %p37, %p38
    %p41 = scmp.ne.s32.totalorder %s24, %s40
    %p42 = scmp.eq.s32.totalorder %s16, 0
    %p43 = por %p41, %p42
    %s45 = sadd.s32 %s44, 1
    %p48 = scmp.eq.s32.totalorder %s10, 1
    %p49 = scmp.ne.s32.totalorder %s44, %s46
    %p50 = scmp.eq.s32.totalorder %s10, 0
    %p51 = por %p49, %p50
    %p52 = scmp.ne.s32.totalorder %s44, %s46
    %p53 = scmp.eq.s32.totalorder %s15, 1
    %p54 = por %p52, %p53
    %p55 = scmp.ne.s32.totalorder %s46, %s47
    %p56 = scmp.eq.s32.totalorder %s15, 0
    %p57 = por %p55, %p56
    %p58 = scmp.ne.s32.totalorder %s46, %s47
    %p59 = scmp.eq.s32.totalorder %s16, 1
    %p60 = por %p58, %p59
    %p62 = scmp.ne.s32.totalorder %s47, %s61
    %p63 = scmp.eq.s32.totalorder %s16, 0
    %p64 = por %p62, %p63
    %s65 = ssub.s32 %s10, %s17
    %p66 = scmp.eq.s32.totalorder %s65, 0
    %s68 = sadd.s32 %s67, 1
    %s69 = scalar_select %p66, %s67, %s68
    %p72 = pneg %p66
    %p73 = scmp.eq.s32.totalorder %s10, 1
    %p74 = por %p72, %p73
    %p75 = scmp.ne.s32.totalorder %s67, %s70
    %p76 = scmp.eq.s32.totalorder %s10, 0
    %p77 = por %p75, %p76
    %p78 = scmp.ne.s32.totalorder %s67, %s70
    %p79 = scmp.eq.s32.totalorder %s15, 1
    %p80 = por %p78, %p79
    %p81 = scmp.ne.s32.totalorder %s70, %s71
    %p82 = scmp.eq.s32.totalorder %s15, 0
    %p83 = por %p81, %p82
    %p84 = scmp.ne.s32.totalorder %s70, %s71
    %p85 = scmp.eq.s32.totalorder %s16, 1
    %p86 = por %p84, %p85
    %p88 = scmp.ne.s32.totalorder %s71, %s87
    %p89 = scmp.eq.s32.totalorder %s16, 0
    %p90 = por %p88, %p89
    %s91 = ssub.s32 %s10, %s17
    %p92 = scmp.eq.s32.totalorder %s91, 0
    %s94 = sadd.s32 %s93, 1
    %s95 = scalar_select %p92, %s93, %s94
    %p98 = pneg %p92
    %p99 = scmp.eq.s32.totalorder %s10, 1
    %p100 = por %p98, %p99
    %p101 = scmp.ne.s32.totalorder %s93, %s96
    %p102 = scmp.eq.s32.totalorder %s10, 0
    %p103 = por %p101, %p102
    %p104 = scmp.ne.s32.totalorder %s93, %s96
    %p105 = scmp.eq.s32.totalorder %s15, 1
    %p106 = por %p104, %p105
    %p107 = scmp.ne.s32.totalorder %s96, %s97
    %p108 = scmp.eq.s32.totalorder %s15, 0
    %p109 = por %p107, %p108
    %p110 = scmp.ne.s32.totalorder %s96, %s97
    %p111 = scmp.eq.s32.totalorder %s16, 1
    %p112 = por %p110, %p111
    %p114 = scmp.ne.s32.totalorder %s97, %s113
    %p115 = scmp.eq.s32.totalorder %s16, 0
    %p116 = por %p114, %p115
    %p117 = scmp.le.s32.totalorder 1, %s10
    %p118 = scmp.lt.s32.totalorder %s10, 3
    %p119 = pnand %p117, %p118
    %p120 = pneg %p119
    // Predicated region
    $region9: #{res_block_forward.3} parent=5 // pred_check
      _
    $region10: #{res_block_forward.3} parent=5 // pred_check_branch
      %122 = sbr.rel (%p119) target = $region12
    $region11: #{res_block_forward.3} parent=5 // pred_region
      %s123 = ssub.s32 %s10, 1
      // Predicated region
      $region13: #{res_block_forward.3} parent=11 // pred_check
        %p124 = pneg %p57
      $region14: #{res_block_forward.3} parent=11 // pred_check_branch
        %126 = sbr.rel (%p124) target = $region16
      $region15: #{res_block_forward.3} parent=11 // pred_region
        _
      $region16: #{res_block_forward.3} parent=11 // pred_fallthru
        _
    $region12: #{res_block_forward.3} parent=5 // pred_fallthru
      _
    %p127 = scmp.lt.s32.totalorder %s10, 2
    // Predicated region
    $region17: #{res_block_forward.3} parent=5 // pred_check
      %p128 = pneg %p127
    $region18: #{res_block_forward.3} parent=5 // pred_check_branch
      %130 = sbr.rel (%p128) target = $region20
    $region19: #{res_block_forward.3} parent=5 // pred_region
      // Predicated region
      $region21: #{res_block_forward.3} parent=19 // pred_check
        %p131 = pneg %p30
      $region22: #{res_block_forward.3} parent=19 // pred_check_branch
        %133 = sbr.rel (%p131) target = $region24
      $region23: #{res_block_forward.3} parent=19 // pred_region
        %p134 = scmp.lt.s32.totalorder %s10, 1
        %s135 = scalar_select %p134, %s10, 1
        %s136 = smul.addr %s135, 32
        %s137 = smul.addr %s136, 8
        %s138 = scalar_lea.vmem %s0, %s137
      $region24: #{res_block_forward.3} parent=19 // pred_fallthru
        _
    $region20: #{res_block_forward.3} parent=5 // pred_fallthru
      _
    %p139 = scmp.le.s32.totalorder 1, %s10
    %p140 = scmp.lt.s32.totalorder %s10, 3
    %p141 = pnand %p139, %p140
    %p142 = pneg %p141
    // Predicated region
    $region25: #{res_block_forward.3} parent=5 // pred_check
      _
    $region26: #{res_block_forward.3} parent=5 // pred_check_branch
      %144 = sbr.rel (%p141) target = $region28
    $region27: #{res_block_forward.3} parent=5 // pred_region
      %s145 = ssub.s32 %s10, 1
      %p146 = scmp.lt.s32.totalorder %s15, 1
      %s147 = scalar_select %p146, %s15, 1
      %s148 = smul.addr %s147, 32
      %s149 = smul.addr %s148, 8
      %s150 = scalar_lea.vmem %s0, %s149
      %p151 = pneg %p36
      %p152 = pneg %p33
      %p153 = pneg %p57
      %p154 = pneg %p54
      %p155 = pneg %p83
      %p156 = pneg %p80
      %p157 = scmp.lt.s32.totalorder %s15, 1
      %s158 = scalar_select %p157, %s15, 1
      %s159 = smul.addr %s158, 32
      %s160 = smul.addr %s159, 8
      %s161 = scalar_lea.vmem %s2, %s160
      %p162 = pneg %p109
      %p163 = pneg %p106
      %p164 = scmp.lt.s32.totalorder %s15, 1
      %s165 = scalar_select %p164, %s15, 1
      %s166 = smul.addr %s165, 2
      %s167 = scalar_lea.vmem %s3, %s166
      %p168 = scmp.lt.s32.totalorder %s15, 1
      %s169 = scalar_select %p168, %s15, 1
      %s170 = smul.addr %s169, 32
      %s171 = smul.addr %s170, 8
      %s172 = scalar_lea.vmem %s0, %s171
      %p173 = scmp.lt.s32.totalorder %s15, 1
      %s174 = scalar_select %p173, %s15, 1
      %s175 = smul.addr %s174, 32
      %s176 = smul.addr %s175, 8
      %s177 = scalar_lea.vmem %s2, %s176
      %p178 = scmp.lt.s32.totalorder %s15, 1
      %s179 = scalar_select %p178, %s15, 1
      %s180 = smul.addr %s179, 2
      %s181 = scalar_lea.vmem %s3, %s180
      %v182 = vld [vmem:[%s172] sm:$0xff]
      %v183 = vld [vmem:[%s172 + $0x8] sm:$0xff]
      %v184 = vld [vmem:[%s172 + $0x10] sm:$0xff]
      %v185 = vld [vmem:[%s172 + $0x18] sm:$0xff]
      %v186 = vld [vmem:[%s172 + $0x20] sm:$0xff]
      %v187 = vld [vmem:[%s172 + $0x28] sm:$0xff]
      %v188 = vld [vmem:[%s172 + $0x30] sm:$0xff]
      %v189 = vld [vmem:[%s172 + $0x38] sm:$0xff]
      %v190 = vld [vmem:[%s172 + $0x40] sm:$0xff]
      %v191 = vld [vmem:[%s172 + $0x48] sm:$0xff]
      %v192 = vld [vmem:[%s172 + $0x50] sm:$0xff]
      %v193 = vld [vmem:[%s172 + $0x58] sm:$0xff]
      %v194 = vld [vmem:[%s172 + $0x60] sm:$0xff]
      %v195 = vld [vmem:[%s172 + $0x68] sm:$0xff]
      %v196 = vld [vmem:[%s172 + $0x70] sm:$0xff]
      %v197 = vld [vmem:[%s172 + $0x78] sm:$0xff]
      %v198 = vld [vmem:[%s172 + $0x80] sm:$0xff]
      %v199 = vld [vmem:[%s172 + $0x88] sm:$0xff]
      %v200 = vld [vmem:[%s172 + $0x90] sm:$0xff]
      %v201 = vld [vmem:[%s172 + $0x98] sm:$0xff]
      %v202 = vld [vmem:[%s172 + $0xa0] sm:$0xff]
      %v203 = vld [vmem:[%s172 + $0xa8] sm:$0xff]
      %v204 = vld [vmem:[%s172 + $0xb0] sm:$0xff]
      %v205 = vld [vmem:[%s172 + $0xb8] sm:$0xff]
      %v206 = vld [vmem:[%s172 + $0xc0] sm:$0xff]
      %v207 = vld [vmem:[%s172 + $0xc8] sm:$0xff]
      %v208 = vld [vmem:[%s172 + $0xd0] sm:$0xff]
      %v209 = vld [vmem:[%s172 + $0xd8] sm:$0xff]
      %v210 = vld [vmem:[%s172 + $0xe0] sm:$0xff]
      %v211 = vld [vmem:[%s172 + $0xe8] sm:$0xff]
      %v212 = vld [vmem:[%s172 + $0xf0] sm:$0xff]
      %v213 = vld [vmem:[%s172 + $0xf8] sm:$0xff]
      %214 = vst [vmem:[#allocation2] sm:$0xff] 0.0
      %215 = vst [vmem:[#allocation2 + $0x8] sm:$0xff] 0.0
      %216 = vst [vmem:[#allocation2 + $0x10] sm:$0x3] 0.0
      %217 = vst [vmem:[#allocation2 + $0x18] sm:$0xff] 0.0
      %218 = vst [vmem:[#allocation2 + $0x20] sm:$0xff] 0.0
      %219 = vst [vmem:[#allocation2 + $0x28] sm:$0x3] 0.0
      %220 = vst [vmem:[#allocation2 + $0x30] sm:$0xff] 0.0
      %221 = vst [vmem:[#allocation2 + $0x38] sm:$0xff] 0.0
      %222 = vst [vmem:[#allocation2 + $0x40] sm:$0x3] 0.0
      %223 = vst [vmem:[#allocation2 + $0x48] sm:$0xff] 0.0
      %224 = vst [vmem:[#allocation2 + $0x50] sm:$0xff] 0.0
      %225 = vst [vmem:[#allocation2 + $0x58] sm:$0x3] 0.0
      %226 = vst [vmem:[#allocation2 + $0x60] sm:$0xff] 0.0
      %227 = vst [vmem:[#allocation2 + $0x68] sm:$0xff] 0.0
      %228 = vst [vmem:[#allocation2 + $0x70] sm:$0x3] 0.0
      %229 = vst [vmem:[#allocation2 + $0x78] sm:$0xff] 0.0
      %230 = vst [vmem:[#allocation2 + $0x80] sm:$0xff] 0.0
      %231 = vst [vmem:[#allocation2 + $0x88] sm:$0x3] 0.0
      %232 = vst [vmem:[#allocation2 + $0x90] sm:$0xff] 0.0
      %233 = vst [vmem:[#allocation2 + $0x98] sm:$0xff] 0.0
      %234 = vst [vmem:[#allocation2 + $0xa0] sm:$0x3] 0.0
      %235 = vst [vmem:[#allocation2 + $0xa8] sm:$0xff] 0.0
      %236 = vst [vmem:[#allocation2 + $0xb0] sm:$0xff] 0.0
      %237 = vst [vmem:[#allocation2 + $0xb8] sm:$0x3] 0.0
      %238 = vst [vmem:[#allocation2 + $0xc0] sm:$0xff] 0.0
      %239 = vst [vmem:[#allocation2 + $0xc8] sm:$0xff] 0.0
      %240 = vst [vmem:[#allocation2 + $0xd0] sm:$0x3] 0.0
      %241 = vst [vmem:[#allocation2 + $0xd8] sm:$0xff] 0.0
      %242 = vst [vmem:[#allocation2 + $0xe0] sm:$0xff] 0.0
      %243 = vst [vmem:[#allocation2 + $0xe8] sm:$0x3] 0.0
      %244 = vst [vmem:[#allocation2 + $0xf0] sm:$0xff] 0.0
      %245 = vst [vmem:[#allocation2 + $0xf8] sm:$0xff] 0.0
      %246 = vst [vmem:[#allocation2 + $0x100] sm:$0x3] 0.0
      %247 = vst [vmem:[#allocation2 + $0x108] sm:$0xff] 0.0
      %248 = vst [vmem:[#allocation2 + $0x110] sm:$0xff] 0.0
      %249 = vst [vmem:[#allocation2 + $0x118] sm:$0x3] 0.0
      %250 = vst [vmem:[#allocation2 + $0x120] sm:$0xff] 0.0
      %251 = vst [vmem:[#allocation2 + $0x128] sm:$0xff] 0.0
      %252 = vst [vmem:[#allocation2 + $0x130] sm:$0x3] 0.0
      %253 = vst [vmem:[#allocation2 + $0x138] sm:$0xff] 0.0
      %254 = vst [vmem:[#allocation2 + $0x140] sm:$0xff] 0.0
      %255 = vst [vmem:[#allocation2 + $0x148] sm:$0x3] 0.0
      %256 = vst [vmem:[#allocation2 + $0x150] sm:$0xff] 0.0
      %257 = vst [vmem:[#allocation2 + $0x158] sm:$0xff] 0.0
      %258 = vst [vmem:[#allocation2 + $0x160] sm:$0x3] 0.0
      %259 = vst [vmem:[#allocation2 + $0x168] sm:$0xff] 0.0
      %260 = vst [vmem:[#allocation2 + $0x170] sm:$0xff] 0.0
      %261 = vst [vmem:[#allocation2 + $0x178] sm:$0x3] 0.0
      %262 = vst [vmem:[#allocation2 + $0x180] sm:$0xff] 0.0
      %263 = vst [vmem:[#allocation2 + $0x188] sm:$0xff] 0.0
      %264 = vst [vmem:[#allocation2 + $0x190] sm:$0x3] 0.0
      %265 = vst [vmem:[#allocation2 + $0x198] sm:$0xff] 0.0
      %266 = vst [vmem:[#allocation2 + $0x1a0] sm:$0xff] 0.0
      %267 = vst [vmem:[#allocation2 + $0x1a8] sm:$0x3] 0.0
      %s268 = scalar_lea.vmem [#allocation2], 24
      %269 = vst [vmem:[%s268 + $0x1] sm:$0xff] %v182
      %270 = vst [vmem:[%s268 + $0x9] sm:$0xff] %v183
      %271 = vst [vmem:[%s268 + $0x19] sm:$0xff] %v184
      %272 = vst [vmem:[%s268 + $0x21] sm:$0xff] %v185
      %273 = vst [vmem:[%s268 + $0x31] sm:$0xff] %v186
      %274 = vst [vmem:[%s268 + $0x39] sm:$0xff] %v187
      %275 = vst [vmem:[%s268 + $0x49] sm:$0xff] %v188
      %276 = vst [vmem:[%s268 + $0x51] sm:$0xff] %v189
      %277 = vst [vmem:[%s268 + $0x61] sm:$0xff] %v190
      %278 = vst [vmem:[%s268 + $0x69] sm:$0xff] %v191
      %279 = vst [vmem:[%s268 + $0x79] sm:$0xff] %v192
      %280 = vst [vmem:[%s268 + $0x81] sm:$0xff] %v193
      %281 = vst [vmem:[%s268 + $0x91] sm:$0xff] %v194
      %282 = vst [vmem:[%s268 + $0x99] sm:$0xff] %v195
      %283 = vst [vmem:[%s268 + $0xa9] sm:$0xff] %v196
      %284 = vst [vmem:[%s268 + $0xb1] sm:$0xff] %v197
      %285 = vst [vmem:[%s268 + $0xc1] sm:$0xff] %v198
      %286 = vst [vmem:[%s268 + $0xc9] sm:$0xff] %v199
      %287 = vst [vmem:[%s268 + $0xd9] sm:$0xff] %v200
      %288 = vst [vmem:[%s268 + $0xe1] sm:$0xff] %v201
      %289 = vst [vmem:[%s268 + $0xf1] sm:$0xff] %v202
      %290 = vst [vmem:[%s268 + $0xf9] sm:$0xff] %v203
      %291 = vst [vmem:[%s268 + $0x109] sm:$0xff] %v204
      %292 = vst [vmem:[%s268 + $0x111] sm:$0xff] %v205
      %293 = vst [vmem:[%s268 + $0x121] sm:$0xff] %v206
      %294 = vst [vmem:[%s268 + $0x129] sm:$0xff] %v207
      %295 = vst [vmem:[%s268 + $0x139] sm:$0xff] %v208
      %296 = vst [vmem:[%s268 + $0x141] sm:$0xff] %v209
      %297 = vst [vmem:[%s268 + $0x151] sm:$0xff] %v210
      %298 = vst [vmem:[%s268 + $0x159] sm:$0xff] %v211
      %299 = vst [vmem:[%s268 + $0x169] sm:$0xff] %v212
      %300 = vst [vmem:[%s268 + $0x171] sm:$0xff] %v213
      %v301 = vld [vmem:[#allocation2] sm:$0xff]
      %v302 = vld [vmem:[#allocation2 + $0x8] sm:$0xff]
      %v303 = vld [vmem:[#allocation2 + $0x10] sm:$0x3]
      %v304 = vld [vmem:[#allocation2 + $0x18] sm:$0xff]
      %v305 = vld [vmem:[#allocation2 + $0x20] sm:$0xff]
      %v306 = vld [vmem:[#allocation2 + $0x28] sm:$0x3]
      %v307 = vld [vmem:[#allocation2 + $0x30] sm:$0xff]
      %v308 = vld [vmem:[#allocation2 + $0x38] sm:$0xff]
      %v309 = vld [vmem:[#allocation2 + $0x40] sm:$0x3]
      %v310 = vld [vmem:[#allocation2 + $0x48] sm:$0xff]
      %v311 = vld [vmem:[#allocation2 + $0x50] sm:$0xff]
      %v312 = vld [vmem:[#allocation2 + $0x58] sm:$0x3]
      %v313 = vld [vmem:[#allocation2 + $0x60] sm:$0xff]
      %v314 = vld [vmem:[#allocation2 + $0x68] sm:$0xff]
      %v315 = vld [vmem:[#allocation2 + $0x70] sm:$0x3]
      %v316 = vld [vmem:[#allocation2 + $0x78] sm:$0xff]
      %v317 = vld [vmem:[#allocation2 + $0x80] sm:$0xff]
      %v318 = vld [vmem:[#allocation2 + $0x88] sm:$0x3]
      %v319 = vld [vmem:[#allocation2 + $0x90] sm:$0xff]
      %v320 = vld [vmem:[#allocation2 + $0x98] sm:$0xff]
      %v321 = vld [vmem:[#allocation2 + $0xa0] sm:$0x3]
      %v322 = vld [vmem:[#allocation2 + $0xa8] sm:$0xff]
      %v323 = vld [vmem:[#allocation2 + $0xb0] sm:$0xff]
      %v324 = vld [vmem:[#allocation2 + $0xb8] sm:$0x3]
      %v325 = vld [vmem:[#allocation2 + $0xc0] sm:$0xff]
      %v326 = vld [vmem:[#allocation2 + $0xc8] sm:$0xff]
      %v327 = vld [vmem:[#allocation2 + $0xd0] sm:$0x3]
      %v328 = vld [vmem:[#allocation2 + $0xd8] sm:$0xff]
      %v329 = vld [vmem:[#allocation2 + $0xe0] sm:$0xff]
      %v330 = vld [vmem:[#allocation2 + $0xe8] sm:$0x3]
      %v331 = vld [vmem:[#allocation2 + $0xf0] sm:$0xff]
      %v332 = vld [vmem:[#allocation2 + $0xf8] sm:$0xff]
      %v333 = vld [vmem:[#allocation2 + $0x100] sm:$0x3]
      %v334 = vld [vmem:[#allocation2 + $0x108] sm:$0xff]
      %v335 = vld [vmem:[#allocation2 + $0x110] sm:$0xff]
      %v336 = vld [vmem:[#allocation2 + $0x118] sm:$0x3]
      %v337 = vld [vmem:[#allocation2 + $0x120] sm:$0xff]
      %v338 = vld [vmem:[#allocation2 + $0x128] sm:$0xff]
      %v339 = vld [vmem:[#allocation2 + $0x130] sm:$0x3]
      %v340 = vld [vmem:[#allocation2 + $0x138] sm:$0xff]
      %v341 = vld [vmem:[#allocation2 + $0x140] sm:$0xff]
      %v342 = vld [vmem:[#allocation2 + $0x148] sm:$0x3]
      %v343 = vld [vmem:[#allocation2 + $0x150] sm:$0xff]
      %v344 = vld [vmem:[#allocation2 + $0x158] sm:$0xff]
      %v345 = vld [vmem:[#allocation2 + $0x160] sm:$0x3]
      %v346 = vld [vmem:[#allocation2 + $0x168] sm:$0xff]
      %v347 = vld [vmem:[#allocation2 + $0x170] sm:$0xff]
      %v348 = vld [vmem:[#allocation2 + $0x178] sm:$0x3]
      %v349 = vld [vmem:[#allocation2 + $0x180] sm:$0xff]
      %v350 = vld [vmem:[#allocation2 + $0x188] sm:$0xff]
      %v351 = vld [vmem:[#allocation2 + $0x190] sm:$0x3]
      %v352 = vld [vmem:[#allocation2 + $0x198] sm:$0xff]
      %v353 = vld [vmem:[#allocation2 + $0x1a0] sm:$0xff]
      %v354 = vld [vmem:[#allocation2 + $0x1a8] sm:$0x3]
      %vm403 = vcmask 1046528
      %v404 = vrot.slane %v301, 1
      %v405 = vrot.slane %v302, 1
      %v406 = vsel %vm403, %v404, %v405
      %v407 = vrot.slane %v303, 1
      %v408 = vsel %vm403, %v405, %v407
      %v409 = vrot.slane %v304, 1
      %v410 = vrot.slane %v305, 1
      %v411 = vsel %vm403, %v409, %v410
      %v412 = vrot.slane %v306, 1
      %v413 = vsel %vm403, %v410, %v412
      %v414 = vrot.slane %v307, 1
      %v415 = vrot.slane %v308, 1
      %v416 = vsel %vm403, %v414, %v415
      %v417 = vrot.slane %v309, 1
      %v418 = vsel %vm403, %v415, %v417
      %v419 = vrot.slane %v310, 1
      %v420 = vrot.slane %v311, 1
      %v421 = vsel %vm403, %v419, %v420
      %v422 = vrot.slane %v312, 1
      %v423 = vsel %vm403, %v420, %v422
      %v424 = vrot.slane %v313, 1
      %v425 = vrot.slane %v314, 1
      %v426 = vsel %vm403, %v424, %v425
      %v427 = vrot.slane %v315, 1
      %v428 = vsel %vm403, %v425, %v427
      %v429 = vrot.slane %v316, 1
      %v430 = vrot.slane %v317, 1
      %v431 = vsel %vm403, %v429, %v430
      %v432 = vrot.slane %v318, 1
      %v433 = vsel %vm403, %v430, %v432
      %v434 = vrot.slane %v319, 1
      %v435 = vrot.slane %v320, 1
      %v436 = vsel %vm403, %v434, %v435
      %v437 = vrot.slane %v321, 1
      %v438 = vsel %vm403, %v435, %v437
      %v439 = vrot.slane %v322, 1
      %v440 = vrot.slane %v323, 1
      %v441 = vsel %vm403, %v439, %v440
      %v442 = vrot.slane %v324, 1
      %v443 = vsel %vm403, %v440, %v442
      %v444 = vrot.slane %v325, 1
      %v445 = vrot.slane %v326, 1
      %v446 = vsel %vm403, %v444, %v445
      %v447 = vrot.slane %v327, 1
      %v448 = vsel %vm403, %v445, %v447
      %v449 = vrot.slane %v328, 1
      %v450 = vrot.slane %v329, 1
      %v451 = vsel %vm403, %v449, %v450
      %v452 = vrot.slane %v330, 1
      %v453 = vsel %vm403, %v450, %v452
      %v454 = vrot.slane %v331, 1
      %v455 = vrot.slane %v332, 1
      %v456 = vsel %vm403, %v454, %v455
      %v457 = vrot.slane %v333, 1
      %v458 = vsel %vm403, %v455, %v457
      %v459 = vrot.slane %v334, 1
      %v460 = vrot.slane %v335, 1
      %v461 = vsel %vm403, %v459, %v460
      %v462 = vrot.slane %v336, 1
      %v463 = vsel %vm403, %v460, %v462
      %v464 = vrot.slane %v337, 1
      %v465 = vrot.slane %v338, 1
      %v466 = vsel %vm403, %v464, %v465
      %v467 = vrot.slane %v339, 1
      %v468 = vsel %vm403, %v465, %v467
      %v469 = vrot.slane %v340, 1
      %v470 = vrot.slane %v341, 1
      %v471 = vsel %vm403, %v469, %v470
      %v472 = vrot.slane %v342, 1
      %v473 = vsel %vm403, %v470, %v472
      %v474 = vrot.slane %v343, 1
      %v475 = vrot.slane %v344, 1
      %v476 = vsel %vm403, %v474, %v475
      %v477 = vrot.slane %v345, 1
      %v478 = vsel %vm403, %v475, %v477
      %v479 = vrot.slane %v346, 1
      %v480 = vrot.slane %v347, 1
      %v481 = vsel %vm403, %v479, %v480
      %v482 = vrot.slane %v348, 1
      %v483 = vsel %vm403, %v480, %v482
      %vm516 = vcmask 1045504
      %v517 = vrot.slane %v301, 2
      %v518 = vrot.slane %v302, 2
      %v519 = vsel %vm516, %v517, %v518
      %v520 = vrot.slane %v303, 2
      %v521 = vsel %vm516, %v518, %v520
      %v522 = vrot.slane %v304, 2
      %v523 = vrot.slane %v305, 2
      %v524 = vsel %vm516, %v522, %v523
      %v525 = vrot.slane %v306, 2
      %v526 = vsel %vm516, %v523, %v525
      %v527 = vrot.slane %v307, 2
      %v528 = vrot.slane %v308, 2
      %v529 = vsel %vm516, %v527, %v528
      %v530 = vrot.slane %v309, 2
      %v531 = vsel %vm516, %v528, %v530
      %v532 = vrot.slane %v310, 2
      %v533 = vrot.slane %v311, 2
      %v534 = vsel %vm516, %v532, %v533
      %v535 = vrot.slane %v312, 2
      %v536 = vsel %vm516, %v533, %v535
      %v537 = vrot.slane %v313, 2
      %v538 = vrot.slane %v314, 2
      %v539 = vsel %vm516, %v537, %v538
      %v540 = vrot.slane %v315, 2
      %v541 = vsel %vm516, %v538, %v540
      %v542 = vrot.slane %v316, 2
      %v543 = vrot.slane %v317, 2
      %v544 = vsel %vm516, %v542, %v543
      %v545 = vrot.slane %v318, 2
      %v546 = vsel %vm516, %v543, %v545
      %v547 = vrot.slane %v319, 2
      %v548 = vrot.slane %v320, 2
      %v549 = vsel %vm516, %v547, %v548
      %v550 = vrot.slane %v321, 2
      %v551 = vsel %vm516, %v548, %v550
      %v552 = vrot.slane %v322, 2
      %v553 = vrot.slane %v323, 2
      %v554 = vsel %vm516, %v552, %v553
      %v555 = vrot.slane %v324, 2
      %v556 = vsel %vm516, %v553, %v555
      %v557 = vrot.slane %v325, 2
      %v558 = vrot.slane %v326, 2
      %v559 = vsel %vm516, %v557, %v558
      %v560 = vrot.slane %v327, 2
      %v561 = vsel %vm516, %v558, %v560
      %v562 = vrot.slane %v328, 2
      %v563 = vrot.slane %v329, 2
      %v564 = vsel %vm516, %v562, %v563
      %v565 = vrot.slane %v330, 2
      %v566 = vsel %vm516, %v563, %v565
      %v567 = vrot.slane %v331, 2
      %v568 = vrot.slane %v332, 2
      %v569 = vsel %vm516, %v567, %v568
      %v570 = vrot.slane %v333, 2
      %v571 = vsel %vm516, %v568, %v570
      %v572 = vrot.slane %v334, 2
      %v573 = vrot.slane %v335, 2
      %v574 = vsel %vm516, %v572, %v573
      %v575 = vrot.slane %v336, 2
      %v576 = vsel %vm516, %v573, %v575
      %v577 = vrot.slane %v337, 2
      %v578 = vrot.slane %v338, 2
      %v579 = vsel %vm516, %v577, %v578
      %v580 = vrot.slane %v339, 2
      %v581 = vsel %vm516, %v578, %v580
      %v582 = vrot.slane %v340, 2
      %v583 = vrot.slane %v341, 2
      %v584 = vsel %vm516, %v582, %v583
      %v585 = vrot.slane %v342, 2
      %v586 = vsel %vm516, %v583, %v585
      %v587 = vrot.slane %v343, 2
      %v588 = vrot.slane %v344, 2
      %v589 = vsel %vm516, %v587, %v588
      %v590 = vrot.slane %v345, 2
      %v591 = vsel %vm516, %v588, %v590
      %v592 = vrot.slane %v346, 2
      %v593 = vrot.slane %v347, 2
      %v594 = vsel %vm516, %v592, %v593
      %v595 = vrot.slane %v348, 2
      %v596 = vsel %vm516, %v593, %v595
      %v632 = vrot.slane %v349, 1
      %v633 = vrot.slane %v350, 1
      %v634 = vsel %vm403, %v632, %v633
      %v635 = vrot.slane %v351, 1
      %v636 = vsel %vm403, %v633, %v635
      %v639 = vrot.slane %v349, 2
      %v640 = vrot.slane %v350, 2
      %v641 = vsel %vm516, %v639, %v640
      %v642 = vrot.slane %v351, 2
      %v643 = vsel %vm516, %v640, %v642
      %v649 = vrot.slane %v352, 1
      %v650 = vrot.slane %v353, 1
      %v651 = vsel %vm403, %v649, %v650
      %v652 = vrot.slane %v354, 1
      %v653 = vsel %vm403, %v650, %v652
      %v656 = vrot.slane %v352, 2
      %v657 = vrot.slane %v353, 2
      %v658 = vsel %vm516, %v656, %v657
      %v659 = vrot.slane %v354, 2
      %v660 = vsel %vm516, %v657, %v659
      %v663 = vld [vmem:[%s1] sm:$0xff]
      %v664 = vld [vmem:[%s1 + $0x8] sm:$0xff]
      %v665 = vld [vmem:[%s1 + $0x10] sm:$0xff]
      %v666 = vld [vmem:[%s1 + $0x18] sm:$0xff]
      %v667 = vld [vmem:[%s1 + $0x20] sm:$0xff]
      %v668 = vld [vmem:[%s1 + $0x28] sm:$0xff]
      %v669 = vld [vmem:[%s1 + $0x30] sm:$0xff]
      %v670 = vld [vmem:[%s1 + $0x38] sm:$0xff]
      %v671 = vld [vmem:[%s1 + $0x40] sm:$0xff]
      %v672 = vld [vmem:[%s1 + $0x48] sm:$0xff]
      %v673 = vld [vmem:[%s1 + $0x50] sm:$0xff]
      %v674 = vld [vmem:[%s1 + $0x58] sm:$0xff]
      %v675 = vld [vmem:[%s1 + $0x60] sm:$0xff]
      %v676 = vld [vmem:[%s1 + $0x68] sm:$0xff]
      %v677 = vld [vmem:[%s1 + $0x70] sm:$0xff]
      %v678 = vld [vmem:[%s1 + $0x78] sm:$0xff]
      %v679 = vld [vmem:[%s1 + $0x80] sm:$0xff]
      %v680 = vld [vmem:[%s1 + $0x88] sm:$0xff]
      %v681 = vld [vmem:[%s1 + $0x90] sm:$0xff]
      %v682 = vld [vmem:[%s1 + $0x98] sm:$0xff]
      %v683 = vld [vmem:[%s1 + $0xa0] sm:$0xff]
      %v684 = vld [vmem:[%s1 + $0xa8] sm:$0xff]
      %v685 = vld [vmem:[%s1 + $0xb0] sm:$0xff]
      %v686 = vld [vmem:[%s1 + $0xb8] sm:$0xff]
      %v687 = vld [vmem:[%s1 + $0xc0] sm:$0xff]
      %v688 = vld [vmem:[%s1 + $0xc8] sm:$0xff]
      %v689 = vld [vmem:[%s1 + $0xd0] sm:$0xff]
      %v690 = vld [vmem:[%s1 + $0xd8] sm:$0xff]
      %v691 = vld [vmem:[%s1 + $0xe0] sm:$0xff]
      %v692 = vld [vmem:[%s1 + $0xe8] sm:$0xff]
      %v693 = vld [vmem:[%s1 + $0xf0] sm:$0xff]
      %v694 = vld [vmem:[%s1 + $0xf8] sm:$0xff]
      %v695 = vld [vmem:[%s1 + $0x100] sm:$0xff]
      %v696 = vld [vmem:[%s1 + $0x108] sm:$0xff]
      %v697 = vld [vmem:[%s1 + $0x110] sm:$0xff]
      %v698 = vld [vmem:[%s1 + $0x118] sm:$0xff]
      %v699 = vld [vmem:[%s1 + $0x120] sm:$0xff]
      %v700 = vld [vmem:[%s1 + $0x128] sm:$0xff]
      %v701 = vld [vmem:[%s1 + $0x130] sm:$0xff]
      %v702 = vld [vmem:[%s1 + $0x138] sm:$0xff]
      %v703 = vld [vmem:[%s1 + $0x140] sm:$0xff]
      %v704 = vld [vmem:[%s1 + $0x148] sm:$0xff]
      %v705 = vld [vmem:[%s1 + $0x150] sm:$0xff]
      %v706 = vld [vmem:[%s1 + $0x158] sm:$0xff]
      %v707 = vld [vmem:[%s1 + $0x160] sm:$0xff]
      %v708 = vld [vmem:[%s1 + $0x168] sm:$0xff]
      %v709 = vld [vmem:[%s1 + $0x170] sm:$0xff]
      %v710 = vld [vmem:[%s1 + $0x178] sm:$0xff]
      %v711 = vld [vmem:[%s1 + $0x180] sm:$0xff]
      %v712 = vld [vmem:[%s1 + $0x188] sm:$0xff]
      %v713 = vld [vmem:[%s1 + $0x190] sm:$0xff]
      %v714 = vld [vmem:[%s1 + $0x198] sm:$0xff]
      %v715 = vld [vmem:[%s1 + $0x1a0] sm:$0xff]
      %v716 = vld [vmem:[%s1 + $0x1a8] sm:$0xff]
      %v717 = vld [vmem:[%s1 + $0x1b0] sm:$0xff]
      %v718 = vld [vmem:[%s1 + $0x1b8] sm:$0xff]
      %v719 = vld [vmem:[%s1 + $0x1c0] sm:$0xff]
      %v720 = vld [vmem:[%s1 + $0x1c8] sm:$0xff]
      %v721 = vld [vmem:[%s1 + $0x1d0] sm:$0xff]
      %v722 = vld [vmem:[%s1 + $0x1d8] sm:$0xff]
      %v723 = vld [vmem:[%s1 + $0x1e0] sm:$0xff]
      %v724 = vld [vmem:[%s1 + $0x1e8] sm:$0xff]
      %v725 = vld [vmem:[%s1 + $0x1f0] sm:$0xff]
      %v726 = vld [vmem:[%s1 + $0x1f8] sm:$0xff]
      %v727 = vld [vmem:[%s1 + $0x200] sm:$0xff]
      %v728 = vld [vmem:[%s1 + $0x208] sm:$0xff]
      %v729 = vld [vmem:[%s1 + $0x210] sm:$0xff]
      %v730 = vld [vmem:[%s1 + $0x218] sm:$0xff]
      %v731 = vld [vmem:[%s1 + $0x220] sm:$0xff]
      %v732 = vld [vmem:[%s1 + $0x228] sm:$0xff]
      %v733 = vld [vmem:[%s1 + $0x230] sm:$0xff]
      %v734 = vld [vmem:[%s1 + $0x238] sm:$0xff]
      %v735 = vld [vmem:[%s1 + $0x240] sm:$0xff]
      %v736 = vld [vmem:[%s1 + $0x248] sm:$0xff]
      %v737 = vld [vmem:[%s1 + $0x250] sm:$0xff]
      %v738 = vld [vmem:[%s1 + $0x258] sm:$0xff]
      %v739 = vld [vmem:[%s1 + $0x260] sm:$0xff]
      %v740 = vld [vmem:[%s1 + $0x268] sm:$0xff]
      %v741 = vld [vmem:[%s1 + $0x270] sm:$0xff]
      %v742 = vld [vmem:[%s1 + $0x278] sm:$0xff]
      %v743 = vld [vmem:[%s1 + $0x280] sm:$0xff]
      %v744 = vld [vmem:[%s1 + $0x288] sm:$0xff]
      %v745 = vld [vmem:[%s1 + $0x290] sm:$0xff]
      %v746 = vld [vmem:[%s1 + $0x298] sm:$0xff]
      %v747 = vld [vmem:[%s1 + $0x2a0] sm:$0xff]
      %v748 = vld [vmem:[%s1 + $0x2a8] sm:$0xff]
      %v749 = vld [vmem:[%s1 + $0x2b0] sm:$0xff]
      %v750 = vld [vmem:[%s1 + $0x2b8] sm:$0xff]
      %v751 = vld [vmem:[%s1 + $0x2c0] sm:$0xff]
      %v752 = vld [vmem:[%s1 + $0x2c8] sm:$0xff]
      %v753 = vld [vmem:[%s1 + $0x2d0] sm:$0xff]
      %v754 = vld [vmem:[%s1 + $0x2d8] sm:$0xff]
      %v755 = vld [vmem:[%s1 + $0x2e0] sm:$0xff]
      %v756 = vld [vmem:[%s1 + $0x2e8] sm:$0xff]
      %v757 = vld [vmem:[%s1 + $0x2f0] sm:$0xff]
      %v758 = vld [vmem:[%s1 + $0x2f8] sm:$0xff]
      %v759 = vld [vmem:[%s1 + $0x300] sm:$0xff]
      %v760 = vld [vmem:[%s1 + $0x308] sm:$0xff]
      %v761 = vld [vmem:[%s1 + $0x310] sm:$0xff]
      %v762 = vld [vmem:[%s1 + $0x318] sm:$0xff]
      %v763 = vld [vmem:[%s1 + $0x320] sm:$0xff]
      %v764 = vld [vmem:[%s1 + $0x328] sm:$0xff]
      %v765 = vld [vmem:[%s1 + $0x330] sm:$0xff]
      %v766 = vld [vmem:[%s1 + $0x338] sm:$0xff]
      %v767 = vld [vmem:[%s1 + $0x340] sm:$0xff]
      %v768 = vld [vmem:[%s1 + $0x348] sm:$0xff]
      %v769 = vld [vmem:[%s1 + $0x350] sm:$0xff]
      %v770 = vld [vmem:[%s1 + $0x358] sm:$0xff]
      %v771 = vld [vmem:[%s1 + $0x360] sm:$0xff]
      %v772 = vld [vmem:[%s1 + $0x368] sm:$0xff]
      %v773 = vld [vmem:[%s1 + $0x370] sm:$0xff]
      %v774 = vld [vmem:[%s1 + $0x378] sm:$0xff]
      %v775 = vld [vmem:[%s1 + $0x380] sm:$0xff]
      %v776 = vld [vmem:[%s1 + $0x388] sm:$0xff]
      %v777 = vld [vmem:[%s1 + $0x390] sm:$0xff]
      %v778 = vld [vmem:[%s1 + $0x398] sm:$0xff]
      %v779 = vld [vmem:[%s1 + $0x3a0] sm:$0xff]
      %v780 = vld [vmem:[%s1 + $0x3a8] sm:$0xff]
      %v781 = vld [vmem:[%s1 + $0x3b0] sm:$0xff]
      %v782 = vld [vmem:[%s1 + $0x3b8] sm:$0xff]
      %v783 = vld [vmem:[%s1 + $0x3c0] sm:$0xff]
      %v784 = vld [vmem:[%s1 + $0x3c8] sm:$0xff]
      %v785 = vld [vmem:[%s1 + $0x3d0] sm:$0xff]
      %v786 = vld [vmem:[%s1 + $0x3d8] sm:$0xff]
      %v787 = vld [vmem:[%s1 + $0x3e0] sm:$0xff]
      %v788 = vld [vmem:[%s1 + $0x3e8] sm:$0xff]
      %v789 = vld [vmem:[%s1 + $0x3f0] sm:$0xff]
      %v790 = vld [vmem:[%s1 + $0x3f8] sm:$0xff]
      %v791 = vld [vmem:[%s1 + $0x400] sm:$0xff]
      %v792 = vld [vmem:[%s1 + $0x408] sm:$0xff]
      %v793 = vld [vmem:[%s1 + $0x410] sm:$0xff]
      %v794 = vld [vmem:[%s1 + $0x418] sm:$0xff]
      %v795 = vld [vmem:[%s1 + $0x420] sm:$0xff]
      %v796 = vld [vmem:[%s1 + $0x428] sm:$0xff]
      %v797 = vld [vmem:[%s1 + $0x430] sm:$0xff]
      %v798 = vld [vmem:[%s1 + $0x438] sm:$0xff]
      %v799 = vld [vmem:[%s1 + $0x440] sm:$0xff]
      %v800 = vld [vmem:[%s1 + $0x448] sm:$0xff]
      %v801 = vld [vmem:[%s1 + $0x450] sm:$0xff]
      %v802 = vld [vmem:[%s1 + $0x458] sm:$0xff]
      %v803 = vld [vmem:[%s1 + $0x460] sm:$0xff]
      %v804 = vld [vmem:[%s1 + $0x468] sm:$0xff]
      %v805 = vld [vmem:[%s1 + $0x470] sm:$0xff]
      %v806 = vld [vmem:[%s1 + $0x478] sm:$0xff]
      %807 = vmatprep.subr.mxu0 0.0
      %808 = vmatpush1.msra.mxu0 %v663
      %809 = vmatprep.subr.mxu0 0.0
      %810 = vmatpush1.msra.mxu0 %v664
      %811 = vmatprep.subr.mxu0 0.0
      %812 = vmatpush1.msra.mxu0 %v665
      %813 = vmatprep.subr.mxu0 0.0
      %814 = vmatpush1.msra.mxu0 %v666
      %815 = vmatprep.subr.mxu0 0.0
      %816 = vmatpush1.msra.mxu0 %v667
      %817 = vmatprep.subr.mxu0 0.0
      %818 = vmatpush1.msra.mxu0 %v668
      %819 = vmatprep.subr.mxu0 0.0
      %820 = vmatpush1.msra.mxu0 %v669
      %821 = vmatprep.subr.mxu0 0.0
      %822 = vmatpush1.msra.mxu0 %v670
      %823 = vmatprep.subr.mxu0 0.0
      %824 = vmatpush1.msra.mxu0 %v671
      %825 = vmatprep.subr.mxu0 0.0
      %826 = vmatpush1.msra.mxu0 %v672
      %827 = vmatprep.subr.mxu0 0.0
      %828 = vmatpush1.msra.mxu0 %v673
      %829 = vmatprep.subr.mxu0 0.0
      %830 = vmatpush1.msra.mxu0 %v674
      %831 = vmatprep.subr.mxu0 0.0
      %832 = vmatpush1.msra.mxu0 %v675
      %833 = vmatprep.subr.mxu0 0.0
      %834 = vmatpush1.msra.mxu0 %v676
      %835 = vmatprep.subr.mxu0 0.0
      %836 = vmatpush1.msra.mxu0 %v677
      %837 = vmatprep.subr.mxu0 0.0
      %838 = vmatpush1.msra.mxu0 %v678
      %839 = vmatprep.subr.mxu0 0.0
      %840 = vmatpush1.msra.mxu0 %v679
      %841 = vmatprep.subr.mxu0 0.0
      %842 = vmatpush1.msra.mxu0 %v680
      %843 = vmatprep.subr.mxu0 0.0
      %844 = vmatpush1.msra.mxu0 %v681
      %845 = vmatprep.subr.mxu0 0.0
      %846 = vmatpush1.msra.mxu0 %v682
      %847 = vmatprep.subr.mxu0 0.0
      %848 = vmatpush1.msra.mxu0 %v683
      %849 = vmatprep.subr.mxu0 0.0
      %850 = vmatpush1.msra.mxu0 %v684
      %851 = vmatprep.subr.mxu0 0.0
      %852 = vmatpush1.msra.mxu0 %v685
      %853 = vmatprep.subr.mxu0 0.0
      %854 = vmatpush1.msra.mxu0 %v686
      %855 = vmatprep.subr.mxu0 0.0
      %856 = vmatpush1.msra.mxu0 %v687
      %857 = vmatprep.subr.mxu0 0.0
      %858 = vmatpush1.msra.mxu0 %v688
      %859 = vmatprep.subr.mxu0 0.0
      %860 = vmatpush1.msra.mxu0 %v689
      %861 = vmatprep.subr.mxu0 0.0
      %862 = vmatpush1.msra.mxu0 %v690
      %863 = vmatprep.subr.mxu0 0.0
      %864 = vmatpush1.msra.mxu0 %v691
      %865 = vmatprep.subr.mxu0 0.0
      %866 = vmatpush1.msra.mxu0 %v692
      %867 = vmatprep.subr.mxu0 0.0
      %868 = vmatpush1.msra.mxu0 %v693
      %869 = vmatprep.subr.mxu0 0.0
      %870 = vmatpush1.msra.mxu0 %v694
      %871 = vmatprep.mubr.f32.mxu0 %v406
      %872 = vmatmul.mubr.f32.gmra.mrb[0].mxu0 %v301
      %v873 = vpop.f32.mrb[0].mxu0
      %v874 = vadd.f32 0.0, %v873
      %v875 = vpop.f32.mrb[0].mxu0
      %876 = vmatprep.mubr.f32.mxu0 %v408
      %877 = vmatmul.mubr.f32.gmra.mrb[0].mxu0 %v302
      %v878 = vpop.f32.mrb[0].mxu0
      %v879 = vadd.f32 0.0, %v878
      %v880 = vpop.f32.mrb[0].mxu0
      %881 = vmatprep.mubr.f32.mxu0 %v411
      %882 = vmatmul.mubr.f32.gmra.mrb[0].mxu0 %v304
      %v883 = vpop.f32.mrb[0].mxu0
      %v884 = vadd.f32 0.0, %v883
      %v885 = vpop.f32.mrb[0].mxu0
      %886 = vmatprep.mubr.f32.mxu0 %v413
      %887 = vmatmul.mubr.f32.gmra.mrb[0].mxu0 %v305
      %v888 = vpop.f32.mrb[0].mxu0
      %v889 = vadd.f32 0.0, %v888
      %v890 = vpop.f32.mrb[0].mxu0
      %891 = vmatprep.mubr.f32.mxu0 %v416
      %892 = vmatmul.mubr.f32.gmra.mrb[0].mxu0 %v307
      %v893 = vpop.f32.mrb[0].mxu0
      %v894 = vadd.f32 0.0, %v893
      %v895 = vpop.f32.mrb[0].mxu0
      %896 = vmatprep.mubr.f32.mxu0 %v418
      %897 = vmatmul.mubr.f32.gmra.mrb[0].mxu0 %v308
      %v898 = vpop.f32.mrb[0].mxu0
      %v899 = vadd.f32 0.0, %v898
      %v900 = vpop.f32.mrb[0].mxu0
      %901 = vmatprep.mubr.f32.mxu0 %v421
      %902 = vmatmul.mubr.f32.gmra.mrb[0].mxu0 %v310
      %v903 = vpop.f32.mrb[0].mxu0
      %v904 = vadd.f32 0.0, %v903
      %v905 = vpop.f32.mrb[0].mxu0
      %906 = vmatprep.mubr.f32.mxu0 %v423
      %907 = vmatmul.mubr.f32.gmra.mrb[0].mxu0 %v311
      %v908 = vpop.f32.mrb[0].mxu0
      %v909 = vadd.f32 0.0, %v908
      %v910 = vpop.f32.mrb[0].mxu0
      %911 = vmatprep.mubr.f32.mxu0 %v426
      %912 = vmatmul.mubr.f32.gmra.mrb[0].mxu0 %v313
      %v913 = vpop.f32.mrb[0].mxu0
      %v914 = vadd.f32 0.0, %v913
      %v915 = vpop.f32.mrb[0].mxu0
      %916 = vmatprep.mubr.f32.mxu0 %v428
      %917 = vmatmul.mubr.f32.gmra.mrb[0].mxu0 %v314
      %v918 = vpop.f32.mrb[0].mxu0
      %v919 = vadd.f32 0.0, %v918
      %v920 = vpop.f32.mrb[0].mxu0
      %921 = vmatprep.mubr.f32.mxu0 %v431
      %922 = vmatmul.mubr.f32.gmra.mrb[0].mxu0 %v316
      %v923 = vpop.f32.mrb[0].mxu0
      %v924 = vadd.f32 0.0, %v923
      %v925 = vpop.f32.mrb[0].mxu0
      %926 = vmatprep.mubr.f32.mxu0 %v433
      %927 = vmatmul.mubr.f32.gmra.mrb[0].mxu0 %v317
      %v928 = vpop.f32.mrb[0].mxu0
      %v929 = vadd.f32 0.0, %v928
      %v930 = vpop.f32.mrb[0].mxu0
      %931 = vmatprep.mubr.f32.mxu0 %v436
      %932 = vmatmul.mubr.f32.gmra.mrb[0].mxu0 %v319
      %v933 = vpop.f32.mrb[0].mxu0
      %v934 = vadd.f32 0.0, %v933
      %v935 = vpop.f32.mrb[0].mxu0
      %936 = vmatprep.mubr.f32.mxu0 %v438
      %937 = vmatmul.mubr.f32.gmra.mrb[0].mxu0 %v320
      %v938 = vpop.f32.mrb[0].mxu0
      %v939 = vadd.f32 0.0, %v938
      %v940 = vpop.f32.mrb[0].mxu0
      %941 = vmatprep.mubr.f32.mxu0 %v441
      %942 = vmatmul.mubr.f32.gmra.mrb[0].mxu0 %v322
      %v943 = vpop.f32.mrb[0].mxu0
      %v944 = vadd.f32 0.0, %v943
      %v945 = vpop.f32.mrb[0].mxu0
      %946 = vmatprep.mubr.f32.mxu0 %v443
      %947 = vmatmul.mubr.f32.gmra.mrb[0].mxu0 %v323
      %v948 = vpop.f32.mrb[0].mxu0
      %v949 = vadd.f32 0.0, %v948
      %v950 = vpop.f32.mrb[0].mxu0
      %951 = vmatprep.mubr.f32.mxu0 %v446
      %952 = vmatmul.mubr.f32.gmra.mrb[0].mxu0 %v325
      %v953 = vpop.f32.mrb[0].mxu0
      %v954 = vadd.f32 0.0, %v953
      %v955 = vpop.f32.mrb[0].mxu0
      %956 = vmatprep.mubr.f32.mxu0 %v448
      %957 = vmatmul.mubr.f32.gmra.mrb[0].mxu0 %v326
      %v958 = vpop.f32.mrb[0].mxu0
      %v959 = vadd.f32 0.0, %v958
      %v960 = vpop.f32.mrb[0].mxu0
      %961 = vmatprep.mubr.f32.mxu0 %v451
      %962 = vmatmul.mubr.f32.gmra.mrb[0].mxu0 %v328
      %v963 = vpop.f32.mrb[0].mxu0
      %v964 = vadd.f32 0.0, %v963
      %v965 = vpop.f32.mrb[0].mxu0
      %966 = vmatprep.mubr.f32.mxu0 %v453
      %967 = vmatmul.mubr.f32.gmra.mrb[0].mxu0 %v329
      %v968 = vpop.f32.mrb[0].mxu0
      %v969 = vadd.f32 0.0, %v968
      %v970 = vpop.f32.mrb[0].mxu0
      %971 = vmatprep.mubr.f32.mxu0 %v456
      %972 = vmatmul.mubr.f32.gmra.mrb[0].mxu0 %v331
      %v973 = vpop.f32.mrb[0].mxu0
      %v974 = vadd.f32 0.0, %v973
      %v975 = vpop.f32.mrb[0].mxu0
      %976 = vmatprep.mubr.f32.mxu0 %v458
      %977 = vmatmul.mubr.f32.gmra.mrb[0].mxu0 %v332
      %v978 = vpop.f32.mrb[0].mxu0
      %v979 = vadd.f32 0.0, %v978
      %v980 = vpop.f32.mrb[0].mxu0
      %981 = vmatprep.mubr.f32.mxu0 %v461
      %982 = vmatmul.mubr.f32.gmra.mrb[0].mxu0 %v334
      %v983 = vpop.f32.mrb[0].mxu0
      %v984 = vadd.f32 0.0, %v983
      %v985 = vpop.f32.mrb[0].mxu0
      %986 = vmatprep.mubr.f32.mxu0 %v463
      %987 = vmatmul.mubr.f32.gmra.mrb[0].mxu0 %v335
      %v988 = vpop.f32.mrb[0].mxu0
      %v989 = vadd.f32 0.0, %v988
      %v990 = vpop.f32.mrb[0].mxu0
      %991 = vmatprep.mubr.f32.mxu0 %v466
      %992 = vmatmul.mubr.f32.gmra.mrb[0].mxu0 %v337
      %v993 = vpop.f32.mrb[0].mxu0
      %v994 = vadd.f32 0.0, %v993
      %v995 = vpop.f32.mrb[0].mxu0
      %996 = vmatprep.mubr.f32.mxu0 %v468
      %997 = vmatmul.mubr.f32.gmra.mrb[0].mxu0 %v338
      %v998 = vpop.f32.mrb[0].mxu0
      %v999 = vadd.f32 0.0, %v998
      %v1000 = vpop.f32.mrb[0].mxu0
      %1001 = vmatprep.mubr.f32.mxu0 %v471
      %1002 = vmatmul.mubr.f32.gmra.mrb[0].mxu0 %v340
      %v1003 = vpop.f32.mrb[0].mxu0
      %v1004 = vadd.f32 0.0, %v1003
      %v1005 = vpop.f32.mrb[0].mxu0
      %1006 = vmatprep.mubr.f32.mxu0 %v473
      %1007 = vmatmul.mubr.f32.gmra.mrb[0].mxu0 %v341
      %v1008 = vpop.f32.mrb[0].mxu0
      %v1009 = vadd.f32 0.0, %v1008
      %v1010 = vpop.f32.mrb[0].mxu0
      %1011 = vmatprep.mubr.f32.mxu0 %v476
      %1012 = vmatmul.mubr.f32.gmra.mrb[0].mxu0 %v343
      %v1013 = vpop.f32.mrb[0].mxu0
      %v1014 = vadd.f32 0.0, %v1013
      %v1015 = vpop.f32.mrb[0].mxu0
      %1016 = vmatprep.mubr.f32.mxu0 %v478
      %1017 = vmatmul.mubr.f32.gmra.mrb[0].mxu0 %v344
      %v1018 = vpop.f32.mrb[0].mxu0
      %v1019 = vadd.f32 0.0, %v1018
      %v1020 = vpop.f32.mrb[0].mxu0
      %1021 = vmatprep.mubr.f32.mxu0 %v481
      %1022 = vmatmul.mubr.f32.gmra.mrb[0].mxu0 %v346
      %v1023 = vpop.f32.mrb[0].mxu0
      %v1024 = vadd.f32 0.0, %v1023
      %v1025 = vpop.f32.mrb[0].mxu0
      %1026 = vmatprep.mubr.f32.mxu0 %v483
      %1027 = vmatmul.mubr.f32.gmra.mrb[0].mxu0 %v347
      %v1028 = vpop.f32.mrb[0].mxu0
      %v1029 = vadd.f32 0.0, %v1028
      %v1030 = vpop.f32.mrb[0].mxu0
      %1031 = vdwg.mxu0
      %1032 = vmatprep.subr.mxu0 0.0
      %1033 = vmatpush1.msra.mxu0 %v695
      %1034 = vmatprep.subr.mxu0 0.0
      %1035 = vmatpush1.msra.mxu0 %v696
      %1036 = vmatprep.subr.mxu0 0.0
      %1037 = vmatpush1.msra.mxu0 %v697
      %1038 = vmatprep.subr.mxu0 0.0
      %1039 = vmatpush1.msra.mxu0 %v698
      %1040 = vmatprep.subr.mxu0 0.0
      %1041 = vmatpush1.msra.mxu0 %v699
      %1042 = vmatprep.subr.mxu0 0.0
      %1043 = vmatpush1.msra.mxu0 %v700
      %1044 = vmatprep.subr.mxu0 0.0
      %1045 = vmatpush1.msra.mxu0 %v701
      %1046 = vmatprep.subr.mxu0 0.0
      %1047 = vmatpush1.msra.mxu0 %v702
      %1048 = vmatprep.subr.mxu0 0.0
      %1049 = vmatpush1.msra.mxu0 %v703
      %1050 = vmatprep.subr.mxu0 0.0
      %1051 = vmatpush1.msra.mxu0 %v704
      %1052 = vmatprep.subr.mxu0 0.0
      %1053 = vmatpush1.msra.mxu0 %v705
      %1054 = vmatprep.subr.mxu0 0.0
      %1055 = vmatpush1.msra.mxu0 %v706
      %1056 = vmatprep.subr.mxu0 0.0
      %1057 = vmatpush1.msra.mxu0 %v707
      %1058 = vmatprep.subr.mxu0 0.0
      %1059 = vmatpush1.msra.mxu0 %v708
      %1060 = vmatprep.subr.mxu0 0.0
      %1061 = vmatpush1.msra.mxu0 %v709
      %1062 = vmatprep.subr.mxu0 0.0
      %1063 = vmatpush1.msra.mxu0 %v710
      %1064 = vmatprep.subr.mxu0 0.0
      %1065 = vmatpush1.msra.mxu0 %v711
      %1066 = vmatprep.subr.mxu0 0.0
      %1067 = vmatpush1.msra.mxu0 %v712
      %1068 = vmatprep.subr.mxu0 0.0
      %1069 = vmatpush1.msra.mxu0 %v713
      %1070 = vmatprep.subr.mxu0 0.0
      %1071 = vmatpush1.msra.mxu0 %v714
      %1072 = vmatprep.subr.mxu0 0.0
      %1073 = vmatpush1.msra.mxu0 %v715
      %1074 = vmatprep.subr.mxu0 0.0
      %1075 = vmatpush1.msra.mxu0 %v716
      %1076 = vmatprep.subr.mxu0 0.0
      %1077 = vmatpush1.msra.mxu0 %v717
      %1078 = vmatprep.subr.mxu0 0.0
      %1079 = vmatpush1.msra.mxu0 %v718
      %1080 = vmatprep.subr.mxu0 0.0
      %1081 = vmatpush1.msra.mxu0 %v719
      %1082 = vmatprep.subr.mxu0 0.0
      %1083 = vmatpush1.msra.mxu0 %v720
      %1084 = vmatprep.subr.mxu0 0.0
      %1085 = vmatpush1.msra.mxu0 %v721
      %1086 = vmatprep.subr.mxu0 0.0
      %1087 = vmatpush1.msra.mxu0 %v722
      %1088 = vmatprep.subr.mxu0 0.0
      %1089 = vmatpush1.msra.mxu0 %v723
      %1090 = vmatprep.subr.mxu0 0.0
      %1091 = vmatpush1.msra.mxu0 %v724
      %1092 = vmatprep.subr.mxu0 0.0
      %1093 = vmatpush1.msra.mxu0 %v725
      %1094 = vmatprep.subr.mxu0 0.0
      %1095 = vmatpush1.msra.mxu0 %v726
      %1096 = vmatprep.mubr.f32.mxu0 %v304
      %1097 = vmatmul.mubr.f32.gmra.mrb[0].mxu0 %v519
      %v1098 = vpop.f32.mrb[0].mxu0
      %v1099 = vadd.f32 %v874, %v1098
      %v1100 = vpop.f32.mrb[0].mxu0
      %1101 = vmatprep.mubr.f32.mxu0 %v305
      %1102 = vmatmul.mubr.f32.gmra.mrb[0].mxu0 %v521
      %v1103 = vpop.f32.mrb[0].mxu0
      %v1104 = vadd.f32 %v879, %v1103
      %v1105 = vpop.f32.mrb[0].mxu0
      %1106 = vmatprep.mubr.f32.mxu0 %v307
      %1107 = vmatmul.mubr.f32.gmra.mrb[0].mxu0 %v524
      %v1108 = vpop.f32.mrb[0].mxu0
      %v1109 = vadd.f32 %v884, %v1108
      %v1110 = vpop.f32.mrb[0].mxu0
      %1111 = vmatprep.mubr.f32.mxu0 %v308
      %1112 = vmatmul.mubr.f32.gmra.mrb[0].mxu0 %v526
      %v1113 = vpop.f32.mrb[0].mxu0
      %v1114 = vadd.f32 %v889, %v1113
      %v1115 = vpop.f32.mrb[0].mxu0
      %1116 = vmatprep.mubr.f32.mxu0 %v310
      %1117 = vmatmul.mubr.f32.gmra.mrb[0].mxu0 %v529
      %v1118 = vpop.f32.mrb[0].mxu0
      %v1119 = vadd.f32 %v894, %v1118
      %v1120 = vpop.f32.mrb[0].mxu0
      %1121 = vmatprep.mubr.f32.mxu0 %v311
      %1122 = vmatmul.mubr.f32.gmra.mrb[0].mxu0 %v531
      %v1123 = vpop.f32.mrb[0].mxu0
      %v1124 = vadd.f32 %v899, %v1123
      %v1125 = vpop.f32.mrb[0].mxu0
      %1126 = vmatprep.mubr.f32.mxu0 %v313
      %1127 = vmatmul.mubr.f32.gmra.mrb[0].mxu0 %v534
      %v1128 = vpop.f32.mrb[0].mxu0
      %v1129 = vadd.f32 %v904, %v1128
      %v1130 = vpop.f32.mrb[0].mxu0
      %1131 = vmatprep.mubr.f32.mxu0 %v314
      %1132 = vmatmul.mubr.f32.gmra.mrb[0].mxu0 %v536
      %v1133 = vpop.f32.mrb[0].mxu0
      %v1134 = vadd.f32 %v909, %v1133
      %v1135 = vpop.f32.mrb[0].mxu0
      %1136 = vmatprep.mubr.f32.mxu0 %v316
      %1137 = vmatmul.mubr.f32.gmra.mrb[0].mxu0 %v539
      %v1138 = vpop.f32.mrb[0].mxu0
      %v1139 = vadd.f32 %v914, %v1138
      %v1140 = vpop.f32.mrb[0].mxu0
      %1141 = vmatprep.mubr.f32.mxu0 %v317
      %1142 = vmatmul.mubr.f32.gmra.mrb[0].mxu0 %v541
      %v1143 = vpop.f32.mrb[0].mxu0
      %v1144 = vadd.f32 %v919, %v1143
      %v1145 = vpop.f32.mrb[0].mxu0
      %1146 = vmatprep.mubr.f32.mxu0 %v319
      %1147 = vmatmul.mubr.f32.gmra.mrb[0].mxu0 %v544
      %v1148 = vpop.f32.mrb[0].mxu0
      %v1149 = vadd.f32 %v924, %v1148
      %v1150 = vpop.f32.mrb[0].mxu0
      %1151 = vmatprep.mubr.f32.mxu0 %v320
      %1152 = vmatmul.mubr.f32.gmra.mrb[0].mxu0 %v546
      %v1153 = vpop.f32.mrb[0].mxu0
      %v1154 = vadd.f32 %v929, %v1153
      %v1155 = vpop.f32.mrb[0].mxu0
      %1156 = vmatprep.mubr.f32.mxu0 %v322
      %1157 = vmatmul.mubr.f32.gmra.mrb[0].mxu0 %v549
      %v1158 = vpop.f32.mrb[0].mxu0
      %v1159 = vadd.f32 %v934, %v1158
      %v1160 = vpop.f32.mrb[0].mxu0
      %1161 = vmatprep.mubr.f32.mxu0 %v323
      %1162 = vmatmul.mubr.f32.gmra.mrb[0].mxu0 %v551
      %v1163 = vpop.f32.mrb[0].mxu0
      %v1164 = vadd.f32 %v939, %v1163
      %v1165 = vpop.f32.mrb[0].mxu0
      %1166 = vmatprep.mubr.f32.mxu0 %v325
      %1167 = vmatmul.mubr.f32.gmra.mrb[0].mxu0 %v554
      %v1168 = vpop.f32.mrb[0].mxu0
      %v1169 = vadd.f32 %v944, %v1168
      %v1170 = vpop.f32.mrb[0].mxu0
      %1171 = vmatprep.mubr.f32.mxu0 %v326
      %1172 = vmatmul.mubr.f32.gmra.mrb[0].mxu0 %v556
      %v1173 = vpop.f32.mrb[0].mxu0
      %v1174 = vadd.f32 %v949, %v1173
      %v1175 = vpop.f32.mrb[0].mxu0
      %1176 = vmatprep.mubr.f32.mxu0 %v328
      %1177 = vmatmul.mubr.f32.gmra.mrb[0].mxu0 %v559
      %v1178 = vpop.f32.mrb[0].mxu0
      %v1179 = vadd.f32 %v954, %v1178
      %v1180 = vpop.f32.mrb[0].mxu0
      %1181 = vmatprep.mubr.f32.mxu0 %v329
      %1182 = vmatmul.mubr.f32.gmra.mrb[0].mxu0 %v561
      %v1183 = vpop.f32.mrb[0].mxu0
      %v1184 = vadd.f32 %v959, %v1183
      %v1185 = vpop.f32.mrb[0].mxu0
      %1186 = vmatprep.mubr.f32.mxu0 %v331
      %1187 = vmatmul.mubr.f32.gmra.mrb[0].mxu0 %v564
      %v1188 = vpop.f32.mrb[0].mxu0
      %v1189 = vadd.f32 %v964, %v1188
      %v1190 = vpop.f32.mrb[0].mxu0
      %1191 = vmatprep.mubr.f32.mxu0 %v332
      %1192 = vmatmul.mubr.f32.gmra.mrb[0].mxu0 %v566
      %v1193 = vpop.f32.mrb[0].mxu0
      %v1194 = vadd.f32 %v969, %v1193
      %v1195 = vpop.f32.mrb[0].mxu0
      %1196 = vmatprep.mubr.f32.mxu0 %v334
      %1197 = vmatmul.mubr.f32.gmra.mrb[0].mxu0 %v569
      %v1198 = vpop.f32.mrb[0].mxu0
      %v1199 = vadd.f32 %v974, %v1198
      %v1200 = vpop.f32.mrb[0].mxu0
      %1201 = vmatprep.mubr.f32.mxu0 %v335
      %1202 = vmatmul.mubr.f32.gmra.mrb[0].mxu0 %v571
      %v1203 = vpop.f32.mrb[0].mxu0
      %v1204 = vadd.f32 %v979, %v1203
      %v1205 = vpop.f32.mrb[0].mxu0
      %1206 = vmatprep.mubr.f32.mxu0 %v337
      %1207 = vmatmul.mubr.f32.gmra.mrb[0].mxu0 %v574
      %v1208 = vpop.f32.mrb[0].mxu0
      %v1209 = vadd.f32 %v984, %v1208
      %v1210 = vpop.f32.mrb[0].mxu0
      %1211 = vmatprep.mubr.f32.mxu0 %v338
      %1212 = vmatmul.mubr.f32.gmra.mrb[0].mxu0 %v576
      %v1213 = vpop.f32.mrb[0].mxu0
      %v1214 = vadd.f32 %v989, %v1213
      %v1215 = vpop.f32.mrb[0].mxu0
      %1216 = vmatprep.mubr.f32.mxu0 %v340
      %1217 = vmatmul.mubr.f32.gmra.mrb[0].mxu0 %v579
      %v1218 = vpop.f32.mrb[0].mxu0
      %v1219 = vadd.f32 %v994, %v1218
      %v1220 = vpop.f32.mrb[0].mxu0
      %1221 = vmatprep.mubr.f32.mxu0 %v341
      %1222 = vmatmul.mubr.f32.gmra.mrb[0].mxu0 %v581
      %v1223 = vpop.f32.mrb[0].mxu0
      %v1224 = vadd.f32 %v999, %v1223
      %v1225 = vpop.f32.mrb[0].mxu0
      %1226 = vmatprep.mubr.f32.mxu0 %v343
      %1227 = vmatmul.mubr.f32.gmra.mrb[0].mxu0 %v584
      %v1228 = vpop.f32.mrb[0].mxu0
      %v1229 = vadd.f32 %v1004, %v1228
      %v1230 = vpop.f32.mrb[0].mxu0
      %1231 = vmatprep.mubr.f32.mxu0 %v344
      %1232 = vmatmul.mubr.f32.gmra.mrb[0].mxu0 %v586
      %v1233 = vpop.f32.mrb[0].mxu0
      %v1234 = vadd.f32 %v1009, %v1233
      %v1235 = vpop.f32.mrb[0].mxu0
      %1236 = vmatprep.mubr.f32.mxu0 %v346
      %1237 = vmatmul.mubr.f32.gmra.mrb[0].mxu0 %v589
      %v1238 = vpop.f32.mrb[0].mxu0
      %v1239 = vadd.f32 %v1014, %v1238
      %v1240 = vpop.f32.mrb[0].mxu0
      %1241 = vmatprep.mubr.f32.mxu0 %v347
      %1242 = vmatmul.mubr.f32.gmra.mrb[0].mxu0 %v591
      %v1243 = vpop.f32.mrb[0].mxu0
      %v1244 = vadd.f32 %v1019, %v1243
      %v1245 = vpop.f32.mrb[0].mxu0
      %1246 = vmatprep.mubr.f32.mxu0 %v349
      %1247 = vmatmul.mubr.f32.gmra.mrb[0].mxu0 %v594
      %v1248 = vpop.f32.mrb[0].mxu0
      %v1249 = vadd.f32 %v1024, %v1248
      %v1250 = vpop.f32.mrb[0].mxu0
      %1251 = vmatprep.mubr.f32.mxu0 %v350
      %1252 = vmatmul.mubr.f32.gmra.mrb[0].mxu0 %v596
      %v1253 = vpop.f32.mrb[0].mxu0
      %v1254 = vadd.f32 %v1029, %v1253
      %v1255 = vpop.f32.mrb[0].mxu0
      %1256 = vdwg.mxu0
      %1257 = vmatprep.subr.mxu0 0.0
      %1258 = vmatpush1.msra.mxu0 %v727
      %1259 = vmatprep.subr.mxu0 0.0
      %1260 = vmatpush1.msra.mxu0 %v728
      %1261 = vmatprep.subr.mxu0 0.0
      %1262 = vmatpush1.msra.mxu0 %v729
      %1263 = vmatprep.subr.mxu0 0.0
      %1264 = vmatpush1.msra.mxu0 %v730
      %1265 = vmatprep.subr.mxu0 0.0
      %1266 = vmatpush1.msra.mxu0 %v731
      %1267 = vmatprep.subr.mxu0 0.0
      %1268 = vmatpush1.msra.mxu0 %v732
      %1269 = vmatprep.subr.mxu0 0.0
      %1270 = vmatpush1.msra.mxu0 %v733
      %1271 = vmatprep.subr.mxu0 0.0
      %1272 = vmatpush1.msra.mxu0 %v734
      %1273 = vmatprep.subr.mxu0 0.0
      %1274 = vmatpush1.msra.mxu0 %v735
      %1275 = vmatprep.subr.mxu0 0.0
      %1276 = vmatpush1.msra.mxu0 %v736
      %1277 = vmatprep.subr.mxu0 0.0
      %1278 = vmatpush1.msra.mxu0 %v737
      %1279 = vmatprep.subr.mxu0 0.0
      %1280 = vmatpush1.msra.mxu0 %v738
      %1281 = vmatprep.subr.mxu0 0.0
      %1282 = vmatpush1.msra.mxu0 %v739
      %1283 = vmatprep.subr.mxu0 0.0
      %1284 = vmatpush1.msra.mxu0 %v740
      %1285 = vmatprep.subr.mxu0 0.0
      %1286 = vmatpush1.msra.mxu0 %v741
      %1287 = vmatprep.subr.mxu0 0.0
      %1288 = vmatpush1.msra.mxu0 %v742
      %1289 = vmatprep.subr.mxu0 0.0
      %1290 = vmatpush1.msra.mxu0 %v743
      %1291 = vmatprep.subr.mxu0 0.0
      %1292 = vmatpush1.msra.mxu0 %v744
      %1293 = vmatprep.subr.mxu0 0.0
      %1294 = vmatpush1.msra.mxu0 %v745
      %1295 = vmatprep.subr.mxu0 0.0
      %1296 = vmatpush1.msra.mxu0 %v746
      %1297 = vmatprep.subr.mxu0 0.0
      %1298 = vmatpush1.msra.mxu0 %v747
      %1299 = vmatprep.subr.mxu0 0.0
      %1300 = vmatpush1.msra.mxu0 %v748
      %1301 = vmatprep.subr.mxu0 0.0
      %1302 = vmatpush1.msra.mxu0 %v749
      %1303 = vmatprep.subr.mxu0 0.0
      %1304 = vmatpush1.msra.mxu0 %v750
      %1305 = vmatprep.subr.mxu0 0.0
      %1306 = vmatpush1.msra.mxu0 %v751
      %1307 = vmatprep.subr.mxu0 0.0
      %1308 = vmatpush1.msra.mxu0 %v752
      %1309 = vmatprep.subr.mxu0 0.0
      %1310 = vmatpush1.msra.mxu0 %v753
      %1311 = vmatprep.subr.mxu0 0.0
      %1312 = vmatpush1.msra.mxu0 %v754
      %1313 = vmatprep.subr.mxu0 0.0
      %1314 = vmatpush1.msra.mxu0 %v755
      %1315 = vmatprep.subr.mxu0 0.0
      %1316 = vmatpush1.msra.mxu0 %v756
      %1317 = vmatprep.subr.mxu0 0.0
      %1318 = vmatpush1.msra.mxu0 %v757
      %1319 = vmatprep.subr.mxu0 0.0
      %1320 = vmatpush1.msra.mxu0 %v758
      %1321 = vmatprep.mubr.f32.mxu0 %v524
      %1322 = vmatmul.mubr.f32.gmra.mrb[0].mxu0 %v411
      %v1323 = vpop.f32.mrb[0].mxu0
      %v1324 = vadd.f32 %v1099, %v1323
      %v1325 = vpop.f32.mrb[0].mxu0
      %1326 = vmatprep.mubr.f32.mxu0 %v526
      %1327 = vmatmul.mubr.f32.gmra.mrb[0].mxu0 %v413
      %v1328 = vpop.f32.mrb[0].mxu0
      %v1329 = vadd.f32 %v1104, %v1328
      %v1330 = vpop.f32.mrb[0].mxu0
      %1331 = vmatprep.mubr.f32.mxu0 %v529
      %1332 = vmatmul.mubr.f32.gmra.mrb[0].mxu0 %v416
      %v1333 = vpop.f32.mrb[0].mxu0
      %v1334 = vadd.f32 %v1109, %v1333
      %v1335 = vpop.f32.mrb[0].mxu0
      %1336 = vmatprep.mubr.f32.mxu0 %v531
      %1337 = vmatmul.mubr.f32.gmra.mrb[0].mxu0 %v418
      %v1338 = vpop.f32.mrb[0].mxu0
      %v1339 = vadd.f32 %v1114, %v1338
      %v1340 = vpop.f32.mrb[0].mxu0
      %1341 = vmatprep.mubr.f32.mxu0 %v534
      %1342 = vmatmul.mubr.f32.gmra.mrb[0].mxu0 %v421
      %v1343 = vpop.f32.mrb[0].mxu0
      %v1344 = vadd.f32 %v1119, %v1343
      %v1345 = vpop.f32.mrb[0].mxu0
      %1346 = vmatprep.mubr.f32.mxu0 %v536
      %1347 = vmatmul.mubr.f32.gmra.mrb[0].mxu0 %v423
      %v1348 = vpop.f32.mrb[0].mxu0
      %v1349 = vadd.f32 %v1124, %v1348
      %v1350 = vpop.f32.mrb[0].mxu0
      %1351 = vmatprep.mubr.f32.mxu0 %v539
      %1352 = vmatmul.mubr.f32.gmra.mrb[0].mxu0 %v426
      %v1353 = vpop.f32.mrb[0].mxu0
      %v1354 = vadd.f32 %v1129, %v1353
      %v1355 = vpop.f32.mrb[0].mxu0
      %1356 = vmatprep.mubr.f32.mxu0 %v541
      %1357 = vmatmul.mubr.f32.gmra.mrb[0].mxu0 %v428
      %v1358 = vpop.f32.mrb[0].mxu0
      %v1359 = vadd.f32 %v1134, %v1358
      %v1360 = vpop.f32.mrb[0].mxu0
      %1361 = vmatprep.mubr.f32.mxu0 %v544
      %1362 = vmatmul.mubr.f32.gmra.mrb[0].mxu0 %v431
      %v1363 = vpop.f32.mrb[0].mxu0
      %v1364 = vadd.f32 %v1139, %v1363
      %v1365 = vpop.f32.mrb[0].mxu0
      %1366 = vmatprep.mubr.f32.mxu0 %v546
      %1367 = vmatmul.mubr.f32.gmra.mrb[0].mxu0 %v433
      %v1368 = vpop.f32.mrb[0].mxu0
      %v1369 = vadd.f32 %v1144, %v1368
      %v1370 = vpop.f32.mrb[0].mxu0
      %1371 = vmatprep.mubr.f32.mxu0 %v549
      %1372 = vmatmul.mubr.f32.gmra.mrb[0].mxu0 %v436
      %v1373 = vpop.f32.mrb[0].mxu0
      %v1374 = vadd.f32 %v1149, %v1373
      %v1375 = vpop.f32.mrb[0].mxu0
      %1376 = vmatprep.mubr.f32.mxu0 %v551
      %1377 = vmatmul.mubr.f32.gmra.mrb[0].mxu0 %v438
      %v1378 = vpop.f32.mrb[0].mxu0
      %v1379 = vadd.f32 %v1154, %v1378
      %v1380 = vpop.f32.mrb[0].mxu0
      %1381 = vmatprep.mubr.f32.mxu0 %v554
      %1382 = vmatmul.mubr.f32.gmra.mrb[0].mxu0 %v441
      %v1383 = vpop.f32.mrb[0].mxu0
      %v1384 = vadd.f32 %v1159, %v1383
      %v1385 = vpop.f32.mrb[0].mxu0
      %1386 = vmatprep.mubr.f32.mxu0 %v556
      %1387 = vmatmul.mubr.f32.gmra.mrb[0].mxu0 %v443
      %v1388 = vpop.f32.mrb[0].mxu0
      %v1389 = vadd.f32 %v1164, %v1388
      %v1390 = vpop.f32.mrb[0].mxu0
      %1391 = vmatprep.mubr.f32.mxu0 %v559
      %1392 = vmatmul.mubr.f32.gmra.mrb[0].mxu0 %v446
      %v1393 = vpop.f32.mrb[0].mxu0
      %v1394 = vadd.f32 %v1169, %v1393
      %v1395 = vpop.f32.mrb[0].mxu0
      %1396 = vmatprep.mubr.f32.mxu0 %v561
      %1397 = vmatmul.mubr.f32.gmra.mrb[0].mxu0 %v448
      %v1398 = vpop.f32.mrb[0].mxu0
      %v1399 = vadd.f32 %v1174, %v1398
      %v1400 = vpop.f32.mrb[0].mxu0
      %1401 = vmatprep.mubr.f32.mxu0 %v564
      %1402 = vmatmul.mubr.f32.gmra.mrb[0].mxu0 %v451
      %v1403 = vpop.f32.mrb[0].mxu0
      %v1404 = vadd.f32 %v1179, %v1403
      %v1405 = vpop.f32.mrb[0].mxu0
      %1406 = vmatprep.mubr.f32.mxu0 %v566
      %1407 = vmatmul.mubr.f32.gmra.mrb[0].mxu0 %v453
      %v1408 = vpop.f32.mrb[0].mxu0
      %v1409 = vadd.f32 %v1184, %v1408
      %v1410 = vpop.f32.mrb[0].mxu0
      %1411 = vmatprep.mubr.f32.mxu0 %v569
      %1412 = vmatmul.mubr.f32.gmra.mrb[0].mxu0 %v456
      %v1413 = vpop.f32.mrb[0].mxu0
      %v1414 = vadd.f32 %v1189, %v1413
      %v1415 = vpop.f32.mrb[0].mxu0
      %1416 = vmatprep.mubr.f32.mxu0 %v571
      %1417 = vmatmul.mubr.f32.gmra.mrb[0].mxu0 %v458
      %v1418 = vpop.f32.mrb[0].mxu0
      %v1419 = vadd.f32 %v1194, %v1418
      %v1420 = vpop.f32.mrb[0].mxu0
      %1421 = vmatprep.mubr.f32.mxu0 %v574
      %1422 = vmatmul.mubr.f32.gmra.mrb[0].mxu0 %v461
      %v1423 = vpop.f32.mrb[0].mxu0
      %v1424 = vadd.f32 %v1199, %v1423
      %v1425 = vpop.f32.mrb[0].mxu0
      %1426 = vmatprep.mubr.f32.mxu0 %v576
      %1427 = vmatmul.mubr.f32.gmra.mrb[0].mxu0 %v463
      %v1428 = vpop.f32.mrb[0].mxu0
      %v1429 = vadd.f32 %v1204, %v1428
      %v1430 = vpop.f32.mrb[0].mxu0
      %1431 = vmatprep.mubr.f32.mxu0 %v579
      %1432 = vmatmul.mubr.f32.gmra.mrb[0].mxu0 %v466
      %v1433 = vpop.f32.mrb[0].mxu0
      %v1434 = vadd.f32 %v1209, %v1433
      %v1435 = vpop.f32.mrb[0].mxu0
      %1436 = vmatprep.mubr.f32.mxu0 %v581
      %1437 = vmatmul.mubr.f32.gmra.mrb[0].mxu0 %v468
      %v1438 = vpop.f32.mrb[0].mxu0
      %v1439 = vadd.f32 %v1214, %v1438
      %v1440 = vpop.f32.mrb[0].mxu0
      %1441 = vmatprep.mubr.f32.mxu0 %v584
      %1442 = vmatmul.mubr.f32.gmra.mrb[0].mxu0 %v471
      %v1443 = vpop.f32.mrb[0].mxu0
      %v1444 = vadd.f32 %v1219, %v1443
      %v1445 = vpop.f32.mrb[0].mxu0
      %1446 = vmatprep.mubr.f32.mxu0 %v586
      %1447 = vmatmul.mubr.f32.gmra.mrb[0].mxu0 %v473
      %v1448 = vpop.f32.mrb[0].mxu0
      %v1449 = vadd.f32 %v1224, %v1448
      %v1450 = vpop.f32.mrb[0].mxu0
      %1451 = vmatprep.mubr.f32.mxu0 %v589
      %1452 = vmatmul.mubr.f32.gmra.mrb[0].mxu0 %v476
      %v1453 = vpop.f32.mrb[0].mxu0
      %v1454 = vadd.f32 %v1229, %v1453
      %v1455 = vpop.f32.mrb[0].mxu0
      %1456 = vmatprep.mubr.f32.mxu0 %v591
      %1457 = vmatmul.mubr.f32.gmra.mrb[0].mxu0 %v478
      %v1458 = vpop.f32.mrb[0].mxu0
      %v1459 = vadd.f32 %v1234, %v1458
      %v1460 = vpop.f32.mrb[0].mxu0
      %1461 = vmatprep.mubr.f32.mxu0 %v594
      %1462 = vmatmul.mubr.f32.gmra.mrb[0].mxu0 %v481
      %v1463 = vpop.f32.mrb[0].mxu0
      %v1464 = vadd.f32 %v1239, %v1463
      %v1465 = vpop.f32.mrb[0].mxu0
      %1466 = vmatprep.mubr.f32.mxu0 %v596
      %1467 = vmatmul.mubr.f32.gmra.mrb[0].mxu0 %v483
      %v1468 = vpop.f32.mrb[0].mxu0
      %v1469 = vadd.f32 %v1244, %v1468
      %v1470 = vpop.f32.mrb[0].mxu0
      %1471 = vmatprep.mubr.f32.mxu0 %v641
      %1472 = vmatmul.mubr.f32.gmra.mrb[0].mxu0 %v634
      %v1473 = vpop.f32.mrb[0].mxu0
      %v1474 = vadd.f32 %v1249, %v1473
      %v1475 = vpop.f32.mrb[0].mxu0
      %1476 = vmatprep.mubr.f32.mxu0 %v643
      %1477 = vmatmul.mubr.f32.gmra.mrb[0].mxu0 %v636
      %v1478 = vpop.f32.mrb[0].mxu0
      %v1479 = vadd.f32 %v1254, %v1478
      %v1480 = vpop.f32.mrb[0].mxu0
      %1481 = vdwg.mxu0
      %1482 = vmatprep.subr.mxu0 0.0
      %1483 = vmatpush1.msra.mxu0 %v759
      %1484 = vmatprep.subr.mxu0 0.0
      %1485 = vmatpush1.msra.mxu0 %v760
      %1486 = vmatprep.subr.mxu0 0.0
      %1487 = vmatpush1.msra.mxu0 %v761
      %1488 = vmatprep.subr.mxu0 0.0
      %1489 = vmatpush1.msra.mxu0 %v762
      %1490 = vmatprep.subr.mxu0 0.0
      %1491 = vmatpush1.msra.mxu0 %v763
      %1492 = vmatprep.subr.mxu0 0.0
      %1493 = vmatpush1.msra.mxu0 %v764
      %1494 = vmatprep.subr.mxu0 0.0
      %1495 = vmatpush1.msra.mxu0 %v765
      %1496 = vmatprep.subr.mxu0 0.0
      %1497 = vmatpush1.msra.mxu0 %v766
      %1498 = vmatprep.subr.mxu0 0.0
      %1499 = vmatpush1.msra.mxu0 %v767
      %1500 = vmatprep.subr.mxu0 0.0
      %1501 = vmatpush1.msra.mxu0 %v768
      %1502 = vmatprep.subr.mxu0 0.0
      %1503 = vmatpush1.msra.mxu0 %v769
      %1504 = vmatprep.subr.mxu0 0.0
      %1505 = vmatpush1.msra.mxu0 %v770
      %1506 = vmatprep.subr.mxu0 0.0
      %1507 = vmatpush1.msra.mxu0 %v771
      %1508 = vmatprep.subr.mxu0 0.0
      %1509 = vmatpush1.msra.mxu0 %v772
      %1510 = vmatprep.subr.mxu0 0.0
      %1511 = vmatpush1.msra.mxu0 %v773
      %1512 = vmatprep.subr.mxu0 0.0
      %1513 = vmatpush1.msra.mxu0 %v774
      %1514 = vmatprep.subr.mxu0 0.0
      %1515 = vmatpush1.msra.mxu0 %v775
      %1516 = vmatprep.subr.mxu0 0.0
      %1517 = vmatpush1.msra.mxu0 %v776
      %1518 = vmatprep.subr.mxu0 0.0
      %1519 = vmatpush1.msra.mxu0 %v777
      %1520 = vmatprep.subr.mxu0 0.0
      %1521 = vmatpush1.msra.mxu0 %v778
      %1522 = vmatprep.subr.mxu0 0.0
      %1523 = vmatpush1.msra.mxu0 %v779
      %1524 = vmatprep.subr.mxu0 0.0
      %1525 = vmatpush1.msra.mxu0 %v780
      %1526 = vmatprep.subr.mxu0 0.0
      %1527 = vmatpush1.msra.mxu0 %v781
      %1528 = vmatprep.subr.mxu0 0.0
      %1529 = vmatpush1.msra.mxu0 %v782
      %1530 = vmatprep.subr.mxu0 0.0
      %1531 = vmatpush1.msra.mxu0 %v783
      %1532 = vmatprep.subr.mxu0 0.0
      %1533 = vmatpush1.msra.mxu0 %v784
      %1534 = vmatprep.subr.mxu0 0.0
      %1535 = vmatpush1.msra.mxu0 %v785
      %1536 = vmatprep.subr.mxu0 0.0
      %1537 = vmatpush1.msra.mxu0 %v786
      %1538 = vmatprep.subr.mxu0 0.0
      %1539 = vmatpush1.msra.mxu0 %v787
      %1540 = vmatprep.subr.mxu0 0.0
      %1541 = vmatpush1.msra.mxu0 %v788
      %1542 = vmatprep.subr.mxu0 0.0
      %1543 = vmatpush1.msra.mxu0 %v789
      %1544 = vmatprep.subr.mxu0 0.0
      %1545 = vmatpush1.msra.mxu0 %v790
      %1546 = vmatprep.mubr.f32.mxu0 %v416
      %1547 = vmatmul.mubr.f32.gmra.mrb[0].mxu0 %v307
      %v1548 = vpop.f32.mrb[0].mxu0
      %v1549 = vadd.f32 %v1324, %v1548
      %v1550 = vpop.f32.mrb[0].mxu0
      %1551 = vmatprep.mubr.f32.mxu0 %v418
      %1552 = vmatmul.mubr.f32.gmra.mrb[0].mxu0 %v308
      %v1553 = vpop.f32.mrb[0].mxu0
      %v1554 = vadd.f32 %v1329, %v1553
      %v1555 = vpop.f32.mrb[0].mxu0
      %1556 = vmatprep.mubr.f32.mxu0 %v421
      %1557 = vmatmul.mubr.f32.gmra.mrb[0].mxu0 %v310
      %v1558 = vpop.f32.mrb[0].mxu0
      %v1559 = vadd.f32 %v1334, %v1558
      %v1560 = vpop.f32.mrb[0].mxu0
      %1561 = vmatprep.mubr.f32.mxu0 %v423
      %1562 = vmatmul.mubr.f32.gmra.mrb[0].mxu0 %v311
      %v1563 = vpop.f32.mrb[0].mxu0
      %v1564 = vadd.f32 %v1339, %v1563
      %v1565 = vpop.f32.mrb[0].mxu0
      %1566 = vmatprep.mubr.f32.mxu0 %v426
      %1567 = vmatmul.mubr.f32.gmra.mrb[0].mxu0 %v313
      %v1568 = vpop.f32.mrb[0].mxu0
      %v1569 = vadd.f32 %v1344, %v1568
      %v1570 = vpop.f32.mrb[0].mxu0
      %1571 = vmatprep.mubr.f32.mxu0 %v428
      %1572 = vmatmul.mubr.f32.gmra.mrb[0].mxu0 %v314
      %v1573 = vpop.f32.mrb[0].mxu0
      %v1574 = vadd.f32 %v1349, %v1573
      %v1575 = vpop.f32.mrb[0].mxu0
      %1576 = vmatprep.mubr.f32.mxu0 %v431
      %1577 = vmatmul.mubr.f32.gmra.mrb[0].mxu0 %v316
      %v1578 = vpop.f32.mrb[0].mxu0
      %v1579 = vadd.f32 %v1354, %v1578
      %v1580 = vpop.f32.mrb[0].mxu0
      %1581 = vmatprep.mubr.f32.mxu0 %v433
      %1582 = vmatmul.mubr.f32.gmra.mrb[0].mxu0 %v317
      %v1583 = vpop.f32.mrb[0].mxu0
      %v1584 = vadd.f32 %v1359, %v1583
      %v1585 = vpop.f32.mrb[0].mxu0
      %1586 = vmatprep.mubr.f32.mxu0 %v436
      %1587 = vmatmul.mubr.f32.gmra.mrb[0].mxu0 %v319
      %v1588 = vpop.f32.mrb[0].mxu0
      %v1589 = vadd.f32 %v1364, %v1588
      %v1590 = vpop.f32.mrb[0].mxu0
      %1591 = vmatprep.mubr.f32.mxu0 %v438
      %1592 = vmatmul.mubr.f32.gmra.mrb[0].mxu0 %v320
      %v1593 = vpop.f32.mrb[0].mxu0
      %v1594 = vadd.f32 %v1369, %v1593
      %v1595 = vpop.f32.mrb[0].mxu0
      %1596 = vmatprep.mubr.f32.mxu0 %v441
      %1597 = vmatmul.mubr.f32.gmra.mrb[0].mxu0 %v322
      %v1598 = vpop.f32.mrb[0].mxu0
      %v1599 = vadd.f32 %v1374, %v1598
      %v1600 = vpop.f32.mrb[0].mxu0
      %1601 = vmatprep.mubr.f32.mxu0 %v443
      %1602 = vmatmul.mubr.f32.gmra.mrb[0].mxu0 %v323
      %v1603 = vpop.f32.mrb[0].mxu0
      %v1604 = vadd.f32 %v1379, %v1603
      %v1605 = vpop.f32.mrb[0].mxu0
      %1606 = vmatprep.mubr.f32.mxu0 %v446
      %1607 = vmatmul.mubr.f32.gmra.mrb[0].mxu0 %v325
      %v1608 = vpop.f32.mrb[0].mxu0
      %v1609 = vadd.f32 %v1384, %v1608
      %v1610 = vpop.f32.mrb[0].mxu0
      %1611 = vmatprep.mubr.f32.mxu0 %v448
      %1612 = vmatmul.mubr.f32.gmra.mrb[0].mxu0 %v326
      %v1613 = vpop.f32.mrb[0].mxu0
      %v1614 = vadd.f32 %v1389, %v1613
      %v1615 = vpop.f32.mrb[0].mxu0
      %1616 = vmatprep.mubr.f32.mxu0 %v451
      %1617 = vmatmul.mubr.f32.gmra.mrb[0].mxu0 %v328
      %v1618 = vpop.f32.mrb[0].mxu0
      %v1619 = vadd.f32 %v1394, %v1618
      %v1620 = vpop.f32.mrb[0].mxu0
      %1621 = vmatprep.mubr.f32.mxu0 %v453
      %1622 = vmatmul.mubr.f32.gmra.mrb[0].mxu0 %v329
      %v1623 = vpop.f32.mrb[0].mxu0
      %v1624 = vadd.f32 %v1399, %v1623
      %v1625 = vpop.f32.mrb[0].mxu0
      %1626 = vmatprep.mubr.f32.mxu0 %v456
      %1627 = vmatmul.mubr.f32.gmra.mrb[0].mxu0 %v331
      %v1628 = vpop.f32.mrb[0].mxu0
      %v1629 = vadd.f32 %v1404, %v1628
      %v1630 = vpop.f32.mrb[0].mxu0
      %1631 = vmatprep.mubr.f32.mxu0 %v458
      %1632 = vmatmul.mubr.f32.gmra.mrb[0].mxu0 %v332
      %v1633 = vpop.f32.mrb[0].mxu0
      %v1634 = vadd.f32 %v1409, %v1633
      %v1635 = vpop.f32.mrb[0].mxu0
      %1636 = vmatprep.mubr.f32.mxu0 %v461
      %1637 = vmatmul.mubr.f32.gmra.mrb[0].mxu0 %v334
      %v1638 = vpop.f32.mrb[0].mxu0
      %v1639 = vadd.f32 %v1414, %v1638
      %v1640 = vpop.f32.mrb[0].mxu0
      %1641 = vmatprep.mubr.f32.mxu0 %v463
      %1642 = vmatmul.mubr.f32.gmra.mrb[0].mxu0 %v335
      %v1643 = vpop.f32.mrb[0].mxu0
      %v1644 = vadd.f32 %v1419, %v1643
      %v1645 = vpop.f32.mrb[0].mxu0
      %1646 = vmatprep.mubr.f32.mxu0 %v466
      %1647 = vmatmul.mubr.f32.gmra.mrb[0].mxu0 %v337
      %v1648 = vpop.f32.mrb[0].mxu0
      %v1649 = vadd.f32 %v1424, %v1648
      %v1650 = vpop.f32.mrb[0].mxu0
      %1651 = vmatprep.mubr.f32.mxu0 %v468
      %1652 = vmatmul.mubr.f32.gmra.mrb[0].mxu0 %v338
      %v1653 = vpop.f32.mrb[0].mxu0
      %v1654 = vadd.f32 %v1429, %v1653
      %v1655 = vpop.f32.mrb[0].mxu0
      %1656 = vmatprep.mubr.f32.mxu0 %v471
      %1657 = vmatmul.mubr.f32.gmra.mrb[0].mxu0 %v340
      %v1658 = vpop.f32.mrb[0].mxu0
      %v1659 = vadd.f32 %v1434, %v1658
      %v1660 = vpop.f32.mrb[0].mxu0
      %1661 = vmatprep.mubr.f32.mxu0 %v473
      %1662 = vmatmul.mubr.f32.gmra.mrb[0].mxu0 %v341
      %v1663 = vpop.f32.mrb[0].mxu0
      %v1664 = vadd.f32 %v1439, %v1663
      %v1665 = vpop.f32.mrb[0].mxu0
      %1666 = vmatprep.mubr.f32.mxu0 %v476
      %1667 = vmatmul.mubr.f32.gmra.mrb[0].mxu0 %v343
      %v1668 = vpop.f32.mrb[0].mxu0
      %v1669 = vadd.f32 %v1444, %v1668
      %v1670 = vpop.f32.mrb[0].mxu0
      %1671 = vmatprep.mubr.f32.mxu0 %v478
      %1672 = vmatmul.mubr.f32.gmra.mrb[0].mxu0 %v344
      %v1673 = vpop.f32.mrb[0].mxu0
      %v1674 = vadd.f32 %v1449, %v1673
      %v1675 = vpop.f32.mrb[0].mxu0
      %1676 = vmatprep.mubr.f32.mxu0 %v481
      %1677 = vmatmul.mubr.f32.gmra.mrb[0].mxu0 %v346
      %v1678 = vpop.f32.mrb[0].mxu0
      %v1679 = vadd.f32 %v1454, %v1678
      %v1680 = vpop.f32.mrb[0].mxu0
      %1681 = vmatprep.mubr.f32.mxu0 %v483
      %1682 = vmatmul.mubr.f32.gmra.mrb[0].mxu0 %v347
      %v1683 = vpop.f32.mrb[0].mxu0
      %v1684 = vadd.f32 %v1459, %v1683
      %v1685 = vpop.f32.mrb[0].mxu0
      %1686 = vmatprep.mubr.f32.mxu0 %v634
      %1687 = vmatmul.mubr.f32.gmra.mrb[0].mxu0 %v349
      %v1688 = vpop.f32.mrb[0].mxu0
      %v1689 = vadd.f32 %v1464, %v1688
      %v1690 = vpop.f32.mrb[0].mxu0
      %1691 = vmatprep.mubr.f32.mxu0 %v636
      %1692 = vmatmul.mubr.f32.gmra.mrb[0].mxu0 %v350
      %v1693 = vpop.f32.mrb[0].mxu0
      %v1694 = vadd.f32 %v1469, %v1693
      %v1695 = vpop.f32.mrb[0].mxu0
      %1696 = vmatprep.mubr.f32.mxu0 %v651
      %1697 = vmatmul.mubr.f32.gmra.mrb[0].mxu0 %v352
      %v1698 = vpop.f32.mrb[0].mxu0
      %v1699 = vadd.f32 %v1474, %v1698
      %v1700 = vpop.f32.mrb[0].mxu0
      %1701 = vmatprep.mubr.f32.mxu0 %v653
      %1702 = vmatmul.mubr.f32.gmra.mrb[0].mxu0 %v353
      %v1703 = vpop.f32.mrb[0].mxu0
      %v1704 = vadd.f32 %v1479, %v1703
      %v1705 = vpop.f32.mrb[0].mxu0
      %1706 = vdwg.mxu0
      %1707 = vmatprep.subr.mxu0 0.0
      %1708 = vmatpush1.msra.mxu0 %v791
      %1709 = vmatprep.subr.mxu0 0.0
      %1710 = vmatpush1.msra.mxu0 %v792
      %1711 = vmatprep.subr.mxu0 0.0
      %1712 = vmatpush1.msra.mxu0 %v793
      %1713 = vmatprep.subr.mxu0 0.0
      %1714 = vmatpush1.msra.mxu0 %v794
      %1715 = vmatprep.subr.mxu0 0.0
      %1716 = vmatpush1.msra.mxu0 %v795
      %1717 = vmatprep.subr.mxu0 0.0
      %1718 = vmatpush1.msra.mxu0 %v796
      %1719 = vmatprep.subr.mxu0 0.0
      %1720 = vmatpush1.msra.mxu0 %v797
      %1721 = vmatprep.subr.mxu0 0.0
      %1722 = vmatpush1.msra.mxu0 %v798
      %1723 = vmatprep.subr.mxu0 0.0
      %1724 = vmatpush1.msra.mxu0 %v799
      %1725 = vmatprep.subr.mxu0 0.0
      %1726 = vmatpush1.msra.mxu0 %v800
      %1727 = vmatprep.subr.mxu0 0.0
      %1728 = vmatpush1.msra.mxu0 %v801
      %1729 = vmatprep.subr.mxu0 0.0
      %1730 = vmatpush1.msra.mxu0 %v802
      %1731 = vmatprep.subr.mxu0 0.0
      %1732 = vmatpush1.msra.mxu0 %v803
      %1733 = vmatprep.subr.mxu0 0.0
      %1734 = vmatpush1.msra.mxu0 %v804
      %1735 = vmatprep.subr.mxu0 0.0
      %1736 = vmatpush1.msra.mxu0 %v805
      %1737 = vmatprep.subr.mxu0 0.0
      %1738 = vmatpush1.msra.mxu0 %v806
      %1739 = vmatprep.subr.mxu0 0.0
      %1740 = vmatpush1.msra.mxu0 0.0
      %1741 = vmatprep.subr.mxu0 0.0
      %1742 = vmatpush1.msra.mxu0 0.0
      %1743 = vmatprep.subr.mxu0 0.0
      %1744 = vmatpush1.msra.mxu0 0.0
      %1745 = vmatprep.subr.mxu0 0.0
      %1746 = vmatpush1.msra.mxu0 0.0
      %1747 = vmatprep.subr.mxu0 0.0
      %1748 = vmatpush1.msra.mxu0 0.0
      %1749 = vmatprep.subr.mxu0 0.0
      %1750 = vmatpush1.msra.mxu0 0.0
      %1751 = vmatprep.subr.mxu0 0.0
      %1752 = vmatpush1.msra.mxu0 0.0
      %1753 = vmatprep.subr.mxu0 0.0
      %1754 = vmatpush1.msra.mxu0 0.0
      %1755 = vmatprep.subr.mxu0 0.0
      %1756 = vmatpush1.msra.mxu0 0.0
      %1757 = vmatprep.subr.mxu0 0.0
      %1758 = vmatpush1.msra.mxu0 0.0
      %1759 = vmatprep.subr.mxu0 0.0
      %1760 = vmatpush1.msra.mxu0 0.0
      %1761 = vmatprep.subr.mxu0 0.0
      %1762 = vmatpush1.msra.mxu0 0.0
      %1763 = vmatprep.subr.mxu0 0.0
      %1764 = vmatpush1.msra.mxu0 0.0
      %1765 = vmatprep.subr.mxu0 0.0
      %1766 = vmatpush1.msra.mxu0 0.0
      %1767 = vmatprep.subr.mxu0 0.0
      %1768 = vmatpush1.msra.mxu0 0.0
      %1769 = vmatprep.subr.mxu0 0.0
      %1770 = vmatpush1.msra.mxu0 0.0
      %1771 = vmatprep.mubr.f32.mxu0 0.0
      %1772 = vmatmul.mubr.f32.gmra.mrb[0].mxu0 %v529
      %v1773 = vpop.f32.mrb[0].mxu0
      %v1774 = vadd.f32 %v1549, %v1773
      %v1775 = vpop.f32.mrb[0].mxu0
      %1776 = vmatprep.mubr.f32.mxu0 0.0
      %1777 = vmatmul.mubr.f32.gmra.mrb[0].mxu0 %v531
      %v1778 = vpop.f32.mrb[0].mxu0
      %v1779 = vadd.f32 %v1554, %v1778
      %v1780 = vpop.f32.mrb[0].mxu0
      %1781 = vmatprep.mubr.f32.mxu0 0.0
      %1782 = vmatmul.mubr.f32.gmra.mrb[0].mxu0 %v534
      %v1783 = vpop.f32.mrb[0].mxu0
      %v1784 = vadd.f32 %v1559, %v1783
      %v1785 = vpop.f32.mrb[0].mxu0
      %1786 = vmatprep.mubr.f32.mxu0 0.0
      %1787 = vmatmul.mubr.f32.gmra.mrb[0].mxu0 %v536
      %v1788 = vpop.f32.mrb[0].mxu0
      %v1789 = vadd.f32 %v1564, %v1788
      %v1790 = vpop.f32.mrb[0].mxu0
      %1791 = vmatprep.mubr.f32.mxu0 0.0
      %1792 = vmatmul.mubr.f32.gmra.mrb[0].mxu0 %v539
      %v1793 = vpop.f32.mrb[0].mxu0
      %v1794 = vadd.f32 %v1569, %v1793
      %v1795 = vpop.f32.mrb[0].mxu0
      %1796 = vmatprep.mubr.f32.mxu0 0.0
      %1797 = vmatmul.mubr.f32.gmra.mrb[0].mxu0 %v541
      %v1798 = vpop.f32.mrb[0].mxu0
      %v1799 = vadd.f32 %v1574, %v1798
      %v1800 = vpop.f32.mrb[0].mxu0
      %1801 = vmatprep.mubr.f32.mxu0 0.0
      %1802 = vmatmul.mubr.f32.gmra.mrb[0].mxu0 %v544
      %v1803 = vpop.f32.mrb[0].mxu0
      %v1804 = vadd.f32 %v1579, %v1803
      %v1805 = vpop.f32.mrb[0].mxu0
      %1806 = vmatprep.mubr.f32.mxu0 0.0
      %1807 = vmatmul.mubr.f32.gmra.mrb[0].mxu0 %v546
      %v1808 = vpop.f32.mrb[0].mxu0
      %v1809 = vadd.f32 %v1584, %v1808
      %v1810 = vpop.f32.mrb[0].mxu0
      %1811 = vmatprep.mubr.f32.mxu0 0.0
      %1812 = vmatmul.mubr.f32.gmra.mrb[0].mxu0 %v549
      %v1813 = vpop.f32.mrb[0].mxu0
      %v1814 = vadd.f32 %v1589, %v1813
      %v1815 = vpop.f32.mrb[0].mxu0
      %1816 = vmatprep.mubr.f32.mxu0 0.0
      %1817 = vmatmul.mubr.f32.gmra.mrb[0].mxu0 %v551
      %v1818 = vpop.f32.mrb[0].mxu0
      %v1819 = vadd.f32 %v1594, %v1818
      %v1820 = vpop.f32.mrb[0].mxu0
      %1821 = vmatprep.mubr.f32.mxu0 0.0
      %1822 = vmatmul.mubr.f32.gmra.mrb[0].mxu0 %v554
      %v1823 = vpop.f32.mrb[0].mxu0
      %v1824 = vadd.f32 %v1599, %v1823
      %v1825 = vpop.f32.mrb[0].mxu0
      %1826 = vmatprep.mubr.f32.mxu0 0.0
      %1827 = vmatmul.mubr.f32.gmra.mrb[0].mxu0 %v556
      %v1828 = vpop.f32.mrb[0].mxu0
      %v1829 = vadd.f32 %v1604, %v1828
      %v1830 = vpop.f32.mrb[0].mxu0
      %1831 = vmatprep.mubr.f32.mxu0 0.0
      %1832 = vmatmul.mubr.f32.gmra.mrb[0].mxu0 %v559
      %v1833 = vpop.f32.mrb[0].mxu0
      %v1834 = vadd.f32 %v1609, %v1833
      %v1835 = vpop.f32.mrb[0].mxu0
      %1836 = vmatprep.mubr.f32.mxu0 0.0
      %1837 = vmatmul.mubr.f32.gmra.mrb[0].mxu0 %v561
      %v1838 = vpop.f32.mrb[0].mxu0
      %v1839 = vadd.f32 %v1614, %v1838
      %v1840 = vpop.f32.mrb[0].mxu0
      %1841 = vmatprep.mubr.f32.mxu0 0.0
      %1842 = vmatmul.mubr.f32.gmra.mrb[0].mxu0 %v564
      %v1843 = vpop.f32.mrb[0].mxu0
      %v1844 = vadd.f32 %v1619, %v1843
      %v1845 = vpop.f32.mrb[0].mxu0
      %1846 = vmatprep.mubr.f32.mxu0 0.0
      %1847 = vmatmul.mubr.f32.gmra.mrb[0].mxu0 %v566
      %v1848 = vpop.f32.mrb[0].mxu0
      %v1849 = vadd.f32 %v1624, %v1848
      %v1850 = vpop.f32.mrb[0].mxu0
      %1851 = vmatprep.mubr.f32.mxu0 0.0
      %1852 = vmatmul.mubr.f32.gmra.mrb[0].mxu0 %v569
      %v1853 = vpop.f32.mrb[0].mxu0
      %v1854 = vadd.f32 %v1629, %v1853
      %v1855 = vpop.f32.mrb[0].mxu0
      %1856 = vmatprep.mubr.f32.mxu0 0.0
      %1857 = vmatmul.mubr.f32.gmra.mrb[0].mxu0 %v571
      %v1858 = vpop.f32.mrb[0].mxu0
      %v1859 = vadd.f32 %v1634, %v1858
      %v1860 = vpop.f32.mrb[0].mxu0
      %1861 = vmatprep.mubr.f32.mxu0 0.0
      %1862 = vmatmul.mubr.f32.gmra.mrb[0].mxu0 %v574
      %v1863 = vpop.f32.mrb[0].mxu0
      %v1864 = vadd.f32 %v1639, %v1863
      %v1865 = vpop.f32.mrb[0].mxu0
      %1866 = vmatprep.mubr.f32.mxu0 0.0
      %1867 = vmatmul.mubr.f32.gmra.mrb[0].mxu0 %v576
      %v1868 = vpop.f32.mrb[0].mxu0
      %v1869 = vadd.f32 %v1644, %v1868
      %v1870 = vpop.f32.mrb[0].mxu0
      %1871 = vmatprep.mubr.f32.mxu0 0.0
      %1872 = vmatmul.mubr.f32.gmra.mrb[0].mxu0 %v579
      %v1873 = vpop.f32.mrb[0].mxu0
      %v1874 = vadd.f32 %v1649, %v1873
      %v1875 = vpop.f32.mrb[0].mxu0
      %1876 = vmatprep.mubr.f32.mxu0 0.0
      %1877 = vmatmul.mubr.f32.gmra.mrb[0].mxu0 %v581
      %v1878 = vpop.f32.mrb[0].mxu0
      %v1879 = vadd.f32 %v1654, %v1878
      %v1880 = vpop.f32.mrb[0].mxu0
      %1881 = vmatprep.mubr.f32.mxu0 0.0
      %1882 = vmatmul.mubr.f32.gmra.mrb[0].mxu0 %v584
      %v1883 = vpop.f32.mrb[0].mxu0
      %v1884 = vadd.f32 %v1659, %v1883
      %v1885 = vpop.f32.mrb[0].mxu0
      %1886 = vmatprep.mubr.f32.mxu0 0.0
      %1887 = vmatmul.mubr.f32.gmra.mrb[0].mxu0 %v586
      %v1888 = vpop.f32.mrb[0].mxu0
      %v1889 = vadd.f32 %v1664, %v1888
      %v1890 = vpop.f32.mrb[0].mxu0
      %1891 = vmatprep.mubr.f32.mxu0 0.0
      %1892 = vmatmul.mubr.f32.gmra.mrb[0].mxu0 %v589
      %v1893 = vpop.f32.mrb[0].mxu0
      %v1894 = vadd.f32 %v1669, %v1893
      %v1895 = vpop.f32.mrb[0].mxu0
      %1896 = vmatprep.mubr.f32.mxu0 0.0
      %1897 = vmatmul.mubr.f32.gmra.mrb[0].mxu0 %v591
      %v1898 = vpop.f32.mrb[0].mxu0
      %v1899 = vadd.f32 %v1674, %v1898
      %v1900 = vpop.f32.mrb[0].mxu0
      %1901 = vmatprep.mubr.f32.mxu0 0.0
      %1902 = vmatmul.mubr.f32.gmra.mrb[0].mxu0 %v594
      %v1903 = vpop.f32.mrb[0].mxu0
      %v1904 = vadd.f32 %v1679, %v1903
      %v1905 = vpop.f32.mrb[0].mxu0
      %1906 = vmatprep.mubr.f32.mxu0 0.0
      %1907 = vmatmul.mubr.f32.gmra.mrb[0].mxu0 %v596
      %v1908 = vpop.f32.mrb[0].mxu0
      %v1909 = vadd.f32 %v1684, %v1908
      %v1910 = vpop.f32.mrb[0].mxu0
      %1911 = vmatprep.mubr.f32.mxu0 0.0
      %1912 = vmatmul.mubr.f32.gmra.mrb[0].mxu0 %v641
      %v1913 = vpop.f32.mrb[0].mxu0
      %v1914 = vadd.f32 %v1689, %v1913
      %v1915 = vpop.f32.mrb[0].mxu0
      %1916 = vmatprep.mubr.f32.mxu0 0.0
      %1917 = vmatmul.mubr.f32.gmra.mrb[0].mxu0 %v643
      %v1918 = vpop.f32.mrb[0].mxu0
      %v1919 = vadd.f32 %v1694, %v1918
      %v1920 = vpop.f32.mrb[0].mxu0
      %1921 = vmatprep.mubr.f32.mxu0 0.0
      %1922 = vmatmul.mubr.f32.gmra.mrb[0].mxu0 %v658
      %v1923 = vpop.f32.mrb[0].mxu0
      %v1924 = vadd.f32 %v1699, %v1923
      %v1925 = vpop.f32.mrb[0].mxu0
      %1926 = vmatprep.mubr.f32.mxu0 0.0
      %1927 = vmatmul.mubr.f32.gmra.mrb[0].mxu0 %v660
      %v1928 = vpop.f32.mrb[0].mxu0
      %v1929 = vadd.f32 %v1704, %v1928
      %v1930 = vpop.f32.mrb[0].mxu0
      %1931 = vdwg.mxu0
      %v1932 = vadd.f32 %v1774, %v1779
      %v1933 = vadd.f32 %v1932, %v1784
      %v1934 = vadd.f32 %v1933, %v1789
      %v1935 = vadd.f32 %v1934, %v1794
      %v1936 = vadd.f32 %v1935, %v1799
      %v1937 = vadd.f32 %v1936, %v1804
      %v1938 = vadd.f32 %v1937, %v1809
      %v1939 = vadd.f32 %v1938, %v1814
      %v1940 = vadd.f32 %v1939, %v1819
      %v1941 = vadd.f32 %v1940, %v1824
      %v1942 = vadd.f32 %v1941, %v1829
      %v1943 = vadd.f32 %v1942, %v1834
      %v1944 = vadd.f32 %v1943, %v1839
      %v1945 = vadd.f32 %v1944, %v1844
      %v1946 = vadd.f32 %v1945, %v1849
      %v1947 = vadd.f32 %v1946, %v1854
      %v1948 = vadd.f32 %v1947, %v1859
      %v1949 = vadd.f32 %v1948, %v1864
      %v1950 = vadd.f32 %v1949, %v1869
      %v1951 = vadd.f32 %v1950, %v1874
      %v1952 = vadd.f32 %v1951, %v1879
      %v1953 = vadd.f32 %v1952, %v1884
      %v1954 = vadd.f32 %v1953, %v1889
      %v1955 = vadd.f32 %v1954, %v1894
      %v1956 = vadd.f32 %v1955, %v1899
      %v1957 = vadd.f32 %v1956, %v1904
      %v1958 = vadd.f32 %v1957, %v1909
      %v1959 = vadd.f32 %v1958, %v1914
      %v1960 = vadd.f32 %v1959, %v1919
      %v1961 = vadd.f32 %v1960, %v1924
      %v1962 = vadd.f32 %v1961, %v1929
      %v1963 = vrot.slane %v1962, 4
      %v1964 = vadd.f32 %v1962, %v1963
      %v1965 = vrot.slane %v1964, 2
      %v1966 = vadd.f32 %v1964, %v1965
      %v1967 = vrot.slane %v1966, 1
      %v1968 = vadd.f32 %v1966, %v1967
      %v1969 = vmul.f32 %v1968, 0.00390625
      %v1970 = vsub.f32 %v1774, %v1969
      %v1971 = vsub.f32 %v1779, %v1969
      %v1972 = vsub.f32 %v1784, %v1969
      %v1973 = vsub.f32 %v1789, %v1969
      %v1974 = vsub.f32 %v1794, %v1969
      %v1975 = vsub.f32 %v1799, %v1969
      %v1976 = vsub.f32 %v1804, %v1969
      %v1977 = vsub.f32 %v1809, %v1969
      %v1978 = vsub.f32 %v1814, %v1969
      %v1979 = vsub.f32 %v1819, %v1969
      %v1980 = vsub.f32 %v1824, %v1969
      %v1981 = vsub.f32 %v1829, %v1969
      %v1982 = vsub.f32 %v1834, %v1969
      %v1983 = vsub.f32 %v1839, %v1969
      %v1984 = vsub.f32 %v1844, %v1969
      %v1985 = vsub.f32 %v1849, %v1969
      %v1986 = vsub.f32 %v1854, %v1969
      %v1987 = vsub.f32 %v1859, %v1969
      %v1988 = vsub.f32 %v1864, %v1969
      %v1989 = vsub.f32 %v1869, %v1969
      %v1990 = vsub.f32 %v1874, %v1969
      %v1991 = vsub.f32 %v1879, %v1969
      %v1992 = vsub.f32 %v1884, %v1969
      %v1993 = vsub.f32 %v1889, %v1969
      %v1994 = vsub.f32 %v1894, %v1969
      %v1995 = vsub.f32 %v1899, %v1969
      %v1996 = vsub.f32 %v1904, %v1969
      %v1997 = vsub.f32 %v1909, %v1969
      %v1998 = vsub.f32 %v1914, %v1969
      %v1999 = vsub.f32 %v1919, %v1969
      %v2000 = vsub.f32 %v1924, %v1969
      %v2001 = vsub.f32 %v1929, %v1969
      %v2002 = vmul.f32 %v1970, %v1970
      %v2003 = vmul.f32 %v1971, %v1971
      %v2004 = vmul.f32 %v1972, %v1972
      %v2005 = vmul.f32 %v1973, %v1973
      %v2006 = vmul.f32 %v1974, %v1974
      %v2007 = vmul.f32 %v1975, %v1975
      %v2008 = vmul.f32 %v1976, %v1976
      %v2009 = vmul.f32 %v1977, %v1977
      %v2010 = vmul.f32 %v1978, %v1978
      %v2011 = vmul.f32 %v1979, %v1979
      %v2012 = vmul.f32 %v1980, %v1980
      %v2013 = vmul.f32 %v1981, %v1981
      %v2014 = vmul.f32 %v1982, %v1982
      %v2015 = vmul.f32 %v1983, %v1983
      %v2016 = vmul.f32 %v1984, %v1984
      %v2017 = vmul.f32 %v1985, %v1985
      %v2018 = vmul.f32 %v1986, %v1986
      %v2019 = vmul.f32 %v1987, %v1987
      %v2020 = vmul.f32 %v1988, %v1988
      %v2021 = vmul.f32 %v1989, %v1989
      %v2022 = vmul.f32 %v1990, %v1990
      %v2023 = vmul.f32 %v1991, %v1991
      %v2024 = vmul.f32 %v1992, %v1992
      %v2025 = vmul.f32 %v1993, %v1993
      %v2026 = vmul.f32 %v1994, %v1994
      %v2027 = vmul.f32 %v1995, %v1995
      %v2028 = vmul.f32 %v1996, %v1996
      %v2029 = vmul.f32 %v1997, %v1997
      %v2030 = vmul.f32 %v1998, %v1998
      %v2031 = vmul.f32 %v1999, %v1999
      %v2032 = vmul.f32 %v2000, %v2000
      %v2033 = vmul.f32 %v2001, %v2001
      %v2034 = vadd.f32 %v2002, %v2003
      %v2035 = vadd.f32 %v2034, %v2004
      %v2036 = vadd.f32 %v2035, %v2005
      %v2037 = vadd.f32 %v2036, %v2006
      %v2038 = vadd.f32 %v2037, %v2007
      %v2039 = vadd.f32 %v2038, %v2008
      %v2040 = vadd.f32 %v2039, %v2009
      %v2041 = vadd.f32 %v2040, %v2010
      %v2042 = vadd.f32 %v2041, %v2011
      %v2043 = vadd.f32 %v2042, %v2012
      %v2044 = vadd.f32 %v2043, %v2013
      %v2045 = vadd.f32 %v2044, %v2014
      %v2046 = vadd.f32 %v2045, %v2015
      %v2047 = vadd.f32 %v2046, %v2016
      %v2048 = vadd.f32 %v2047, %v2017
      %v2049 = vadd.f32 %v2048, %v2018
      %v2050 = vadd.f32 %v2049, %v2019
      %v2051 = vadd.f32 %v2050, %v2020
      %v2052 = vadd.f32 %v2051, %v2021
      %v2053 = vadd.f32 %v2052, %v2022
      %v2054 = vadd.f32 %v2053, %v2023
      %v2055 = vadd.f32 %v2054, %v2024
      %v2056 = vadd.f32 %v2055, %v2025
      %v2057 = vadd.f32 %v2056, %v2026
      %v2058 = vadd.f32 %v2057, %v2027
      %v2059 = vadd.f32 %v2058, %v2028
      %v2060 = vadd.f32 %v2059, %v2029
      %v2061 = vadd.f32 %v2060, %v2030
      %v2062 = vadd.f32 %v2061, %v2031
      %v2063 = vadd.f32 %v2062, %v2032
      %v2064 = vadd.f32 %v2063, %v2033
      %v2065 = vrot.slane %v2064, 4
      %v2066 = vadd.f32 %v2064, %v2065
      %v2067 = vrot.slane %v2066, 2
      %v2068 = vadd.f32 %v2066, %v2067
      %v2069 = vrot.slane %v2068, 1
      %v2070 = vadd.f32 %v2068, %v2069
      %2071 = vst [vmem:[%s181] sm:$0x1] %v1969
      %2072 = vst [vmem:[%s181 + $0x1] sm:$0x1] %v2070
      %2073 = vst [vmem:[%s177] sm:$0xff] %v1774
      %2074 = vst [vmem:[%s177 + $0x8] sm:$0xff] %v1779
      %2075 = vst [vmem:[%s177 + $0x10] sm:$0xff] %v1784
      %2076 = vst [vmem:[%s177 + $0x18] sm:$0xff] %v1789
      %2077 = vst [vmem:[%s177 + $0x20] sm:$0xff] %v1794
      %2078 = vst [vmem:[%s177 + $0x28] sm:$0xff] %v1799
      %2079 = vst [vmem:[%s177 + $0x30] sm:$0xff] %v1804
      %2080 = vst [vmem:[%s177 + $0x38] sm:$0xff] %v1809
      %2081 = vst [vmem:[%s177 + $0x40] sm:$0xff] %v1814
      %2082 = vst [vmem:[%s177 + $0x48] sm:$0xff] %v1819
      %2083 = vst [vmem:[%s177 + $0x50] sm:$0xff] %v1824
      %2084 = vst [vmem:[%s177 + $0x58] sm:$0xff] %v1829
      %2085 = vst [vmem:[%s177 + $0x60] sm:$0xff] %v1834
      %2086 = vst [vmem:[%s177 + $0x68] sm:$0xff] %v1839
      %2087 = vst [vmem:[%s177 + $0x70] sm:$0xff] %v1844
      %2088 = vst [vmem:[%s177 + $0x78] sm:$0xff] %v1849
      %2089 = vst [vmem:[%s177 + $0x80] sm:$0xff] %v1854
      %2090 = vst [vmem:[%s177 + $0x88] sm:$0xff] %v1859
      %2091 = vst [vmem:[%s177 + $0x90] sm:$0xff] %v1864
      %2092 = vst [vmem:[%s177 + $0x98] sm:$0xff] %v1869
      %2093 = vst [vmem:[%s177 + $0xa0] sm:$0xff] %v1874
      %2094 = vst [vmem:[%s177 + $0xa8] sm:$0xff] %v1879
      %2095 = vst [vmem:[%s177 + $0xb0] sm:$0xff] %v1884
      %2096 = vst [vmem:[%s177 + $0xb8] sm:$0xff] %v1889
      %2097 = vst [vmem:[%s177 + $0xc0] sm:$0xff] %v1894
      %2098 = vst [vmem:[%s177 + $0xc8] sm:$0xff] %v1899
      %2099 = vst [vmem:[%s177 + $0xd0] sm:$0xff] %v1904
      %2100 = vst [vmem:[%s177 + $0xd8] sm:$0xff] %v1909
      %2101 = vst [vmem:[%s177 + $0xe0] sm:$0xff] %v1914
      %2102 = vst [vmem:[%s177 + $0xe8] sm:$0xff] %v1919
      %2103 = vst [vmem:[%s177 + $0xf0] sm:$0xff] %v1924
      %2104 = vst [vmem:[%s177 + $0xf8] sm:$0xff] %v1929
      %p2105 = scmp.lt.s32.totalorder %s15, 1
      %s2106 = scalar_select %p2105, %s15, 1
      %s2107 = smul.addr %s2106, 32
      %s2108 = smul.addr %s2107, 8
      %s2109 = scalar_lea.vmem %s2, %s2108
      %p2110 = scmp.lt.s32.totalorder %s15, 1
      %s2111 = scalar_select %p2110, %s15, 1
      %s2112 = smul.addr %s2111, 2
      %s2113 = scalar_lea.vmem %s3, %s2112
      // Predicated region
      $region29: #{res_block_forward.3} parent=27 // pred_check
        %p2114 = pneg %p80
      $region30: #{res_block_forward.3} parent=27 // pred_check_branch
        %2116 = sbr.rel (%p2114) target = $region32
      $region31: #{res_block_forward.3} parent=27 // pred_region
        _
      $region32: #{res_block_forward.3} parent=27 // pred_fallthru
        _
      // Predicated region
      $region33: #{res_block_forward.3} parent=27 // pred_check
        %p2117 = pneg %p106
      $region34: #{res_block_forward.3} parent=27 // pred_check_branch
        %2119 = sbr.rel (%p2117) target = $region36
      $region35: #{res_block_forward.3} parent=27 // pred_region
        _
      $region36: #{res_block_forward.3} parent=27 // pred_fallthru
        _
    $region28: #{res_block_forward.3} parent=5 // pred_fallthru
      _
    %p2120 = scmp.le.s32.totalorder 2, %s10
    // Predicated region
    $region37: #{res_block_forward.3} parent=5 // pred_check
      %p2121 = pneg %p2120
    $region38: #{res_block_forward.3} parent=5 // pred_check_branch
      %2123 = sbr.rel (%p2121) target = $region40
    $region39: #{res_block_forward.3} parent=5 // pred_region
      %s2124 = ssub.s32 %s10, 2
      // Predicated region
      $region41: #{res_block_forward.3} parent=39 // pred_check
        %p2125 = pneg %p86
      $region42: #{res_block_forward.3} parent=39 // pred_check_branch
        %2127 = sbr.rel (%p2125) target = $region44
      $region43: #{res_block_forward.3} parent=39 // pred_region
        %p2128 = scmp.lt.s32.totalorder %s16, 1
        %s2129 = scalar_select %p2128, %s16, 1
        %s2130 = smul.addr %s2129, 32
        %s2131 = smul.addr %s2130, 8
        %s2132 = scalar_lea.vmem %s2, %s2131
      $region44: #{res_block_forward.3} parent=39 // pred_fallthru
        _
      // Predicated region
      $region45: #{res_block_forward.3} parent=39 // pred_check
        %p2133 = pneg %p112
      $region46: #{res_block_forward.3} parent=39 // pred_check_branch
        %2135 = sbr.rel (%p2133) target = $region48
      $region47: #{res_block_forward.3} parent=39 // pred_region
        %p2136 = scmp.lt.s32.totalorder %s16, 1
        %s2137 = scalar_select %p2136, %s16, 1
        %s2138 = smul.addr %s2137, 2
        %s2139 = scalar_lea.vmem %s3, %s2138
      $region48: #{res_block_forward.3} parent=39 // pred_fallthru
        _
    $region40: #{res_block_forward.3} parent=5 // pred_fallthru
      _
  $region6: #{res_block_forward.3} parent=0 // loop_footer
    %s14 = sadd.s32 1, %s10
  $region7: #{res_block_forward.3} parent=0 // loop_footer_branch
    %9 = sbr.rel target = $region3
  $region8: #{res_block_forward.3} parent=0 // loop_exit
    _

// kernel: res_block_forward.4
$region0: #{res_block_forward.4}
  #allocation0 [shape = 'u32[]', space=smem, size = 0x4, offset = 0x4, fixed_abs, tag = 'smem constant byte address 0x4 - core index']
  #allocation1 [shape = 'u32[144,128]{1,0:T(1,128)}', space=vmem, size = 0x12000, scoped, tag = 'internal scratch']
  #allocation2 [shape = 'f32[18,18,128]{2,1,0:T(8,128)}', space=vmem, size = 0x36000, scoped, tag = 'scratch operand']
  %s0 = inlined_call_operand.vmem [shape: f32[2,16,16,128], index: 0, kind: input, shape index: {}]
  %s1 = inlined_call_operand.vmem [shape: f32[1,128], index: 1, kind: input, shape index: {}]
  %s2 = inlined_call_operand.vmem [shape: f32[1,128], index: 2, kind: input, shape index: {}]
  %s3 = inlined_call_operand.vmem [shape: f32[1152,128], index: 3, kind: input, shape index: {}]
  %s4 = inlined_call_operand.vmem [shape: f32[2,256,128], index: 4, kind: output, shape index: {0}]
  %s5 = inlined_call_operand.vmem [shape: f32[2,2,128], index: 5, kind: output, shape index: {1}]
  %6 = xla_tuple %s4, %s5
  %s7 = sld [smem:[#allocation0]]
  $region57: #{res_block_forward.4} parent=0
    _
  %s9 = ssub.s32 1, %s7
  %s10 = scalar_select 0, %s9, %s7
  loop: start=0, step=1, limit=4
  $region2: #{res_block_forward.4} parent=0 // loop_pre_header
    _
  $region3: #{res_block_forward.4} parent=0 // loop_header
    %s12 = sphi 0, %s16
    %p13 = scmp.ge.s32.totalorder %s12, 4
    %s22 = sphi 0, %s24
    %s25 = sphi 0, %s22
    %s26 = sphi 0, %s25
    %s42 = sphi 0, %s26
    %s46 = sphi 0, %s46
    %s48 = sphi 0, %s46
    %s49 = sphi 0, %s48
    %s63 = sphi 0, %s49
    %s67 = sphi 0, %s67
    %s69 = sphi 0, %s67
    %s70 = sphi 0, %s69
    %s84 = sphi 0, %s70
    %s88 = sphi 0, %s88
    %s90 = sphi 0, %s88
    %s91 = sphi 0, %s90
    %s105 = sphi 0, %s91
    %s111 = sphi 0, %s113
    %s114 = sphi 0, %s111
    %s115 = sphi 0, %s114
    %s131 = sphi 0, %s115
    %s137 = sphi 0, %s139
    %s140 = sphi 0, %s137
    %s141 = sphi 0, %s140
    %s157 = sphi 0, %s141
  $region4: #{res_block_forward.4} parent=0 // loop_header_branch
    %15 = sbr.rel (%p13) target = $region8
  $region5: #{res_block_forward.4} parent=0 // loop_body
    %s17 = ssub.s32 %s12, 1
    %s18 = ssub.s32 %s12, 2
    %s19 = sadd.s32 %s12, 1
    %s20 = ssub.s32 %s12, %s19
    %p21 = scmp.eq.s32.totalorder %s20, 0
    %s23 = sadd.s32 %s22, 1
    %s24 = scalar_select %p21, %s22, %s23
    %p27 = pneg %p21
    %p28 = scmp.eq.s32.totalorder %s12, 1
    %p29 = por %p27, %p28
    %p30 = scmp.ne.s32.totalorder %s22, %s25
    %p31 = scmp.eq.s32.totalorder %s12, 0
    %p32 = por %p30, %p31
    %p33 = scmp.ne.s32.totalorder %s22, %s25
    %p34 = scmp.eq.s32.totalorder %s17, 1
    %p35 = por %p33, %p34
    %p36 = scmp.ne.s32.totalorder %s25, %s26
    %p37 = scmp.eq.s32.totalorder %s17, 0
    %p38 = por %p36, %p37
    %p39 = scmp.ne.s32.totalorder %s25, %s26
    %p40 = scmp.eq.s32.totalorder %s18, 1
    %p41 = por %p39, %p40
    %p43 = scmp.ne.s32.totalorder %s26, %s42
    %p44 = scmp.eq.s32.totalorder %s18, 0
    %p45 = por %p43, %p44
    %s47 = sadd.s32 %s46, 1
    %p50 = scmp.eq.s32.totalorder %s12, 1
    %p51 = scmp.ne.s32.totalorder %s46, %s48
    %p52 = scmp.eq.s32.totalorder %s12, 0
    %p53 = por %p51, %p52
    %p54 = scmp.ne.s32.totalorder %s46, %s48
    %p55 = scmp.eq.s32.totalorder %s17, 1
    %p56 = por %p54, %p55
    %p57 = scmp.ne.s32.totalorder %s48, %s49
    %p58 = scmp.eq.s32.totalorder %s17, 0
    %p59 = por %p57, %p58
    %p60 = scmp.ne.s32.totalorder %s48, %s49
    %p61 = scmp.eq.s32.totalorder %s18, 1
    %p62 = por %p60, %p61
    %p64 = scmp.ne.s32.totalorder %s49, %s63
    %p65 = scmp.eq.s32.totalorder %s18, 0
    %p66 = por %p64, %p65
    %s68 = sadd.s32 %s67, 1
    %p71 = scmp.eq.s32.totalorder %s12, 1
    %p72 = scmp.ne.s32.totalorder %s67, %s69
    %p73 = scmp.eq.s32.totalorder %s12, 0
    %p74 = por %p72, %p73
    %p75 = scmp.ne.s32.totalorder %s67, %s69
    %p76 = scmp.eq.s32.totalorder %s17, 1
    %p77 = por %p75, %p76
    %p78 = scmp.ne.s32.totalorder %s69, %s70
    %p79 = scmp.eq.s32.totalorder %s17, 0
    %p80 = por %p78, %p79
    %p81 = scmp.ne.s32.totalorder %s69, %s70
    %p82 = scmp.eq.s32.totalorder %s18, 1
    %p83 = por %p81, %p82
    %p85 = scmp.ne.s32.totalorder %s70, %s84
    %p86 = scmp.eq.s32.totalorder %s18, 0
    %p87 = por %p85, %p86
    %s89 = sadd.s32 %s88, 1
    %p92 = scmp.eq.s32.totalorder %s12, 1
    %p93 = scmp.ne.s32.totalorder %s88, %s90
    %p94 = scmp.eq.s32.totalorder %s12, 0
    %p95 = por %p93, %p94
    %p96 = scmp.ne.s32.totalorder %s88, %s90
    %p97 = scmp.eq.s32.totalorder %s17, 1
    %p98 = por %p96, %p97
    %p99 = scmp.ne.s32.totalorder %s90, %s91
    %p100 = scmp.eq.s32.totalorder %s17, 0
    %p101 = por %p99, %p100
    %p102 = scmp.ne.s32.totalorder %s90, %s91
    %p103 = scmp.eq.s32.totalorder %s18, 1
    %p104 = por %p102, %p103
    %p106 = scmp.ne.s32.totalorder %s91, %s105
    %p107 = scmp.eq.s32.totalorder %s18, 0
    %p108 = por %p106, %p107
    %s109 = ssub.s32 %s12, %s19
    %p110 = scmp.eq.s32.totalorder %s109, 0
    %s112 = sadd.s32 %s111, 1
    %s113 = scalar_select %p110, %s111, %s112
    %p116 = pneg %p110
    %p117 = scmp.eq.s32.totalorder %s12, 1
    %p118 = por %p116, %p117
    %p119 = scmp.ne.s32.totalorder %s111, %s114
    %p120 = scmp.eq.s32.totalorder %s12, 0
    %p121 = por %p119, %p120
    %p122 = scmp.ne.s32.totalorder %s111, %s114
    %p123 = scmp.eq.s32.totalorder %s17, 1
    %p124 = por %p122, %p123
    %p125 = scmp.ne.s32.totalorder %s114, %s115
    %p126 = scmp.eq.s32.totalorder %s17, 0
    %p127 = por %p125, %p126
    %p128 = scmp.ne.s32.totalorder %s114, %s115
    %p129 = scmp.eq.s32.totalorder %s18, 1
    %p130 = por %p128, %p129
    %p132 = scmp.ne.s32.totalorder %s115, %s131
    %p133 = scmp.eq.s32.totalorder %s18, 0
    %p134 = por %p132, %p133
    %s135 = ssub.s32 %s12, %s19
    %p136 = scmp.eq.s32.totalorder %s135, 0
    %s138 = sadd.s32 %s137, 1
    %s139 = scalar_select %p136, %s137, %s138
    %p142 = pneg %p136
    %p143 = scmp.eq.s32.totalorder %s12, 1
    %p144 = por %p142, %p143
    %p145 = scmp.ne.s32.totalorder %s137, %s140
    %p146 = scmp.eq.s32.totalorder %s12, 0
    %p147 = por %p145, %p146
    %p148 = scmp.ne.s32.totalorder %s137, %s140
    %p149 = scmp.eq.s32.totalorder %s17, 1
    %p150 = por %p148, %p149
    %p151 = scmp.ne.s32.totalorder %s140, %s141
    %p152 = scmp.eq.s32.totalorder %s17, 0
    %p153 = por %p151, %p152
    %p154 = scmp.ne.s32.totalorder %s140, %s141
    %p155 = scmp.eq.s32.totalorder %s18, 1
    %p156 = por %p154, %p155
    %p158 = scmp.ne.s32.totalorder %s141, %s157
    %p159 = scmp.eq.s32.totalorder %s18, 0
    %p160 = por %p158, %p159
    %p161 = scmp.le.s32.totalorder 1, %s12
    %p162 = scmp.lt.s32.totalorder %s12, 3
    %p163 = pnand %p161, %p162
    %p164 = pneg %p163
    // Predicated region
    $region9: #{res_block_forward.4} parent=5 // pred_check
      _
    $region10: #{res_block_forward.4} parent=5 // pred_check_branch
      %166 = sbr.rel (%p163) target = $region12
    $region11: #{res_block_forward.4} parent=5 // pred_region
      %s167 = ssub.s32 %s12, 1
      // Predicated region
      $region13: #{res_block_forward.4} parent=11 // pred_check
        %p168 = pneg %p59
      $region14: #{res_block_forward.4} parent=11 // pred_check_branch
        %170 = sbr.rel (%p168) target = $region16
      $region15: #{res_block_forward.4} parent=11 // pred_region
        _
      $region16: #{res_block_forward.4} parent=11 // pred_fallthru
        _
      // Predicated region
      $region17: #{res_block_forward.4} parent=11 // pred_check
        %p171 = pneg %p80
      $region18: #{res_block_forward.4} parent=11 // pred_check_branch
        %173 = sbr.rel (%p171) target = $region20
      $region19: #{res_block_forward.4} parent=11 // pred_region
        _
      $region20: #{res_block_forward.4} parent=11 // pred_fallthru
        _
      // Predicated region
      $region21: #{res_block_forward.4} parent=11 // pred_check
        %p174 = pneg %p101
      $region22: #{res_block_forward.4} parent=11 // pred_check_branch
        %176 = sbr.rel (%p174) target = $region24
      $region23: #{res_block_forward.4} parent=11 // pred_region
        _
      $region24: #{res_block_forward.4} parent=11 // pred_fallthru
        _
    $region12: #{res_block_forward.4} parent=5 // pred_fallthru
      _
    %p177 = scmp.lt.s32.totalorder %s12, 2
    // Predicated region
    $region25: #{res_block_forward.4} parent=5 // pred_check
      %p178 = pneg %p177
    $region26: #{res_block_forward.4} parent=5 // pred_check_branch
      %180 = sbr.rel (%p178) target = $region28
    $region27: #{res_block_forward.4} parent=5 // pred_region
      // Predicated region
      $region29: #{res_block_forward.4} parent=27 // pred_check
        %p181 = pneg %p32
      $region30: #{res_block_forward.4} parent=27 // pred_check_branch
        %183 = sbr.rel (%p181) target = $region32
      $region31: #{res_block_forward.4} parent=27 // pred_region
        %p184 = scmp.lt.s32.totalorder %s12, 1
        %s185 = scalar_select %p184, %s12, 1
        %s186 = smul.addr %s185, 32
        %s187 = smul.addr %s186, 8
        %s188 = scalar_lea.vmem %s0, %s187
      $region32: #{res_block_forward.4} parent=27 // pred_fallthru
        _
    $region28: #{res_block_forward.4} parent=5 // pred_fallthru
      _
    %p189 = scmp.le.s32.totalorder 1, %s12
    %p190 = scmp.lt.s32.totalorder %s12, 3
    %p191 = pnand %p189, %p190
    %p192 = pneg %p191
    // Predicated region
    $region33: #{res_block_forward.4} parent=5 // pred_check
      _
    $region34: #{res_block_forward.4} parent=5 // pred_check_branch
      %194 = sbr.rel (%p191) target = $region36
    $region35: #{res_block_forward.4} parent=5 // pred_region
      %s195 = ssub.s32 %s12, 1
      %p196 = scmp.lt.s32.totalorder %s17, 1
      %s197 = scalar_select %p196, %s17, 1
      %s198 = smul.addr %s197, 32
      %s199 = smul.addr %s198, 8
      %s200 = scalar_lea.vmem %s0, %s199
      %p201 = pneg %p38
      %p202 = pneg %p35
      %p203 = pneg %p59
      %p204 = pneg %p56
      %p205 = pneg %p80
      %p206 = pneg %p77
      %p207 = pneg %p101
      %p208 = pneg %p98
      %p209 = pneg %p127
      %p210 = pneg %p124
      %p211 = scmp.lt.s32.totalorder %s17, 1
      %s212 = scalar_select %p211, %s17, 1
      %s213 = smul.addr %s212, 32
      %s214 = smul.addr %s213, 8
      %s215 = scalar_lea.vmem %s4, %s214
      %p216 = pneg %p153
      %p217 = pneg %p150
      %p218 = scmp.lt.s32.totalorder %s17, 1
      %s219 = scalar_select %p218, %s17, 1
      %s220 = smul.addr %s219, 2
      %s221 = scalar_lea.vmem %s5, %s220
      %p222 = scmp.lt.s32.totalorder %s17, 1
      %s223 = scalar_select %p222, %s17, 1
      %s224 = smul.addr %s223, 32
      %s225 = smul.addr %s224, 8
      %s226 = scalar_lea.vmem %s0, %s225
      %p227 = scmp.lt.s32.totalorder %s17, 1
      %s228 = scalar_select %p227, %s17, 1
      %s229 = smul.addr %s228, 32
      %s230 = smul.addr %s229, 8
      %s231 = scalar_lea.vmem %s4, %s230
      %p232 = scmp.lt.s32.totalorder %s17, 1
      %s233 = scalar_select %p232, %s17, 1
      %s234 = smul.addr %s233, 2
      %s235 = scalar_lea.vmem %s5, %s234
      %v236 = vld [vmem:[%s226] sm:$0xff]
      %v237 = vld [vmem:[%s226 + $0x8] sm:$0xff]
      %v238 = vld [vmem:[%s226 + $0x10] sm:$0xff]
      %v239 = vld [vmem:[%s226 + $0x18] sm:$0xff]
      %v240 = vld [vmem:[%s226 + $0x20] sm:$0xff]
      %v241 = vld [vmem:[%s226 + $0x28] sm:$0xff]
      %v242 = vld [vmem:[%s226 + $0x30] sm:$0xff]
      %v243 = vld [vmem:[%s226 + $0x38] sm:$0xff]
      %v244 = vld [vmem:[%s226 + $0x40] sm:$0xff]
      %v245 = vld [vmem:[%s226 + $0x48] sm:$0xff]
      %v246 = vld [vmem:[%s226 + $0x50] sm:$0xff]
      %v247 = vld [vmem:[%s226 + $0x58] sm:$0xff]
      %v248 = vld [vmem:[%s226 + $0x60] sm:$0xff]
      %v249 = vld [vmem:[%s226 + $0x68] sm:$0xff]
      %v250 = vld [vmem:[%s226 + $0x70] sm:$0xff]
      %v251 = vld [vmem:[%s226 + $0x78] sm:$0xff]
      %v252 = vld [vmem:[%s226 + $0x80] sm:$0xff]
      %v253 = vld [vmem:[%s226 + $0x88] sm:$0xff]
      %v254 = vld [vmem:[%s226 + $0x90] sm:$0xff]
      %v255 = vld [vmem:[%s226 + $0x98] sm:$0xff]
      %v256 = vld [vmem:[%s226 + $0xa0] sm:$0xff]
      %v257 = vld [vmem:[%s226 + $0xa8] sm:$0xff]
      %v258 = vld [vmem:[%s226 + $0xb0] sm:$0xff]
      %v259 = vld [vmem:[%s226 + $0xb8] sm:$0xff]
      %v260 = vld [vmem:[%s226 + $0xc0] sm:$0xff]
      %v261 = vld [vmem:[%s226 + $0xc8] sm:$0xff]
      %v262 = vld [vmem:[%s226 + $0xd0] sm:$0xff]
      %v263 = vld [vmem:[%s226 + $0xd8] sm:$0xff]
      %v264 = vld [vmem:[%s226 + $0xe0] sm:$0xff]
      %v265 = vld [vmem:[%s226 + $0xe8] sm:$0xff]
      %v266 = vld [vmem:[%s226 + $0xf0] sm:$0xff]
      %v267 = vld [vmem:[%s226 + $0xf8] sm:$0xff]
      %v268 = vld [vmem:[%s1] sm:$0x1]
      %v269 = vld [vmem:[%s2] sm:$0x1]
      %v271 = vlaneseq
      %v272 = vshrl.u32 %v271, 7
      %v273 = vsub.s32 0, %v272
      %v274 = vrot.slane %v268, %v273
      %v276 = vmul.f32 %v236, %v274
      %v277 = vmul.f32 %v237, %v274
      %v278 = vmul.f32 %v238, %v274
      %v279 = vmul.f32 %v239, %v274
      %v280 = vmul.f32 %v240, %v274
      %v281 = vmul.f32 %v241, %v274
      %v282 = vmul.f32 %v242, %v274
      %v283 = vmul.f32 %v243, %v274
      %v284 = vmul.f32 %v244, %v274
      %v285 = vmul.f32 %v245, %v274
      %v286 = vmul.f32 %v246, %v274
      %v287 = vmul.f32 %v247, %v274
      %v288 = vmul.f32 %v248, %v274
      %v289 = vmul.f32 %v249, %v274
      %v290 = vmul.f32 %v250, %v274
      %v291 = vmul.f32 %v251, %v274
      %v292 = vmul.f32 %v252, %v274
      %v293 = vmul.f32 %v253, %v274
      %v294 = vmul.f32 %v254, %v274
      %v295 = vmul.f32 %v255, %v274
      %v296 = vmul.f32 %v256, %v274
      %v297 = vmul.f32 %v257, %v274
      %v298 = vmul.f32 %v258, %v274
      %v299 = vmul.f32 %v259, %v274
      %v300 = vmul.f32 %v260, %v274
      %v301 = vmul.f32 %v261, %v274
      %v302 = vmul.f32 %v262, %v274
      %v303 = vmul.f32 %v263, %v274
      %v304 = vmul.f32 %v264, %v274
      %v305 = vmul.f32 %v265, %v274
      %v306 = vmul.f32 %v266, %v274
      %v307 = vmul.f32 %v267, %v274
      %v309 = vlaneseq
      %v310 = vshrl.u32 %v309, 7
      %v311 = vsub.s32 0, %v310
      %v312 = vrot.slane %v269, %v311
      %v314 = vadd.f32 %v276, %v312
      %v315 = vadd.f32 %v277, %v312
      %v316 = vadd.f32 %v278, %v312
      %v317 = vadd.f32 %v279, %v312
      %v318 = vadd.f32 %v280, %v312
      %v319 = vadd.f32 %v281, %v312
      %v320 = vadd.f32 %v282, %v312
      %v321 = vadd.f32 %v283, %v312
      %v322 = vadd.f32 %v284, %v312
      %v323 = vadd.f32 %v285, %v312
      %v324 = vadd.f32 %v286, %v312
      %v325 = vadd.f32 %v287, %v312
      %v326 = vadd.f32 %v288, %v312
      %v327 = vadd.f32 %v289, %v312
      %v328 = vadd.f32 %v290, %v312
      %v329 = vadd.f32 %v291, %v312
      %v330 = vadd.f32 %v292, %v312
      %v331 = vadd.f32 %v293, %v312
      %v332 = vadd.f32 %v294, %v312
      %v333 = vadd.f32 %v295, %v312
      %v334 = vadd.f32 %v296, %v312
      %v335 = vadd.f32 %v297, %v312
      %v336 = vadd.f32 %v298, %v312
      %v337 = vadd.f32 %v299, %v312
      %v338 = vadd.f32 %v300, %v312
      %v339 = vadd.f32 %v301, %v312
      %v340 = vadd.f32 %v302, %v312
      %v341 = vadd.f32 %v303, %v312
      %v342 = vadd.f32 %v304, %v312
      %v343 = vadd.f32 %v305, %v312
      %v344 = vadd.f32 %v306, %v312
      %v345 = vadd.f32 %v307, %v312
      %v346 = vsub.f32 0.0, %v314
      %v347 = vsub.f32 0.0, %v315
      %v348 = vsub.f32 0.0, %v316
      %v349 = vsub.f32 0.0, %v317
      %v350 = vsub.f32 0.0, %v318
      %v351 = vsub.f32 0.0, %v319
      %v352 = vsub.f32 0.0, %v320
      %v353 = vsub.f32 0.0, %v321
      %v354 = vsub.f32 0.0, %v322
      %v355 = vsub.f32 0.0, %v323
      %v356 = vsub.f32 0.0, %v324
      %v357 = vsub.f32 0.0, %v325
      %v358 = vsub.f32 0.0, %v326
      %v359 = vsub.f32 0.0, %v327
      %v360 = vsub.f32 0.0, %v328
      %v361 = vsub.f32 0.0, %v329
      %v362 = vsub.f32 0.0, %v330
      %v363 = vsub.f32 0.0, %v331
      %v364 = vsub.f32 0.0, %v332
      %v365 = vsub.f32 0.0, %v333
      %v366 = vsub.f32 0.0, %v334
      %v367 = vsub.f32 0.0, %v335
      %v368 = vsub.f32 0.0, %v336
      %v369 = vsub.f32 0.0, %v337
      %v370 = vsub.f32 0.0, %v338
      %v371 = vsub.f32 0.0, %v339
      %v372 = vsub.f32 0.0, %v340
      %v373 = vsub.f32 0.0, %v341
      %v374 = vsub.f32 0.0, %v342
      %v375 = vsub.f32 0.0, %v343
      %v376 = vsub.f32 0.0, %v344
      %v377 = vsub.f32 0.0, %v345
      %v378 = vmul.f32 %v346, 1.442695
      %v379 = vpow.pop %v378
      %v380 = vmul.f32 %v347, 1.442695
      %v381 = vpow.pop %v380
      %v382 = vmul.f32 %v348, 1.442695
      %v383 = vpow.pop %v382
      %v384 = vmul.f32 %v349, 1.442695
      %v385 = vpow.pop %v384
      %v386 = vmul.f32 %v350, 1.442695
      %v387 = vpow.pop %v386
      %v388 = vmul.f32 %v351, 1.442695
      %v389 = vpow.pop %v388
      %v390 = vmul.f32 %v352, 1.442695
      %v391 = vpow.pop %v390
      %v392 = vmul.f32 %v353, 1.442695
      %v393 = vpow.pop %v392
      %v394 = vmul.f32 %v354, 1.442695
      %v395 = vpow.pop %v394
      %v396 = vmul.f32 %v355, 1.442695
      %v397 = vpow.pop %v396
      %v398 = vmul.f32 %v356, 1.442695
      %v399 = vpow.pop %v398
      %v400 = vmul.f32 %v357, 1.442695
      %v401 = vpow.pop %v400
      %v402 = vmul.f32 %v358, 1.442695
      %v403 = vpow.pop %v402
      %v404 = vmul.f32 %v359, 1.442695
      %v405 = vpow.pop %v404
      %v406 = vmul.f32 %v360, 1.442695
      %v407 = vpow.pop %v406
      %v408 = vmul.f32 %v361, 1.442695
      %v409 = vpow.pop %v408
      %v410 = vmul.f32 %v362, 1.442695
      %v411 = vpow.pop %v410
      %v412 = vmul.f32 %v363, 1.442695
      %v413 = vpow.pop %v412
      %v414 = vmul.f32 %v364, 1.442695
      %v415 = vpow.pop %v414
      %v416 = vmul.f32 %v365, 1.442695
      %v417 = vpow.pop %v416
      %v418 = vmul.f32 %v366, 1.442695
      %v419 = vpow.pop %v418
      %v420 = vmul.f32 %v367, 1.442695
      %v421 = vpow.pop %v420
      %v422 = vmul.f32 %v368, 1.442695
      %v423 = vpow.pop %v422
      %v424 = vmul.f32 %v369, 1.442695
      %v425 = vpow.pop %v424
      %v426 = vmul.f32 %v370, 1.442695
      %v427 = vpow.pop %v426
      %v428 = vmul.f32 %v371, 1.442695
      %v429 = vpow.pop %v428
      %v430 = vmul.f32 %v372, 1.442695
      %v431 = vpow.pop %v430
      %v432 = vmul.f32 %v373, 1.442695
      %v433 = vpow.pop %v432
      %v434 = vmul.f32 %v374, 1.442695
      %v435 = vpow.pop %v434
      %v436 = vmul.f32 %v375, 1.442695
      %v437 = vpow.pop %v436
      %v438 = vmul.f32 %v376, 1.442695
      %v439 = vpow.pop %v438
      %v440 = vmul.f32 %v377, 1.442695
      %v441 = vpow.pop %v440
      %v442 = vadd.f32 %v379, 1.0
      %v443 = vadd.f32 %v381, 1.0
      %v444 = vadd.f32 %v383, 1.0
      %v445 = vadd.f32 %v385, 1.0
      %v446 = vadd.f32 %v387, 1.0
      %v447 = vadd.f32 %v389, 1.0
      %v448 = vadd.f32 %v391, 1.0
      %v449 = vadd.f32 %v393, 1.0
      %v450 = vadd.f32 %v395, 1.0
      %v451 = vadd.f32 %v397, 1.0
      %v452 = vadd.f32 %v399, 1.0
      %v453 = vadd.f32 %v401, 1.0
      %v454 = vadd.f32 %v403, 1.0
      %v455 = vadd.f32 %v405, 1.0
      %v456 = vadd.f32 %v407, 1.0
      %v457 = vadd.f32 %v409, 1.0
      %v458 = vadd.f32 %v411, 1.0
      %v459 = vadd.f32 %v413, 1.0
      %v460 = vadd.f32 %v415, 1.0
      %v461 = vadd.f32 %v417, 1.0
      %v462 = vadd.f32 %v419, 1.0
      %v463 = vadd.f32 %v421, 1.0
      %v464 = vadd.f32 %v423, 1.0
      %v465 = vadd.f32 %v425, 1.0
      %v466 = vadd.f32 %v427, 1.0
      %v467 = vadd.f32 %v429, 1.0
      %v468 = vadd.f32 %v431, 1.0
      %v469 = vadd.f32 %v433, 1.0
      %v470 = vadd.f32 %v435, 1.0
      %v471 = vadd.f32 %v437, 1.0
      %v472 = vadd.f32 %v439, 1.0
      %v473 = vadd.f32 %v441, 1.0
      %v474 = vrcp.pop %v442
      %v475 = vrcp.pop %v443
      %v476 = vrcp.pop %v444
      %v477 = vrcp.pop %v445
      %v478 = vrcp.pop %v446
      %v479 = vrcp.pop %v447
      %v480 = vrcp.pop %v448
      %v481 = vrcp.pop %v449
      %v482 = vrcp.pop %v450
      %v483 = vrcp.pop %v451
      %v484 = vrcp.pop %v452
      %v485 = vrcp.pop %v453
      %v486 = vrcp.pop %v454
      %v487 = vrcp.pop %v455
      %v488 = vrcp.pop %v456
      %v489 = vrcp.pop %v457
      %v490 = vrcp.pop %v458
      %v491 = vrcp.pop %v459
      %v492 = vrcp.pop %v460
      %v493 = vrcp.pop %v461
      %v494 = vrcp.pop %v462
      %v495 = vrcp.pop %v463
      %v496 = vrcp.pop %v464
      %v497 = vrcp.pop %v465
      %v498 = vrcp.pop %v466
      %v499 = vrcp.pop %v467
      %v500 = vrcp.pop %v468
      %v501 = vrcp.pop %v469
      %v502 = vrcp.pop %v470
      %v503 = vrcp.pop %v471
      %v504 = vrcp.pop %v472
      %v505 = vrcp.pop %v473
      %v506 = vmul.f32 %v314, %v474
      %v507 = vmul.f32 %v315, %v475
      %v508 = vmul.f32 %v316, %v476
      %v509 = vmul.f32 %v317, %v477
      %v510 = vmul.f32 %v318, %v478
      %v511 = vmul.f32 %v319, %v479
      %v512 = vmul.f32 %v320, %v480
      %v513 = vmul.f32 %v321, %v481
      %v514 = vmul.f32 %v322, %v482
      %v515 = vmul.f32 %v323, %v483
      %v516 = vmul.f32 %v324, %v484
      %v517 = vmul.f32 %v325, %v485
      %v518 = vmul.f32 %v326, %v486
      %v519 = vmul.f32 %v327, %v487
      %v520 = vmul.f32 %v328, %v488
      %v521 = vmul.f32 %v329, %v489
      %v522 = vmul.f32 %v330, %v490
      %v523 = vmul.f32 %v331, %v491
      %v524 = vmul.f32 %v332, %v492
      %v525 = vmul.f32 %v333, %v493
      %v526 = vmul.f32 %v334, %v494
      %v527 = vmul.f32 %v335, %v495
      %v528 = vmul.f32 %v336, %v496
      %v529 = vmul.f32 %v337, %v497
      %v530 = vmul.f32 %v338, %v498
      %v531 = vmul.f32 %v339, %v499
      %v532 = vmul.f32 %v340, %v500
      %v533 = vmul.f32 %v341, %v501
      %v534 = vmul.f32 %v342, %v502
      %v535 = vmul.f32 %v343, %v503
      %v536 = vmul.f32 %v344, %v504
      %v537 = vmul.f32 %v345, %v505
      %538 = vst [vmem:[#allocation2] sm:$0xff] 0.0
      %539 = vst [vmem:[#allocation2 + $0x8] sm:$0xff] 0.0
      %540 = vst [vmem:[#allocation2 + $0x10] sm:$0x3] 0.0
      %541 = vst [vmem:[#allocation2 + $0x18] sm:$0xff] 0.0
      %542 = vst [vmem:[#allocation2 + $0x20] sm:$0xff] 0.0
      %543 = vst [vmem:[#allocation2 + $0x28] sm:$0x3] 0.0
      %544 = vst [vmem:[#allocation2 + $0x30] sm:$0xff] 0.0
      %545 = vst [vmem:[#allocation2 + $0x38] sm:$0xff] 0.0
      %546 = vst [vmem:[#allocation2 + $0x40] sm:$0x3] 0.0
      %547 = vst [vmem:[#allocation2 + $0x48] sm:$0xff] 0.0
      %548 = vst [vmem:[#allocation2 + $0x50] sm:$0xff] 0.0
      %549 = vst [vmem:[#allocation2 + $0x58] sm:$0x3] 0.0
      %550 = vst [vmem:[#allocation2 + $0x60] sm:$0xff] 0.0
      %551 = vst [vmem:[#allocation2 + $0x68] sm:$0xff] 0.0
      %552 = vst [vmem:[#allocation2 + $0x70] sm:$0x3] 0.0
      %553 = vst [vmem:[#allocation2 + $0x78] sm:$0xff] 0.0
      %554 = vst [vmem:[#allocation2 + $0x80] sm:$0xff] 0.0
      %555 = vst [vmem:[#allocation2 + $0x88] sm:$0x3] 0.0
      %556 = vst [vmem:[#allocation2 + $0x90] sm:$0xff] 0.0
      %557 = vst [vmem:[#allocation2 + $0x98] sm:$0xff] 0.0
      %558 = vst [vmem:[#allocation2 + $0xa0] sm:$0x3] 0.0
      %559 = vst [vmem:[#allocation2 + $0xa8] sm:$0xff] 0.0
      %560 = vst [vmem:[#allocation2 + $0xb0] sm:$0xff] 0.0
      %561 = vst [vmem:[#allocation2 + $0xb8] sm:$0x3] 0.0
      %562 = vst [vmem:[#allocation2 + $0xc0] sm:$0xff] 0.0
      %563 = vst [vmem:[#allocation2 + $0xc8] sm:$0xff] 0.0
      %564 = vst [vmem:[#allocation2 + $0xd0] sm:$0x3] 0.0
      %565 = vst [vmem:[#allocation2 + $0xd8] sm:$0xff] 0.0
      %566 = vst [vmem:[#allocation2 + $0xe0] sm:$0xff] 0.0
      %567 = vst [vmem:[#allocation2 + $0xe8] sm:$0x3] 0.0
      %568 = vst [vmem:[#allocation2 + $0xf0] sm:$0xff] 0.0
      %569 = vst [vmem:[#allocation2 + $0xf8] sm:$0xff] 0.0
      %570 = vst [vmem:[#allocation2 + $0x100] sm:$0x3] 0.0
      %571 = vst [vmem:[#allocation2 + $0x108] sm:$0xff] 0.0
      %572 = vst [vmem:[#allocation2 + $0x110] sm:$0xff] 0.0
      %573 = vst [vmem:[#allocation2 + $0x118] sm:$0x3] 0.0
      %574 = vst [vmem:[#allocation2 + $0x120] sm:$0xff] 0.0
      %575 = vst [vmem:[#allocation2 + $0x128] sm:$0xff] 0.0
      %576 = vst [vmem:[#allocation2 + $0x130] sm:$0x3] 0.0
      %577 = vst [vmem:[#allocation2 + $0x138] sm:$0xff] 0.0
      %578 = vst [vmem:[#allocation2 + $0x140] sm:$0xff] 0.0
      %579 = vst [vmem:[#allocation2 + $0x148] sm:$0x3] 0.0
      %580 = vst [vmem:[#allocation2 + $0x150] sm:$0xff] 0.0
      %581 = vst [vmem:[#allocation2 + $0x158] sm:$0xff] 0.0
      %582 = vst [vmem:[#allocation2 + $0x160] sm:$0x3] 0.0
      %583 = vst [vmem:[#allocation2 + $0x168] sm:$0xff] 0.0
      %584 = vst [vmem:[#allocation2 + $0x170] sm:$0xff] 0.0
      %585 = vst [vmem:[#allocation2 + $0x178] sm:$0x3] 0.0
      %586 = vst [vmem:[#allocation2 + $0x180] sm:$0xff] 0.0
      %587 = vst [vmem:[#allocation2 + $0x188] sm:$0xff] 0.0
      %588 = vst [vmem:[#allocation2 + $0x190] sm:$0x3] 0.0
      %589 = vst [vmem:[#allocation2 + $0x198] sm:$0xff] 0.0
      %590 = vst [vmem:[#allocation2 + $0x1a0] sm:$0xff] 0.0
      %591 = vst [vmem:[#allocation2 + $0x1a8] sm:$0x3] 0.0
      %s592 = scalar_lea.vmem [#allocation2], 24
      %593 = vst [vmem:[%s592 + $0x1] sm:$0xff] %v506
      %594 = vst [vmem:[%s592 + $0x9] sm:$0xff] %v507
      %595 = vst [vmem:[%s592 + $0x19] sm:$0xff] %v508
      %596 = vst [vmem:[%s592 + $0x21] sm:$0xff] %v509
      %597 = vst [vmem:[%s592 + $0x31] sm:$0xff] %v510
      %598 = vst [vmem:[%s592 + $0x39] sm:$0xff] %v511
      %599 = vst [vmem:[%s592 + $0x49] sm:$0xff] %v512
      %600 = vst [vmem:[%s592 + $0x51] sm:$0xff] %v513
      %601 = vst [vmem:[%s592 + $0x61] sm:$0xff] %v514
      %602 = vst [vmem:[%s592 + $0x69] sm:$0xff] %v515
      %603 = vst [vmem:[%s592 + $0x79] sm:$0xff] %v516
      %604 = vst [vmem:[%s592 + $0x81] sm:$0xff] %v517
      %605 = vst [vmem:[%s592 + $0x91] sm:$0xff] %v518
      %606 = vst [vmem:[%s592 + $0x99] sm:$0xff] %v519
      %607 = vst [vmem:[%s592 + $0xa9] sm:$0xff] %v520
      %608 = vst [vmem:[%s592 + $0xb1] sm:$0xff] %v521
      %609 = vst [vmem:[%s592 + $0xc1] sm:$0xff] %v522
      %610 = vst [vmem:[%s592 + $0xc9] sm:$0xff] %v523
      %611 = vst [vmem:[%s592 + $0xd9] sm:$0xff] %v524
      %612 = vst [vmem:[%s592 + $0xe1] sm:$0xff] %v525
      %613 = vst [vmem:[%s592 + $0xf1] sm:$0xff] %v526
      %614 = vst [vmem:[%s592 + $0xf9] sm:$0xff] %v527
      %615 = vst [vmem:[%s592 + $0x109] sm:$0xff] %v528
      %616 = vst [vmem:[%s592 + $0x111] sm:$0xff] %v529
      %617 = vst [vmem:[%s592 + $0x121] sm:$0xff] %v530
      %618 = vst [vmem:[%s592 + $0x129] sm:$0xff] %v531
      %619 = vst [vmem:[%s592 + $0x139] sm:$0xff] %v532
      %620 = vst [vmem:[%s592 + $0x141] sm:$0xff] %v533
      %621 = vst [vmem:[%s592 + $0x151] sm:$0xff] %v534
      %622 = vst [vmem:[%s592 + $0x159] sm:$0xff] %v535
      %623 = vst [vmem:[%s592 + $0x169] sm:$0xff] %v536
      %624 = vst [vmem:[%s592 + $0x171] sm:$0xff] %v537
      %v625 = vld [vmem:[#allocation2] sm:$0xff]
      %v626 = vld [vmem:[#allocation2 + $0x8] sm:$0xff]
      %v627 = vld [vmem:[#allocation2 + $0x10] sm:$0x3]
      %v628 = vld [vmem:[#allocation2 + $0x18] sm:$0xff]
      %v629 = vld [vmem:[#allocation2 + $0x20] sm:$0xff]
      %v630 = vld [vmem:[#allocation2 + $0x28] sm:$0x3]
      %v631 = vld [vmem:[#allocation2 + $0x30] sm:$0xff]
      %v632 = vld [vmem:[#allocation2 + $0x38] sm:$0xff]
      %v633 = vld [vmem:[#allocation2 + $0x40] sm:$0x3]
      %v634 = vld [vmem:[#allocation2 + $0x48] sm:$0xff]
      %v635 = vld [vmem:[#allocation2 + $0x50] sm:$0xff]
      %v636 = vld [vmem:[#allocation2 + $0x58] sm:$0x3]
      %v637 = vld [vmem:[#allocation2 + $0x60] sm:$0xff]
      %v638 = vld [vmem:[#allocation2 + $0x68] sm:$0xff]
      %v639 = vld [vmem:[#allocation2 + $0x70] sm:$0x3]
      %v640 = vld [vmem:[#allocation2 + $0x78] sm:$0xff]
      %v641 = vld [vmem:[#allocation2 + $0x80] sm:$0xff]
      %v642 = vld [vmem:[#allocation2 + $0x88] sm:$0x3]
      %v643 = vld [vmem:[#allocation2 + $0x90] sm:$0xff]
      %v644 = vld [vmem:[#allocation2 + $0x98] sm:$0xff]
      %v645 = vld [vmem:[#allocation2 + $0xa0] sm:$0x3]
      %v646 = vld [vmem:[#allocation2 + $0xa8] sm:$0xff]
      %v647 = vld [vmem:[#allocation2 + $0xb0] sm:$0xff]
      %v648 = vld [vmem:[#allocation2 + $0xb8] sm:$0x3]
      %v649 = vld [vmem:[#allocation2 + $0xc0] sm:$0xff]
      %v650 = vld [vmem:[#allocation2 + $0xc8] sm:$0xff]
      %v651 = vld [vmem:[#allocation2 + $0xd0] sm:$0x3]
      %v652 = vld [vmem:[#allocation2 + $0xd8] sm:$0xff]
      %v653 = vld [vmem:[#allocation2 + $0xe0] sm:$0xff]
      %v654 = vld [vmem:[#allocation2 + $0xe8] sm:$0x3]
      %v655 = vld [vmem:[#allocation2 + $0xf0] sm:$0xff]
      %v656 = vld [vmem:[#allocation2 + $0xf8] sm:$0xff]
      %v657 = vld [vmem:[#allocation2 + $0x100] sm:$0x3]
      %v658 = vld [vmem:[#allocation2 + $0x108] sm:$0xff]
      %v659 = vld [vmem:[#allocation2 + $0x110] sm:$0xff]
      %v660 = vld [vmem:[#allocation2 + $0x118] sm:$0x3]
      %v661 = vld [vmem:[#allocation2 + $0x120] sm:$0xff]
      %v662 = vld [vmem:[#allocation2 + $0x128] sm:$0xff]
      %v663 = vld [vmem:[#allocation2 + $0x130] sm:$0x3]
      %v664 = vld [vmem:[#allocation2 + $0x138] sm:$0xff]
      %v665 = vld [vmem:[#allocation2 + $0x140] sm:$0xff]
      %v666 = vld [vmem:[#allocation2 + $0x148] sm:$0x3]
      %v667 = vld [vmem:[#allocation2 + $0x150] sm:$0xff]
      %v668 = vld [vmem:[#allocation2 + $0x158] sm:$0xff]
      %v669 = vld [vmem:[#allocation2 + $0x160] sm:$0x3]
      %v670 = vld [vmem:[#allocation2 + $0x168] sm:$0xff]
      %v671 = vld [vmem:[#allocation2 + $0x170] sm:$0xff]
      %v672 = vld [vmem:[#allocation2 + $0x178] sm:$0x3]
      %v673 = vld [vmem:[#allocation2 + $0x180] sm:$0xff]
      %v674 = vld [vmem:[#allocation2 + $0x188] sm:$0xff]
      %v675 = vld [vmem:[#allocation2 + $0x190] sm:$0x3]
      %v676 = vld [vmem:[#allocation2 + $0x198] sm:$0xff]
      %v677 = vld [vmem:[#allocation2 + $0x1a0] sm:$0xff]
      %v678 = vld [vmem:[#allocation2 + $0x1a8] sm:$0x3]
      %vm727 = vcmask 1046528
      %v728 = vrot.slane %v625, 1
      %v729 = vrot.slane %v626, 1
      %v730 = vsel %vm727, %v728, %v729
      %v731 = vrot.slane %v627, 1
      %v732 = vsel %vm727, %v729, %v731
      %v733 = vrot.slane %v628, 1
      %v734 = vrot.slane %v629, 1
      %v735 = vsel %vm727, %v733, %v734
      %v736 = vrot.slane %v630, 1
      %v737 = vsel %vm727, %v734, %v736
      %v738 = vrot.slane %v631, 1
      %v739 = vrot.slane %v632, 1
      %v740 = vsel %vm727, %v738, %v739
      %v741 = vrot.slane %v633, 1
      %v742 = vsel %vm727, %v739, %v741
      %v743 = vrot.slane %v634, 1
      %v744 = vrot.slane %v635, 1
      %v745 = vsel %vm727, %v743, %v744
      %v746 = vrot.slane %v636, 1
      %v747 = vsel %vm727, %v744, %v746
      %v748 = vrot.slane %v637, 1
      %v749 = vrot.slane %v638, 1
      %v750 = vsel %vm727, %v748, %v749
      %v751 = vrot.slane %v639, 1
      %v752 = vsel %vm727, %v749, %v751
      %v753 = vrot.slane %v640, 1
      %v754 = vrot.slane %v641, 1
      %v755 = vsel %vm727, %v753, %v754
      %v756 = vrot.slane %v642, 1
      %v757 = vsel %vm727, %v754, %v756
      %v758 = vrot.slane %v643, 1
      %v759 = vrot.slane %v644, 1
      %v760 = vsel %vm727, %v758, %v759
      %v761 = vrot.slane %v645, 1
      %v762 = vsel %vm727, %v759, %v761
      %v763 = vrot.slane %v646, 1
      %v764 = vrot.slane %v647, 1
      %v765 = vsel %vm727, %v763, %v764
      %v766 = vrot.slane %v648, 1
      %v767 = vsel %vm727, %v764, %v766
      %v768 = vrot.slane %v649, 1
      %v769 = vrot.slane %v650, 1
      %v770 = vsel %vm727, %v768, %v769
      %v771 = vrot.slane %v651, 1
      %v772 = vsel %vm727, %v769, %v771
      %v773 = vrot.slane %v652, 1
      %v774 = vrot.slane %v653, 1
      %v775 = vsel %vm727, %v773, %v774
      %v776 = vrot.slane %v654, 1
      %v777 = vsel %vm727, %v774, %v776
      %v778 = vrot.slane %v655, 1
      %v779 = vrot.slane %v656, 1
      %v780 = vsel %vm727, %v778, %v779
      %v781 = vrot.slane %v657, 1
      %v782 = vsel %vm727, %v779, %v781
      %v783 = vrot.slane %v658, 1
      %v784 = vrot.slane %v659, 1
      %v785 = vsel %vm727, %v783, %v784
      %v786 = vrot.slane %v660, 1
      %v787 = vsel %vm727, %v784, %v786
      %v788 = vrot.slane %v661, 1
      %v789 = vrot.slane %v662, 1
      %v790 = vsel %vm727, %v788, %v789
      %v791 = vrot.slane %v663, 1
      %v792 = vsel %vm727, %v789, %v791
      %v793 = vrot.slane %v664, 1
      %v794 = vrot.slane %v665, 1
      %v795 = vsel %vm727, %v793, %v794
      %v796 = vrot.slane %v666, 1
      %v797 = vsel %vm727, %v794, %v796
      %v798 = vrot.slane %v667, 1
      %v799 = vrot.slane %v668, 1
      %v800 = vsel %vm727, %v798, %v799
      %v801 = vrot.slane %v669, 1
      %v802 = vsel %vm727, %v799, %v801
      %v803 = vrot.slane %v670, 1
      %v804 = vrot.slane %v671, 1
      %v805 = vsel %vm727, %v803, %v804
      %v806 = vrot.slane %v672, 1
      %v807 = vsel %vm727, %v804, %v806
      %vm840 = vcmask 1045504
      %v841 = vrot.slane %v625, 2
      %v842 = vrot.slane %v626, 2
      %v843 = vsel %vm840, %v841, %v842
      %v844 = vrot.slane %v627, 2
      %v845 = vsel %vm840, %v842, %v844
      %v846 = vrot.slane %v628, 2
      %v847 = vrot.slane %v629, 2
      %v848 = vsel %vm840, %v846, %v847
      %v849 = vrot.slane %v630, 2
      %v850 = vsel %vm840, %v847, %v849
      %v851 = vrot.slane %v631, 2
      %v852 = vrot.slane %v632, 2
      %v853 = vsel %vm840, %v851, %v852
      %v854 = vrot.slane %v633, 2
      %v855 = vsel %vm840, %v852, %v854
      %v856 = vrot.slane %v634, 2
      %v857 = vrot.slane %v635, 2
      %v858 = vsel %vm840, %v856, %v857
      %v859 = vrot.slane %v636, 2
      %v860 = vsel %vm840, %v857, %v859
      %v861 = vrot.slane %v637, 2
      %v862 = vrot.slane %v638, 2
      %v863 = vsel %vm840, %v861, %v862
      %v864 = vrot.slane %v639, 2
      %v865 = vsel %vm840, %v862, %v864
      %v866 = vrot.slane %v640, 2
      %v867 = vrot.slane %v641, 2
      %v868 = vsel %vm840, %v866, %v867
      %v869 = vrot.slane %v642, 2
      %v870 = vsel %vm840, %v867, %v869
      %v871 = vrot.slane %v643, 2
      %v872 = vrot.slane %v644, 2
      %v873 = vsel %vm840, %v871, %v872
      %v874 = vrot.slane %v645, 2
      %v875 = vsel %vm840, %v872, %v874
      %v876 = vrot.slane %v646, 2
      %v877 = vrot.slane %v647, 2
      %v878 = vsel %vm840, %v876, %v877
      %v879 = vrot.slane %v648, 2
      %v880 = vsel %vm840, %v877, %v879
      %v881 = vrot.slane %v649, 2
      %v882 = vrot.slane %v650, 2
      %v883 = vsel %vm840, %v881, %v882
      %v884 = vrot.slane %v651, 2
      %v885 = vsel %vm840, %v882, %v884
      %v886 = vrot.slane %v652, 2
      %v887 = vrot.slane %v653, 2
      %v888 = vsel %vm840, %v886, %v887
      %v889 = vrot.slane %v654, 2
      %v890 = vsel %vm840, %v887, %v889
      %v891 = vrot.slane %v655, 2
      %v892 = vrot.slane %v656, 2
      %v893 = vsel %vm840, %v891, %v892
      %v894 = vrot.slane %v657, 2
      %v895 = vsel %vm840, %v892, %v894
      %v896 = vrot.slane %v658, 2
      %v897 = vrot.slane %v659, 2
      %v898 = vsel %vm840, %v896, %v897
      %v899 = vrot.slane %v660, 2
      %v900 = vsel %vm840, %v897, %v899
      %v901 = vrot.slane %v661, 2
      %v902 = vrot.slane %v662, 2
      %v903 = vsel %vm840, %v901, %v902
      %v904 = vrot.slane %v663, 2
      %v905 = vsel %vm840, %v902, %v904
      %v906 = vrot.slane %v664, 2
      %v907 = vrot.slane %v665, 2
      %v908 = vsel %vm840, %v906, %v907
      %v909 = vrot.slane %v666, 2
      %v910 = vsel %vm840, %v907, %v909
      %v911 = vrot.slane %v667, 2
      %v912 = vrot.slane %v668, 2
      %v913 = vsel %vm840, %v911, %v912
      %v914 = vrot.slane %v669, 2
      %v915 = vsel %vm840, %v912, %v914
      %v916 = vrot.slane %v670, 2
      %v917 = vrot.slane %v671, 2
      %v918 = vsel %vm840, %v916, %v917
      %v919 = vrot.slane %v672, 2
      %v920 = vsel %vm840, %v917, %v919
      %v956 = vrot.slane %v673, 1
      %v957 = vrot.slane %v674, 1
      %v958 = vsel %vm727, %v956, %v957
      %v959 = vrot.slane %v675, 1
      %v960 = vsel %vm727, %v957, %v959
      %v963 = vrot.slane %v673, 2
      %v964 = vrot.slane %v674, 2
      %v965 = vsel %vm840, %v963, %v964
      %v966 = vrot.slane %v675, 2
      %v967 = vsel %vm840, %v964, %v966
      %v973 = vrot.slane %v676, 1
      %v974 = vrot.slane %v677, 1
      %v975 = vsel %vm727, %v973, %v974
      %v976 = vrot.slane %v678, 1
      %v977 = vsel %vm727, %v974, %v976
      %v980 = vrot.slane %v676, 2
      %v981 = vrot.slane %v677, 2
      %v982 = vsel %vm840, %v980, %v981
      %v983 = vrot.slane %v678, 2
      %v984 = vsel %vm840, %v981, %v983
      %v987 = vld [vmem:[%s3] sm:$0xff]
      %v988 = vld [vmem:[%s3 + $0x8] sm:$0xff]
      %v989 = vld [vmem:[%s3 + $0x10] sm:$0xff]
      %v990 = vld [vmem:[%s3 + $0x18] sm:$0xff]
      %v991 = vld [vmem:[%s3 + $0x20] sm:$0xff]
      %v992 = vld [vmem:[%s3 + $0x28] sm:$0xff]
      %v993 = vld [vmem:[%s3 + $0x30] sm:$0xff]
      %v994 = vld [vmem:[%s3 + $0x38] sm:$0xff]
      %v995 = vld [vmem:[%s3 + $0x40] sm:$0xff]
      %v996 = vld [vmem:[%s3 + $0x48] sm:$0xff]
      %v997 = vld [vmem:[%s3 + $0x50] sm:$0xff]
      %v998 = vld [vmem:[%s3 + $0x58] sm:$0xff]
      %v999 = vld [vmem:[%s3 + $0x60] sm:$0xff]
      %v1000 = vld [vmem:[%s3 + $0x68] sm:$0xff]
      %v1001 = vld [vmem:[%s3 + $0x70] sm:$0xff]
      %v1002 = vld [vmem:[%s3 + $0x78] sm:$0xff]
      %v1003 = vld [vmem:[%s3 + $0x80] sm:$0xff]
      %v1004 = vld [vmem:[%s3 + $0x88] sm:$0xff]
      %v1005 = vld [vmem:[%s3 + $0x90] sm:$0xff]
      %v1006 = vld [vmem:[%s3 + $0x98] sm:$0xff]
      %v1007 = vld [vmem:[%s3 + $0xa0] sm:$0xff]
      %v1008 = vld [vmem:[%s3 + $0xa8] sm:$0xff]
      %v1009 = vld [vmem:[%s3 + $0xb0] sm:$0xff]
      %v1010 = vld [vmem:[%s3 + $0xb8] sm:$0xff]
      %v1011 = vld [vmem:[%s3 + $0xc0] sm:$0xff]
      %v1012 = vld [vmem:[%s3 + $0xc8] sm:$0xff]
      %v1013 = vld [vmem:[%s3 + $0xd0] sm:$0xff]
      %v1014 = vld [vmem:[%s3 + $0xd8] sm:$0xff]
      %v1015 = vld [vmem:[%s3 + $0xe0] sm:$0xff]
      %v1016 = vld [vmem:[%s3 + $0xe8] sm:$0xff]
      %v1017 = vld [vmem:[%s3 + $0xf0] sm:$0xff]
      %v1018 = vld [vmem:[%s3 + $0xf8] sm:$0xff]
      %v1019 = vld [vmem:[%s3 + $0x100] sm:$0xff]
      %v1020 = vld [vmem:[%s3 + $0x108] sm:$0xff]
      %v1021 = vld [vmem:[%s3 + $0x110] sm:$0xff]
      %v1022 = vld [vmem:[%s3 + $0x118] sm:$0xff]
      %v1023 = vld [vmem:[%s3 + $0x120] sm:$0xff]
      %v1024 = vld [vmem:[%s3 + $0x128] sm:$0xff]
      %v1025 = vld [vmem:[%s3 + $0x130] sm:$0xff]
      %v1026 = vld [vmem:[%s3 + $0x138] sm:$0xff]
      %v1027 = vld [vmem:[%s3 + $0x140] sm:$0xff]
      %v1028 = vld [vmem:[%s3 + $0x148] sm:$0xff]
      %v1029 = vld [vmem:[%s3 + $0x150] sm:$0xff]
      %v1030 = vld [vmem:[%s3 + $0x158] sm:$0xff]
      %v1031 = vld [vmem:[%s3 + $0x160] sm:$0xff]
      %v1032 = vld [vmem:[%s3 + $0x168] sm:$0xff]
      %v1033 = vld [vmem:[%s3 + $0x170] sm:$0xff]
      %v1034 = vld [vmem:[%s3 + $0x178] sm:$0xff]
      %v1035 = vld [vmem:[%s3 + $0x180] sm:$0xff]
      %v1036 = vld [vmem:[%s3 + $0x188] sm:$0xff]
      %v1037 = vld [vmem:[%s3 + $0x190] sm:$0xff]
      %v1038 = vld [vmem:[%s3 + $0x198] sm:$0xff]
      %v1039 = vld [vmem:[%s3 + $0x1a0] sm:$0xff]
      %v1040 = vld [vmem:[%s3 + $0x1a8] sm:$0xff]
      %v1041 = vld [vmem:[%s3 + $0x1b0] sm:$0xff]
      %v1042 = vld [vmem:[%s3 + $0x1b8] sm:$0xff]
      %v1043 = vld [vmem:[%s3 + $0x1c0] sm:$0xff]
      %v1044 = vld [vmem:[%s3 + $0x1c8] sm:$0xff]
      %v1045 = vld [vmem:[%s3 + $0x1d0] sm:$0xff]
      %v1046 = vld [vmem:[%s3 + $0x1d8] sm:$0xff]
      %v1047 = vld [vmem:[%s3 + $0x1e0] sm:$0xff]
      %v1048 = vld [vmem:[%s3 + $0x1e8] sm:$0xff]
      %v1049 = vld [vmem:[%s3 + $0x1f0] sm:$0xff]
      %v1050 = vld [vmem:[%s3 + $0x1f8] sm:$0xff]
      %v1051 = vld [vmem:[%s3 + $0x200] sm:$0xff]
      %v1052 = vld [vmem:[%s3 + $0x208] sm:$0xff]
      %v1053 = vld [vmem:[%s3 + $0x210] sm:$0xff]
      %v1054 = vld [vmem:[%s3 + $0x218] sm:$0xff]
      %v1055 = vld [vmem:[%s3 + $0x220] sm:$0xff]
      %v1056 = vld [vmem:[%s3 + $0x228] sm:$0xff]
      %v1057 = vld [vmem:[%s3 + $0x230] sm:$0xff]
      %v1058 = vld [vmem:[%s3 + $0x238] sm:$0xff]
      %v1059 = vld [vmem:[%s3 + $0x240] sm:$0xff]
      %v1060 = vld [vmem:[%s3 + $0x248] sm:$0xff]
      %v1061 = vld [vmem:[%s3 + $0x250] sm:$0xff]
      %v1062 = vld [vmem:[%s3 + $0x258] sm:$0xff]
      %v1063 = vld [vmem:[%s3 + $0x260] sm:$0xff]
      %v1064 = vld [vmem:[%s3 + $0x268] sm:$0xff]
      %v1065 = vld [vmem:[%s3 + $0x270] sm:$0xff]
      %v1066 = vld [vmem:[%s3 + $0x278] sm:$0xff]
      %v1067 = vld [vmem:[%s3 + $0x280] sm:$0xff]
      %v1068 = vld [vmem:[%s3 + $0x288] sm:$0xff]
      %v1069 = vld [vmem:[%s3 + $0x290] sm:$0xff]
      %v1070 = vld [vmem:[%s3 + $0x298] sm:$0xff]
      %v1071 = vld [vmem:[%s3 + $0x2a0] sm:$0xff]
      %v1072 = vld [vmem:[%s3 + $0x2a8] sm:$0xff]
      %v1073 = vld [vmem:[%s3 + $0x2b0] sm:$0xff]
      %v1074 = vld [vmem:[%s3 + $0x2b8] sm:$0xff]
      %v1075 = vld [vmem:[%s3 + $0x2c0] sm:$0xff]
      %v1076 = vld [vmem:[%s3 + $0x2c8] sm:$0xff]
      %v1077 = vld [vmem:[%s3 + $0x2d0] sm:$0xff]
      %v1078 = vld [vmem:[%s3 + $0x2d8] sm:$0xff]
      %v1079 = vld [vmem:[%s3 + $0x2e0] sm:$0xff]
      %v1080 = vld [vmem:[%s3 + $0x2e8] sm:$0xff]
      %v1081 = vld [vmem:[%s3 + $0x2f0] sm:$0xff]
      %v1082 = vld [vmem:[%s3 + $0x2f8] sm:$0xff]
      %v1083 = vld [vmem:[%s3 + $0x300] sm:$0xff]
      %v1084 = vld [vmem:[%s3 + $0x308] sm:$0xff]
      %v1085 = vld [vmem:[%s3 + $0x310] sm:$0xff]
      %v1086 = vld [vmem:[%s3 + $0x318] sm:$0xff]
      %v1087 = vld [vmem:[%s3 + $0x320] sm:$0xff]
      %v1088 = vld [vmem:[%s3 + $0x328] sm:$0xff]
      %v1089 = vld [vmem:[%s3 + $0x330] sm:$0xff]
      %v1090 = vld [vmem:[%s3 + $0x338] sm:$0xff]
      %v1091 = vld [vmem:[%s3 + $0x340] sm:$0xff]
      %v1092 = vld [vmem:[%s3 + $0x348] sm:$0xff]
      %v1093 = vld [vmem:[%s3 + $0x350] sm:$0xff]
      %v1094 = vld [vmem:[%s3 + $0x358] sm:$0xff]
      %v1095 = vld [vmem:[%s3 + $0x360] sm:$0xff]
      %v1096 = vld [vmem:[%s3 + $0x368] sm:$0xff]
      %v1097 = vld [vmem:[%s3 + $0x370] sm:$0xff]
      %v1098 = vld [vmem:[%s3 + $0x378] sm:$0xff]
      %v1099 = vld [vmem:[%s3 + $0x380] sm:$0xff]
      %v1100 = vld [vmem:[%s3 + $0x388] sm:$0xff]
      %v1101 = vld [vmem:[%s3 + $0x390] sm:$0xff]
      %v1102 = vld [vmem:[%s3 + $0x398] sm:$0xff]
      %v1103 = vld [vmem:[%s3 + $0x3a0] sm:$0xff]
      %v1104 = vld [vmem:[%s3 + $0x3a8] sm:$0xff]
      %v1105 = vld [vmem:[%s3 + $0x3b0] sm:$0xff]
      %v1106 = vld [vmem:[%s3 + $0x3b8] sm:$0xff]
      %v1107 = vld [vmem:[%s3 + $0x3c0] sm:$0xff]
      %v1108 = vld [vmem:[%s3 + $0x3c8] sm:$0xff]
      %v1109 = vld [vmem:[%s3 + $0x3d0] sm:$0xff]
      %v1110 = vld [vmem:[%s3 + $0x3d8] sm:$0xff]
      %v1111 = vld [vmem:[%s3 + $0x3e0] sm:$0xff]
      %v1112 = vld [vmem:[%s3 + $0x3e8] sm:$0xff]
      %v1113 = vld [vmem:[%s3 + $0x3f0] sm:$0xff]
      %v1114 = vld [vmem:[%s3 + $0x3f8] sm:$0xff]
      %v1115 = vld [vmem:[%s3 + $0x400] sm:$0xff]
      %v1116 = vld [vmem:[%s3 + $0x408] sm:$0xff]
      %v1117 = vld [vmem:[%s3 + $0x410] sm:$0xff]
      %v1118 = vld [vmem:[%s3 + $0x418] sm:$0xff]
      %v1119 = vld [vmem:[%s3 + $0x420] sm:$0xff]
      %v1120 = vld [vmem:[%s3 + $0x428] sm:$0xff]
      %v1121 = vld [vmem:[%s3 + $0x430] sm:$0xff]
      %v1122 = vld [vmem:[%s3 + $0x438] sm:$0xff]
      %v1123 = vld [vmem:[%s3 + $0x440] sm:$0xff]
      %v1124 = vld [vmem:[%s3 + $0x448] sm:$0xff]
      %v1125 = vld [vmem:[%s3 + $0x450] sm:$0xff]
      %v1126 = vld [vmem:[%s3 + $0x458] sm:$0xff]
      %v1127 = vld [vmem:[%s3 + $0x460] sm:$0xff]
      %v1128 = vld [vmem:[%s3 + $0x468] sm:$0xff]
      %v1129 = vld [vmem:[%s3 + $0x470] sm:$0xff]
      %v1130 = vld [vmem:[%s3 + $0x478] sm:$0xff]
      %1131 = vmatprep.subr.mxu0 0.0
      %1132 = vmatpush1.msra.mxu0 %v987
      %1133 = vmatprep.subr.mxu0 0.0
      %1134 = vmatpush1.msra.mxu0 %v988
      %1135 = vmatprep.subr.mxu0 0.0
      %1136 = vmatpush1.msra.mxu0 %v989
      %1137 = vmatprep.subr.mxu0 0.0
      %1138 = vmatpush1.msra.mxu0 %v990
      %1139 = vmatprep.subr.mxu0 0.0
      %1140 = vmatpush1.msra.mxu0 %v991
      %1141 = vmatprep.subr.mxu0 0.0
      %1142 = vmatpush1.msra.mxu0 %v992
      %1143 = vmatprep.subr.mxu0 0.0
      %1144 = vmatpush1.msra.mxu0 %v993
      %1145 = vmatprep.subr.mxu0 0.0
      %1146 = vmatpush1.msra.mxu0 %v994
      %1147 = vmatprep.subr.mxu0 0.0
      %1148 = vmatpush1.msra.mxu0 %v995
      %1149 = vmatprep.subr.mxu0 0.0
      %1150 = vmatpush1.msra.mxu0 %v996
      %1151 = vmatprep.subr.mxu0 0.0
      %1152 = vmatpush1.msra.mxu0 %v997
      %1153 = vmatprep.subr.mxu0 0.0
      %1154 = vmatpush1.msra.mxu0 %v998
      %1155 = vmatprep.subr.mxu0 0.0
      %1156 = vmatpush1.msra.mxu0 %v999
      %1157 = vmatprep.subr.mxu0 0.0
      %1158 = vmatpush1.msra.mxu0 %v1000
      %1159 = vmatprep.subr.mxu0 0.0
      %1160 = vmatpush1.msra.mxu0 %v1001
      %1161 = vmatprep.subr.mxu0 0.0
      %1162 = vmatpush1.msra.mxu0 %v1002
      %1163 = vmatprep.subr.mxu0 0.0
      %1164 = vmatpush1.msra.mxu0 %v1003
      %1165 = vmatprep.subr.mxu0 0.0
      %1166 = vmatpush1.msra.mxu0 %v1004
      %1167 = vmatprep.subr.mxu0 0.0
      %1168 = vmatpush1.msra.mxu0 %v1005
      %1169 = vmatprep.subr.mxu0 0.0
      %1170 = vmatpush1.msra.mxu0 %v1006
      %1171 = vmatprep.subr.mxu0 0.0
      %1172 = vmatpush1.msra.mxu0 %v1007
      %1173 = vmatprep.subr.mxu0 0.0
      %1174 = vmatpush1.msra.mxu0 %v1008
      %1175 = vmatprep.subr.mxu0 0.0
      %1176 = vmatpush1.msra.mxu0 %v1009
      %1177 = vmatprep.subr.mxu0 0.0
      %1178 = vmatpush1.msra.mxu0 %v1010
      %1179 = vmatprep.subr.mxu0 0.0
      %1180 = vmatpush1.msra.mxu0 %v1011
      %1181 = vmatprep.subr.mxu0 0.0
      %1182 = vmatpush1.msra.mxu0 %v1012
      %1183 = vmatprep.subr.mxu0 0.0
      %1184 = vmatpush1.msra.mxu0 %v1013
      %1185 = vmatprep.subr.mxu0 0.0
      %1186 = vmatpush1.msra.mxu0 %v1014
      %1187 = vmatprep.subr.mxu0 0.0
      %1188 = vmatpush1.msra.mxu0 %v1015
      %1189 = vmatprep.subr.mxu0 0.0
      %1190 = vmatpush1.msra.mxu0 %v1016
      %1191 = vmatprep.subr.mxu0 0.0
      %1192 = vmatpush1.msra.mxu0 %v1017
      %1193 = vmatprep.subr.mxu0 0.0
      %1194 = vmatpush1.msra.mxu0 %v1018
      %1195 = vmatprep.mubr.f32.mxu0 %v730
      %1196 = vmatmul.mubr.f32.gmra.mrb[0].mxu0 %v625
      %v1197 = vpop.f32.mrb[0].mxu0
      %v1198 = vadd.f32 0.0, %v1197
      %v1199 = vpop.f32.mrb[0].mxu0
      %1200 = vmatprep.mubr.f32.mxu0 %v732
      %1201 = vmatmul.mubr.f32.gmra.mrb[0].mxu0 %v626
      %v1202 = vpop.f32.mrb[0].mxu0
      %v1203 = vadd.f32 0.0, %v1202
      %v1204 = vpop.f32.mrb[0].mxu0
      %1205 = vmatprep.mubr.f32.mxu0 %v735
      %1206 = vmatmul.mubr.f32.gmra.mrb[0].mxu0 %v628
      %v1207 = vpop.f32.mrb[0].mxu0
      %v1208 = vadd.f32 0.0, %v1207
      %v1209 = vpop.f32.mrb[0].mxu0
      %1210 = vmatprep.mubr.f32.mxu0 %v737
      %1211 = vmatmul.mubr.f32.gmra.mrb[0].mxu0 %v629
      %v1212 = vpop.f32.mrb[0].mxu0
      %v1213 = vadd.f32 0.0, %v1212
      %v1214 = vpop.f32.mrb[0].mxu0
      %1215 = vmatprep.mubr.f32.mxu0 %v740
      %1216 = vmatmul.mubr.f32.gmra.mrb[0].mxu0 %v631
      %v1217 = vpop.f32.mrb[0].mxu0
      %v1218 = vadd.f32 0.0, %v1217
      %v1219 = vpop.f32.mrb[0].mxu0
      %1220 = vmatprep.mubr.f32.mxu0 %v742
      %1221 = vmatmul.mubr.f32.gmra.mrb[0].mxu0 %v632
      %v1222 = vpop.f32.mrb[0].mxu0
      %v1223 = vadd.f32 0.0, %v1222
      %v1224 = vpop.f32.mrb[0].mxu0
      %1225 = vmatprep.mubr.f32.mxu0 %v745
      %1226 = vmatmul.mubr.f32.gmra.mrb[0].mxu0 %v634
      %v1227 = vpop.f32.mrb[0].mxu0
      %v1228 = vadd.f32 0.0, %v1227
      %v1229 = vpop.f32.mrb[0].mxu0
      %1230 = vmatprep.mubr.f32.mxu0 %v747
      %1231 = vmatmul.mubr.f32.gmra.mrb[0].mxu0 %v635
      %v1232 = vpop.f32.mrb[0].mxu0
      %v1233 = vadd.f32 0.0, %v1232
      %v1234 = vpop.f32.mrb[0].mxu0
      %1235 = vmatprep.mubr.f32.mxu0 %v750
      %1236 = vmatmul.mubr.f32.gmra.mrb[0].mxu0 %v637
      %v1237 = vpop.f32.mrb[0].mxu0
      %v1238 = vadd.f32 0.0, %v1237
      %v1239 = vpop.f32.mrb[0].mxu0
      %1240 = vmatprep.mubr.f32.mxu0 %v752
      %1241 = vmatmul.mubr.f32.gmra.mrb[0].mxu0 %v638
      %v1242 = vpop.f32.mrb[0].mxu0
      %v1243 = vadd.f32 0.0, %v1242
      %v1244 = vpop.f32.mrb[0].mxu0
      %1245 = vmatprep.mubr.f32.mxu0 %v755
      %1246 = vmatmul.mubr.f32.gmra.mrb[0].mxu0 %v640
      %v1247 = vpop.f32.mrb[0].mxu0
      %v1248 = vadd.f32 0.0, %v1247
      %v1249 = vpop.f32.mrb[0].mxu0
      %1250 = vmatprep.mubr.f32.mxu0 %v757
      %1251 = vmatmul.mubr.f32.gmra.mrb[0].mxu0 %v641
      %v1252 = vpop.f32.mrb[0].mxu0
      %v1253 = vadd.f32 0.0, %v1252
      %v1254 = vpop.f32.mrb[0].mxu0
      %1255 = vmatprep.mubr.f32.mxu0 %v760
      %1256 = vmatmul.mubr.f32.gmra.mrb[0].mxu0 %v643
      %v1257 = vpop.f32.mrb[0].mxu0
      %v1258 = vadd.f32 0.0, %v1257
      %v1259 = vpop.f32.mrb[0].mxu0
      %1260 = vmatprep.mubr.f32.mxu0 %v762
      %1261 = vmatmul.mubr.f32.gmra.mrb[0].mxu0 %v644
      %v1262 = vpop.f32.mrb[0].mxu0
      %v1263 = vadd.f32 0.0, %v1262
      %v1264 = vpop.f32.mrb[0].mxu0
      %1265 = vmatprep.mubr.f32.mxu0 %v765
      %1266 = vmatmul.mubr.f32.gmra.mrb[0].mxu0 %v646
      %v1267 = vpop.f32.mrb[0].mxu0
      %v1268 = vadd.f32 0.0, %v1267
      %v1269 = vpop.f32.mrb[0].mxu0
      %1270 = vmatprep.mubr.f32.mxu0 %v767
      %1271 = vmatmul.mubr.f32.gmra.mrb[0].mxu0 %v647
      %v1272 = vpop.f32.mrb[0].mxu0
      %v1273 = vadd.f32 0.0, %v1272
      %v1274 = vpop.f32.mrb[0].mxu0
      %1275 = vmatprep.mubr.f32.mxu0 %v770
      %1276 = vmatmul.mubr.f32.gmra.mrb[0].mxu0 %v649
      %v1277 = vpop.f32.mrb[0].mxu0
      %v1278 = vadd.f32 0.0, %v1277
      %v1279 = vpop.f32.mrb[0].mxu0
      %1280 = vmatprep.mubr.f32.mxu0 %v772
      %1281 = vmatmul.mubr.f32.gmra.mrb[0].mxu0 %v650
      %v1282 = vpop.f32.mrb[0].mxu0
      %v1283 = vadd.f32 0.0, %v1282
      %v1284 = vpop.f32.mrb[0].mxu0
      %1285 = vmatprep.mubr.f32.mxu0 %v775
      %1286 = vmatmul.mubr.f32.gmra.mrb[0].mxu0 %v652
      %v1287 = vpop.f32.mrb[0].mxu0
      %v1288 = vadd.f32 0.0, %v1287
      %v1289 = vpop.f32.mrb[0].mxu0
      %1290 = vmatprep.mubr.f32.mxu0 %v777
      %1291 = vmatmul.mubr.f32.gmra.mrb[0].mxu0 %v653
      %v1292 = vpop.f32.mrb[0].mxu0
      %v1293 = vadd.f32 0.0, %v1292
      %v1294 = vpop.f32.mrb[0].mxu0
      %1295 = vmatprep.mubr.f32.mxu0 %v780
      %1296 = vmatmul.mubr.f32.gmra.mrb[0].mxu0 %v655
      %v1297 = vpop.f32.mrb[0].mxu0
      %v1298 = vadd.f32 0.0, %v1297
      %v1299 = vpop.f32.mrb[0].mxu0
      %1300 = vmatprep.mubr.f32.mxu0 %v782
      %1301 = vmatmul.mubr.f32.gmra.mrb[0].mxu0 %v656
      %v1302 = vpop.f32.mrb[0].mxu0
      %v1303 = vadd.f32 0.0, %v1302
      %v1304 = vpop.f32.mrb[0].mxu0
      %1305 = vmatprep.mubr.f32.mxu0 %v785
      %1306 = vmatmul.mubr.f32.gmra.mrb[0].mxu0 %v658
      %v1307 = vpop.f32.mrb[0].mxu0
      %v1308 = vadd.f32 0.0, %v1307
      %v1309 = vpop.f32.mrb[0].mxu0
      %1310 = vmatprep.mubr.f32.mxu0 %v787
      %1311 = vmatmul.mubr.f32.gmra.mrb[0].mxu0 %v659
      %v1312 = vpop.f32.mrb[0].mxu0
      %v1313 = vadd.f32 0.0, %v1312
      %v1314 = vpop.f32.mrb[0].mxu0
      %1315 = vmatprep.mubr.f32.mxu0 %v790
      %1316 = vmatmul.mubr.f32.gmra.mrb[0].mxu0 %v661
      %v1317 = vpop.f32.mrb[0].mxu0
      %v1318 = vadd.f32 0.0, %v1317
      %v1319 = vpop.f32.mrb[0].mxu0
      %1320 = vmatprep.mubr.f32.mxu0 %v792
      %1321 = vmatmul.mubr.f32.gmra.mrb[0].mxu0 %v662
      %v1322 = vpop.f32.mrb[0].mxu0
      %v1323 = vadd.f32 0.0, %v1322
      %v1324 = vpop.f32.mrb[0].mxu0
      %1325 = vmatprep.mubr.f32.mxu0 %v795
      %1326 = vmatmul.mubr.f32.gmra.mrb[0].mxu0 %v664
      %v1327 = vpop.f32.mrb[0].mxu0
      %v1328 = vadd.f32 0.0, %v1327
      %v1329 = vpop.f32.mrb[0].mxu0
      %1330 = vmatprep.mubr.f32.mxu0 %v797
      %1331 = vmatmul.mubr.f32.gmra.mrb[0].mxu0 %v665
      %v1332 = vpop.f32.mrb[0].mxu0
      %v1333 = vadd.f32 0.0, %v1332
      %v1334 = vpop.f32.mrb[0].mxu0
      %1335 = vmatprep.mubr.f32.mxu0 %v800
      %1336 = vmatmul.mubr.f32.gmra.mrb[0].mxu0 %v667
      %v1337 = vpop.f32.mrb[0].mxu0
      %v1338 = vadd.f32 0.0, %v1337
      %v1339 = vpop.f32.mrb[0].mxu0
      %1340 = vmatprep.mubr.f32.mxu0 %v802
      %1341 = vmatmul.mubr.f32.gmra.mrb[0].mxu0 %v668
      %v1342 = vpop.f32.mrb[0].mxu0
      %v1343 = vadd.f32 0.0, %v1342
      %v1344 = vpop.f32.mrb[0].mxu0
      %1345 = vmatprep.mubr.f32.mxu0 %v805
      %1346 = vmatmul.mubr.f32.gmra.mrb[0].mxu0 %v670
      %v1347 = vpop.f32.mrb[0].mxu0
      %v1348 = vadd.f32 0.0, %v1347
      %v1349 = vpop.f32.mrb[0].mxu0
      %1350 = vmatprep.mubr.f32.mxu0 %v807
      %1351 = vmatmul.mubr.f32.gmra.mrb[0].mxu0 %v671
      %v1352 = vpop.f32.mrb[0].mxu0
      %v1353 = vadd.f32 0.0, %v1352
      %v1354 = vpop.f32.mrb[0].mxu0
      %1355 = vdwg.mxu0
      %1356 = vmatprep.subr.mxu0 0.0
      %1357 = vmatpush1.msra.mxu0 %v1019
      %1358 = vmatprep.subr.mxu0 0.0
      %1359 = vmatpush1.msra.mxu0 %v1020
      %1360 = vmatprep.subr.mxu0 0.0
      %1361 = vmatpush1.msra.mxu0 %v1021
      %1362 = vmatprep.subr.mxu0 0.0
      %1363 = vmatpush1.msra.mxu0 %v1022
      %1364 = vmatprep.subr.mxu0 0.0
      %1365 = vmatpush1.msra.mxu0 %v1023
      %1366 = vmatprep.subr.mxu0 0.0
      %1367 = vmatpush1.msra.mxu0 %v1024
      %1368 = vmatprep.subr.mxu0 0.0
      %1369 = vmatpush1.msra.mxu0 %v1025
      %1370 = vmatprep.subr.mxu0 0.0
      %1371 = vmatpush1.msra.mxu0 %v1026
      %1372 = vmatprep.subr.mxu0 0.0
      %1373 = vmatpush1.msra.mxu0 %v1027
      %1374 = vmatprep.subr.mxu0 0.0
      %1375 = vmatpush1.msra.mxu0 %v1028
      %1376 = vmatprep.subr.mxu0 0.0
      %1377 = vmatpush1.msra.mxu0 %v1029
      %1378 = vmatprep.subr.mxu0 0.0
      %1379 = vmatpush1.msra.mxu0 %v1030
      %1380 = vmatprep.subr.mxu0 0.0
      %1381 = vmatpush1.msra.mxu0 %v1031
      %1382 = vmatprep.subr.mxu0 0.0
      %1383 = vmatpush1.msra.mxu0 %v1032
      %1384 = vmatprep.subr.mxu0 0.0
      %1385 = vmatpush1.msra.mxu0 %v1033
      %1386 = vmatprep.subr.mxu0 0.0
      %1387 = vmatpush1.msra.mxu0 %v1034
      %1388 = vmatprep.subr.mxu0 0.0
      %1389 = vmatpush1.msra.mxu0 %v1035
      %1390 = vmatprep.subr.mxu0 0.0
      %1391 = vmatpush1.msra.mxu0 %v1036
      %1392 = vmatprep.subr.mxu0 0.0
      %1393 = vmatpush1.msra.mxu0 %v1037
      %1394 = vmatprep.subr.mxu0 0.0
      %1395 = vmatpush1.msra.mxu0 %v1038
      %1396 = vmatprep.subr.mxu0 0.0
      %1397 = vmatpush1.msra.mxu0 %v1039
      %1398 = vmatprep.subr.mxu0 0.0
      %1399 = vmatpush1.msra.mxu0 %v1040
      %1400 = vmatprep.subr.mxu0 0.0
      %1401 = vmatpush1.msra.mxu0 %v1041
      %1402 = vmatprep.subr.mxu0 0.0
      %1403 = vmatpush1.msra.mxu0 %v1042
      %1404 = vmatprep.subr.mxu0 0.0
      %1405 = vmatpush1.msra.mxu0 %v1043
      %1406 = vmatprep.subr.mxu0 0.0
      %1407 = vmatpush1.msra.mxu0 %v1044
      %1408 = vmatprep.subr.mxu0 0.0
      %1409 = vmatpush1.msra.mxu0 %v1045
      %1410 = vmatprep.subr.mxu0 0.0
      %1411 = vmatpush1.msra.mxu0 %v1046
      %1412 = vmatprep.subr.mxu0 0.0
      %1413 = vmatpush1.msra.mxu0 %v1047
      %1414 = vmatprep.subr.mxu0 0.0
      %1415 = vmatpush1.msra.mxu0 %v1048
      %1416 = vmatprep.subr.mxu0 0.0
      %1417 = vmatpush1.msra.mxu0 %v1049
      %1418 = vmatprep.subr.mxu0 0.0
      %1419 = vmatpush1.msra.mxu0 %v1050
      %1420 = vmatprep.mubr.f32.mxu0 %v628
      %1421 = vmatmul.mubr.f32.gmra.mrb[0].mxu0 %v843
      %v1422 = vpop.f32.mrb[0].mxu0
      %v1423 = vadd.f32 %v1198, %v1422
      %v1424 = vpop.f32.mrb[0].mxu0
      %1425 = vmatprep.mubr.f32.mxu0 %v629
      %1426 = vmatmul.mubr.f32.gmra.mrb[0].mxu0 %v845
      %v1427 = vpop.f32.mrb[0].mxu0
      %v1428 = vadd.f32 %v1203, %v1427
      %v1429 = vpop.f32.mrb[0].mxu0
      %1430 = vmatprep.mubr.f32.mxu0 %v631
      %1431 = vmatmul.mubr.f32.gmra.mrb[0].mxu0 %v848
      %v1432 = vpop.f32.mrb[0].mxu0
      %v1433 = vadd.f32 %v1208, %v1432
      %v1434 = vpop.f32.mrb[0].mxu0
      %1435 = vmatprep.mubr.f32.mxu0 %v632
      %1436 = vmatmul.mubr.f32.gmra.mrb[0].mxu0 %v850
      %v1437 = vpop.f32.mrb[0].mxu0
      %v1438 = vadd.f32 %v1213, %v1437
      %v1439 = vpop.f32.mrb[0].mxu0
      %1440 = vmatprep.mubr.f32.mxu0 %v634
      %1441 = vmatmul.mubr.f32.gmra.mrb[0].mxu0 %v853
      %v1442 = vpop.f32.mrb[0].mxu0
      %v1443 = vadd.f32 %v1218, %v1442
      %v1444 = vpop.f32.mrb[0].mxu0
      %1445 = vmatprep.mubr.f32.mxu0 %v635
      %1446 = vmatmul.mubr.f32.gmra.mrb[0].mxu0 %v855
      %v1447 = vpop.f32.mrb[0].mxu0
      %v1448 = vadd.f32 %v1223, %v1447
      %v1449 = vpop.f32.mrb[0].mxu0
      %1450 = vmatprep.mubr.f32.mxu0 %v637
      %1451 = vmatmul.mubr.f32.gmra.mrb[0].mxu0 %v858
      %v1452 = vpop.f32.mrb[0].mxu0
      %v1453 = vadd.f32 %v1228, %v1452
      %v1454 = vpop.f32.mrb[0].mxu0
      %1455 = vmatprep.mubr.f32.mxu0 %v638
      %1456 = vmatmul.mubr.f32.gmra.mrb[0].mxu0 %v860
      %v1457 = vpop.f32.mrb[0].mxu0
      %v1458 = vadd.f32 %v1233, %v1457
      %v1459 = vpop.f32.mrb[0].mxu0
      %1460 = vmatprep.mubr.f32.mxu0 %v640
      %1461 = vmatmul.mubr.f32.gmra.mrb[0].mxu0 %v863
      %v1462 = vpop.f32.mrb[0].mxu0
      %v1463 = vadd.f32 %v1238, %v1462
      %v1464 = vpop.f32.mrb[0].mxu0
      %1465 = vmatprep.mubr.f32.mxu0 %v641
      %1466 = vmatmul.mubr.f32.gmra.mrb[0].mxu0 %v865
      %v1467 = vpop.f32.mrb[0].mxu0
      %v1468 = vadd.f32 %v1243, %v1467
      %v1469 = vpop.f32.mrb[0].mxu0
      %1470 = vmatprep.mubr.f32.mxu0 %v643
      %1471 = vmatmul.mubr.f32.gmra.mrb[0].mxu0 %v868
      %v1472 = vpop.f32.mrb[0].mxu0
      %v1473 = vadd.f32 %v1248, %v1472
      %v1474 = vpop.f32.mrb[0].mxu0
      %1475 = vmatprep.mubr.f32.mxu0 %v644
      %1476 = vmatmul.mubr.f32.gmra.mrb[0].mxu0 %v870
      %v1477 = vpop.f32.mrb[0].mxu0
      %v1478 = vadd.f32 %v1253, %v1477
      %v1479 = vpop.f32.mrb[0].mxu0
      %1480 = vmatprep.mubr.f32.mxu0 %v646
      %1481 = vmatmul.mubr.f32.gmra.mrb[0].mxu0 %v873
      %v1482 = vpop.f32.mrb[0].mxu0
      %v1483 = vadd.f32 %v1258, %v1482
      %v1484 = vpop.f32.mrb[0].mxu0
      %1485 = vmatprep.mubr.f32.mxu0 %v647
      %1486 = vmatmul.mubr.f32.gmra.mrb[0].mxu0 %v875
      %v1487 = vpop.f32.mrb[0].mxu0
      %v1488 = vadd.f32 %v1263, %v1487
      %v1489 = vpop.f32.mrb[0].mxu0
      %1490 = vmatprep.mubr.f32.mxu0 %v649
      %1491 = vmatmul.mubr.f32.gmra.mrb[0].mxu0 %v878
      %v1492 = vpop.f32.mrb[0].mxu0
      %v1493 = vadd.f32 %v1268, %v1492
      %v1494 = vpop.f32.mrb[0].mxu0
      %1495 = vmatprep.mubr.f32.mxu0 %v650
      %1496 = vmatmul.mubr.f32.gmra.mrb[0].mxu0 %v880
      %v1497 = vpop.f32.mrb[0].mxu0
      %v1498 = vadd.f32 %v1273, %v1497
      %v1499 = vpop.f32.mrb[0].mxu0
      %1500 = vmatprep.mubr.f32.mxu0 %v652
      %1501 = vmatmul.mubr.f32.gmra.mrb[0].mxu0 %v883
      %v1502 = vpop.f32.mrb[0].mxu0
      %v1503 = vadd.f32 %v1278, %v1502
      %v1504 = vpop.f32.mrb[0].mxu0
      %1505 = vmatprep.mubr.f32.mxu0 %v653
      %1506 = vmatmul.mubr.f32.gmra.mrb[0].mxu0 %v885
      %v1507 = vpop.f32.mrb[0].mxu0
      %v1508 = vadd.f32 %v1283, %v1507
      %v1509 = vpop.f32.mrb[0].mxu0
      %1510 = vmatprep.mubr.f32.mxu0 %v655
      %1511 = vmatmul.mubr.f32.gmra.mrb[0].mxu0 %v888
      %v1512 = vpop.f32.mrb[0].mxu0
      %v1513 = vadd.f32 %v1288, %v1512
      %v1514 = vpop.f32.mrb[0].mxu0
      %1515 = vmatprep.mubr.f32.mxu0 %v656
      %1516 = vmatmul.mubr.f32.gmra.mrb[0].mxu0 %v890
      %v1517 = vpop.f32.mrb[0].mxu0
      %v1518 = vadd.f32 %v1293, %v1517
      %v1519 = vpop.f32.mrb[0].mxu0
      %1520 = vmatprep.mubr.f32.mxu0 %v658
      %1521 = vmatmul.mubr.f32.gmra.mrb[0].mxu0 %v893
      %v1522 = vpop.f32.mrb[0].mxu0
      %v1523 = vadd.f32 %v1298, %v1522
      %v1524 = vpop.f32.mrb[0].mxu0
      %1525 = vmatprep.mubr.f32.mxu0 %v659
      %1526 = vmatmul.mubr.f32.gmra.mrb[0].mxu0 %v895
      %v1527 = vpop.f32.mrb[0].mxu0
      %v1528 = vadd.f32 %v1303, %v1527
      %v1529 = vpop.f32.mrb[0].mxu0
      %1530 = vmatprep.mubr.f32.mxu0 %v661
      %1531 = vmatmul.mubr.f32.gmra.mrb[0].mxu0 %v898
      %v1532 = vpop.f32.mrb[0].mxu0
      %v1533 = vadd.f32 %v1308, %v1532
      %v1534 = vpop.f32.mrb[0].mxu0
      %1535 = vmatprep.mubr.f32.mxu0 %v662
      %1536 = vmatmul.mubr.f32.gmra.mrb[0].mxu0 %v900
      %v1537 = vpop.f32.mrb[0].mxu0
      %v1538 = vadd.f32 %v1313, %v1537
      %v1539 = vpop.f32.mrb[0].mxu0
      %1540 = vmatprep.mubr.f32.mxu0 %v664
      %1541 = vmatmul.mubr.f32.gmra.mrb[0].mxu0 %v903
      %v1542 = vpop.f32.mrb[0].mxu0
      %v1543 = vadd.f32 %v1318, %v1542
      %v1544 = vpop.f32.mrb[0].mxu0
      %1545 = vmatprep.mubr.f32.mxu0 %v665
      %1546 = vmatmul.mubr.f32.gmra.mrb[0].mxu0 %v905
      %v1547 = vpop.f32.mrb[0].mxu0
      %v1548 = vadd.f32 %v1323, %v1547
      %v1549 = vpop.f32.mrb[0].mxu0
      %1550 = vmatprep.mubr.f32.mxu0 %v667
      %1551 = vmatmul.mubr.f32.gmra.mrb[0].mxu0 %v908
      %v1552 = vpop.f32.mrb[0].mxu0
      %v1553 = vadd.f32 %v1328, %v1552
      %v1554 = vpop.f32.mrb[0].mxu0
      %1555 = vmatprep.mubr.f32.mxu0 %v668
      %1556 = vmatmul.mubr.f32.gmra.mrb[0].mxu0 %v910
      %v1557 = vpop.f32.mrb[0].mxu0
      %v1558 = vadd.f32 %v1333, %v1557
      %v1559 = vpop.f32.mrb[0].mxu0
      %1560 = vmatprep.mubr.f32.mxu0 %v670
      %1561 = vmatmul.mubr.f32.gmra.mrb[0].mxu0 %v913
      %v1562 = vpop.f32.mrb[0].mxu0
      %v1563 = vadd.f32 %v1338, %v1562
      %v1564 = vpop.f32.mrb[0].mxu0
      %1565 = vmatprep.mubr.f32.mxu0 %v671
      %1566 = vmatmul.mubr.f32.gmra.mrb[0].mxu0 %v915
      %v1567 = vpop.f32.mrb[0].mxu0
      %v1568 = vadd.f32 %v1343, %v1567
      %v1569 = vpop.f32.mrb[0].mxu0
      %1570 = vmatprep.mubr.f32.mxu0 %v673
      %1571 = vmatmul.mubr.f32.gmra.mrb[0].mxu0 %v918
      %v1572 = vpop.f32.mrb[0].mxu0
      %v1573 = vadd.f32 %v1348, %v1572
      %v1574 = vpop.f32.mrb[0].mxu0
      %1575 = vmatprep.mubr.f32.mxu0 %v674
      %1576 = vmatmul.mubr.f32.gmra.mrb[0].mxu0 %v920
      %v1577 = vpop.f32.mrb[0].mxu0
      %v1578 = vadd.f32 %v1353, %v1577
      %v1579 = vpop.f32.mrb[0].mxu0
      %1580 = vdwg.mxu0
      %1581 = vmatprep.subr.mxu0 0.0
      %1582 = vmatpush1.msra.mxu0 %v1051
      %1583 = vmatprep.subr.mxu0 0.0
      %1584 = vmatpush1.msra.mxu0 %v1052
      %1585 = vmatprep.subr.mxu0 0.0
      %1586 = vmatpush1.msra.mxu0 %v1053
      %1587 = vmatprep.subr.mxu0 0.0
      %1588 = vmatpush1.msra.mxu0 %v1054
      %1589 = vmatprep.subr.mxu0 0.0
      %1590 = vmatpush1.msra.mxu0 %v1055
      %1591 = vmatprep.subr.mxu0 0.0
      %1592 = vmatpush1.msra.mxu0 %v1056
      %1593 = vmatprep.subr.mxu0 0.0
      %1594 = vmatpush1.msra.mxu0 %v1057
      %1595 = vmatprep.subr.mxu0 0.0
      %1596 = vmatpush1.msra.mxu0 %v1058
      %1597 = vmatprep.subr.mxu0 0.0
      %1598 = vmatpush1.msra.mxu0 %v1059
      %1599 = vmatprep.subr.mxu0 0.0
      %1600 = vmatpush1.msra.mxu0 %v1060
      %1601 = vmatprep.subr.mxu0 0.0
      %1602 = vmatpush1.msra.mxu0 %v1061
      %1603 = vmatprep.subr.mxu0 0.0
      %1604 = vmatpush1.msra.mxu0 %v1062
      %1605 = vmatprep.subr.mxu0 0.0
      %1606 = vmatpush1.msra.mxu0 %v1063
      %1607 = vmatprep.subr.mxu0 0.0
      %1608 = vmatpush1.msra.mxu0 %v1064
      %1609 = vmatprep.subr.mxu0 0.0
      %1610 = vmatpush1.msra.mxu0 %v1065
      %1611 = vmatprep.subr.mxu0 0.0
      %1612 = vmatpush1.msra.mxu0 %v1066
      %1613 = vmatprep.subr.mxu0 0.0
      %1614 = vmatpush1.msra.mxu0 %v1067
      %1615 = vmatprep.subr.mxu0 0.0
      %1616 = vmatpush1.msra.mxu0 %v1068
      %1617 = vmatprep.subr.mxu0 0.0
      %1618 = vmatpush1.msra.mxu0 %v1069
      %1619 = vmatprep.subr.mxu0 0.0
      %1620 = vmatpush1.msra.mxu0 %v1070
      %1621 = vmatprep.subr.mxu0 0.0
      %1622 = vmatpush1.msra.mxu0 %v1071
      %1623 = vmatprep.subr.mxu0 0.0
      %1624 = vmatpush1.msra.mxu0 %v1072
      %1625 = vmatprep.subr.mxu0 0.0
      %1626 = vmatpush1.msra.mxu0 %v1073
      %1627 = vmatprep.subr.mxu0 0.0
      %1628 = vmatpush1.msra.mxu0 %v1074
      %1629 = vmatprep.subr.mxu0 0.0
      %1630 = vmatpush1.msra.mxu0 %v1075
      %1631 = vmatprep.subr.mxu0 0.0
      %1632 = vmatpush1.msra.mxu0 %v1076
      %1633 = vmatprep.subr.mxu0 0.0
      %1634 = vmatpush1.msra.mxu0 %v1077
      %1635 = vmatprep.subr.mxu0 0.0
      %1636 = vmatpush1.msra.mxu0 %v1078
      %1637 = vmatprep.subr.mxu0 0.0
      %1638 = vmatpush1.msra.mxu0 %v1079
      %1639 = vmatprep.subr.mxu0 0.0
      %1640 = vmatpush1.msra.mxu0 %v1080
      %1641 = vmatprep.subr.mxu0 0.0
      %1642 = vmatpush1.msra.mxu0 %v1081
      %1643 = vmatprep.subr.mxu0 0.0
      %1644 = vmatpush1.msra.mxu0 %v1082
      %1645 = vmatprep.mubr.f32.mxu0 %v848
      %1646 = vmatmul.mubr.f32.gmra.mrb[0].mxu0 %v735
      %v1647 = vpop.f32.mrb[0].mxu0
      %v1648 = vadd.f32 %v1423, %v1647
      %v1649 = vpop.f32.mrb[0].mxu0
      %1650 = vmatprep.mubr.f32.mxu0 %v850
      %1651 = vmatmul.mubr.f32.gmra.mrb[0].mxu0 %v737
      %v1652 = vpop.f32.mrb[0].mxu0
      %v1653 = vadd.f32 %v1428, %v1652
      %v1654 = vpop.f32.mrb[0].mxu0
      %1655 = vmatprep.mubr.f32.mxu0 %v853
      %1656 = vmatmul.mubr.f32.gmra.mrb[0].mxu0 %v740
      %v1657 = vpop.f32.mrb[0].mxu0
      %v1658 = vadd.f32 %v1433, %v1657
      %v1659 = vpop.f32.mrb[0].mxu0
      %1660 = vmatprep.mubr.f32.mxu0 %v855
      %1661 = vmatmul.mubr.f32.gmra.mrb[0].mxu0 %v742
      %v1662 = vpop.f32.mrb[0].mxu0
      %v1663 = vadd.f32 %v1438, %v1662
      %v1664 = vpop.f32.mrb[0].mxu0
      %1665 = vmatprep.mubr.f32.mxu0 %v858
      %1666 = vmatmul.mubr.f32.gmra.mrb[0].mxu0 %v745
      %v1667 = vpop.f32.mrb[0].mxu0
      %v1668 = vadd.f32 %v1443, %v1667
      %v1669 = vpop.f32.mrb[0].mxu0
      %1670 = vmatprep.mubr.f32.mxu0 %v860
      %1671 = vmatmul.mubr.f32.gmra.mrb[0].mxu0 %v747
      %v1672 = vpop.f32.mrb[0].mxu0
      %v1673 = vadd.f32 %v1448, %v1672
      %v1674 = vpop.f32.mrb[0].mxu0
      %1675 = vmatprep.mubr.f32.mxu0 %v863
      %1676 = vmatmul.mubr.f32.gmra.mrb[0].mxu0 %v750
      %v1677 = vpop.f32.mrb[0].mxu0
      %v1678 = vadd.f32 %v1453, %v1677
      %v1679 = vpop.f32.mrb[0].mxu0
      %1680 = vmatprep.mubr.f32.mxu0 %v865
      %1681 = vmatmul.mubr.f32.gmra.mrb[0].mxu0 %v752
      %v1682 = vpop.f32.mrb[0].mxu0
      %v1683 = vadd.f32 %v1458, %v1682
      %v1684 = vpop.f32.mrb[0].mxu0
      %1685 = vmatprep.mubr.f32.mxu0 %v868
      %1686 = vmatmul.mubr.f32.gmra.mrb[0].mxu0 %v755
      %v1687 = vpop.f32.mrb[0].mxu0
      %v1688 = vadd.f32 %v1463, %v1687
      %v1689 = vpop.f32.mrb[0].mxu0
      %1690 = vmatprep.mubr.f32.mxu0 %v870
      %1691 = vmatmul.mubr.f32.gmra.mrb[0].mxu0 %v757
      %v1692 = vpop.f32.mrb[0].mxu0
      %v1693 = vadd.f32 %v1468, %v1692
      %v1694 = vpop.f32.mrb[0].mxu0
      %1695 = vmatprep.mubr.f32.mxu0 %v873
      %1696 = vmatmul.mubr.f32.gmra.mrb[0].mxu0 %v760
      %v1697 = vpop.f32.mrb[0].mxu0
      %v1698 = vadd.f32 %v1473, %v1697
      %v1699 = vpop.f32.mrb[0].mxu0
      %1700 = vmatprep.mubr.f32.mxu0 %v875
      %1701 = vmatmul.mubr.f32.gmra.mrb[0].mxu0 %v762
      %v1702 = vpop.f32.mrb[0].mxu0
      %v1703 = vadd.f32 %v1478, %v1702
      %v1704 = vpop.f32.mrb[0].mxu0
      %1705 = vmatprep.mubr.f32.mxu0 %v878
      %1706 = vmatmul.mubr.f32.gmra.mrb[0].mxu0 %v765
      %v1707 = vpop.f32.mrb[0].mxu0
      %v1708 = vadd.f32 %v1483, %v1707
      %v1709 = vpop.f32.mrb[0].mxu0
      %1710 = vmatprep.mubr.f32.mxu0 %v880
      %1711 = vmatmul.mubr.f32.gmra.mrb[0].mxu0 %v767
      %v1712 = vpop.f32.mrb[0].mxu0
      %v1713 = vadd.f32 %v1488, %v1712
      %v1714 = vpop.f32.mrb[0].mxu0
      %1715 = vmatprep.mubr.f32.mxu0 %v883
      %1716 = vmatmul.mubr.f32.gmra.mrb[0].mxu0 %v770
      %v1717 = vpop.f32.mrb[0].mxu0
      %v1718 = vadd.f32 %v1493, %v1717
      %v1719 = vpop.f32.mrb[0].mxu0
      %1720 = vmatprep.mubr.f32.mxu0 %v885
      %1721 = vmatmul.mubr.f32.gmra.mrb[0].mxu0 %v772
      %v1722 = vpop.f32.mrb[0].mxu0
      %v1723 = vadd.f32 %v1498, %v1722
      %v1724 = vpop.f32.mrb[0].mxu0
      %1725 = vmatprep.mubr.f32.mxu0 %v888
      %1726 = vmatmul.mubr.f32.gmra.mrb[0].mxu0 %v775
      %v1727 = vpop.f32.mrb[0].mxu0
      %v1728 = vadd.f32 %v1503, %v1727
      %v1729 = vpop.f32.mrb[0].mxu0
      %1730 = vmatprep.mubr.f32.mxu0 %v890
      %1731 = vmatmul.mubr.f32.gmra.mrb[0].mxu0 %v777
      %v1732 = vpop.f32.mrb[0].mxu0
      %v1733 = vadd.f32 %v1508, %v1732
      %v1734 = vpop.f32.mrb[0].mxu0
      %1735 = vmatprep.mubr.f32.mxu0 %v893
      %1736 = vmatmul.mubr.f32.gmra.mrb[0].mxu0 %v780
      %v1737 = vpop.f32.mrb[0].mxu0
      %v1738 = vadd.f32 %v1513, %v1737
      %v1739 = vpop.f32.mrb[0].mxu0
      %1740 = vmatprep.mubr.f32.mxu0 %v895
      %1741 = vmatmul.mubr.f32.gmra.mrb[0].mxu0 %v782
      %v1742 = vpop.f32.mrb[0].mxu0
      %v1743 = vadd.f32 %v1518, %v1742
      %v1744 = vpop.f32.mrb[0].mxu0
      %1745 = vmatprep.mubr.f32.mxu0 %v898
      %1746 = vmatmul.mubr.f32.gmra.mrb[0].mxu0 %v785
      %v1747 = vpop.f32.mrb[0].mxu0
      %v1748 = vadd.f32 %v1523, %v1747
      %v1749 = vpop.f32.mrb[0].mxu0
      %1750 = vmatprep.mubr.f32.mxu0 %v900
      %1751 = vmatmul.mubr.f32.gmra.mrb[0].mxu0 %v787
      %v1752 = vpop.f32.mrb[0].mxu0
      %v1753 = vadd.f32 %v1528, %v1752
      %v1754 = vpop.f32.mrb[0].mxu0
      %1755 = vmatprep.mubr.f32.mxu0 %v903
      %1756 = vmatmul.mubr.f32.gmra.mrb[0].mxu0 %v790
      %v1757 = vpop.f32.mrb[0].mxu0
      %v1758 = vadd.f32 %v1533, %v1757
      %v1759 = vpop.f32.mrb[0].mxu0
      %1760 = vmatprep.mubr.f32.mxu0 %v905
      %1761 = vmatmul.mubr.f32.gmra.mrb[0].mxu0 %v792
      %v1762 = vpop.f32.mrb[0].mxu0
      %v1763 = vadd.f32 %v1538, %v1762
      %v1764 = vpop.f32.mrb[0].mxu0
      %1765 = vmatprep.mubr.f32.mxu0 %v908
      %1766 = vmatmul.mubr.f32.gmra.mrb[0].mxu0 %v795
      %v1767 = vpop.f32.mrb[0].mxu0
      %v1768 = vadd.f32 %v1543, %v1767
      %v1769 = vpop.f32.mrb[0].mxu0
      %1770 = vmatprep.mubr.f32.mxu0 %v910
      %1771 = vmatmul.mubr.f32.gmra.mrb[0].mxu0 %v797
      %v1772 = vpop.f32.mrb[0].mxu0
      %v1773 = vadd.f32 %v1548, %v1772
      %v1774 = vpop.f32.mrb[0].mxu0
      %1775 = vmatprep.mubr.f32.mxu0 %v913
      %1776 = vmatmul.mubr.f32.gmra.mrb[0].mxu0 %v800
      %v1777 = vpop.f32.mrb[0].mxu0
      %v1778 = vadd.f32 %v1553, %v1777
      %v1779 = vpop.f32.mrb[0].mxu0
      %1780 = vmatprep.mubr.f32.mxu0 %v915
      %1781 = vmatmul.mubr.f32.gmra.mrb[0].mxu0 %v802
      %v1782 = vpop.f32.mrb[0].mxu0
      %v1783 = vadd.f32 %v1558, %v1782
      %v1784 = vpop.f32.mrb[0].mxu0
      %1785 = vmatprep.mubr.f32.mxu0 %v918
      %1786 = vmatmul.mubr.f32.gmra.mrb[0].mxu0 %v805
      %v1787 = vpop.f32.mrb[0].mxu0
      %v1788 = vadd.f32 %v1563, %v1787
      %v1789 = vpop.f32.mrb[0].mxu0
      %1790 = vmatprep.mubr.f32.mxu0 %v920
      %1791 = vmatmul.mubr.f32.gmra.mrb[0].mxu0 %v807
      %v1792 = vpop.f32.mrb[0].mxu0
      %v1793 = vadd.f32 %v1568, %v1792
      %v1794 = vpop.f32.mrb[0].mxu0
      %1795 = vmatprep.mubr.f32.mxu0 %v965
      %1796 = vmatmul.mubr.f32.gmra.mrb[0].mxu0 %v958
      %v1797 = vpop.f32.mrb[0].mxu0
      %v1798 = vadd.f32 %v1573, %v1797
      %v1799 = vpop.f32.mrb[0].mxu0
      %1800 = vmatprep.mubr.f32.mxu0 %v967
      %1801 = vmatmul.mubr.f32.gmra.mrb[0].mxu0 %v960
      %v1802 = vpop.f32.mrb[0].mxu0
      %v1803 = vadd.f32 %v1578, %v1802
      %v1804 = vpop.f32.mrb[0].mxu0
      %1805 = vdwg.mxu0
      %1806 = vmatprep.subr.mxu0 0.0
      %1807 = vmatpush1.msra.mxu0 %v1083
      %1808 = vmatprep.subr.mxu0 0.0
      %1809 = vmatpush1.msra.mxu0 %v1084
      %1810 = vmatprep.subr.mxu0 0.0
      %1811 = vmatpush1.msra.mxu0 %v1085
      %1812 = vmatprep.subr.mxu0 0.0
      %1813 = vmatpush1.msra.mxu0 %v1086
      %1814 = vmatprep.subr.mxu0 0.0
      %1815 = vmatpush1.msra.mxu0 %v1087
      %1816 = vmatprep.subr.mxu0 0.0
      %1817 = vmatpush1.msra.mxu0 %v1088
      %1818 = vmatprep.subr.mxu0 0.0
      %1819 = vmatpush1.msra.mxu0 %v1089
      %1820 = vmatprep.subr.mxu0 0.0
      %1821 = vmatpush1.msra.mxu0 %v1090
      %1822 = vmatprep.subr.mxu0 0.0
      %1823 = vmatpush1.msra.mxu0 %v1091
      %1824 = vmatprep.subr.mxu0 0.0
      %1825 = vmatpush1.msra.mxu0 %v1092
      %1826 = vmatprep.subr.mxu0 0.0
      %1827 = vmatpush1.msra.mxu0 %v1093
      %1828 = vmatprep.subr.mxu0 0.0
      %1829 = vmatpush1.msra.mxu0 %v1094
      %1830 = vmatprep.subr.mxu0 0.0
      %1831 = vmatpush1.msra.mxu0 %v1095
      %1832 = vmatprep.subr.mxu0 0.0
      %1833 = vmatpush1.msra.mxu0 %v1096
      %1834 = vmatprep.subr.mxu0 0.0
      %1835 = vmatpush1.msra.mxu0 %v1097
      %1836 = vmatprep.subr.mxu0 0.0
      %1837 = vmatpush1.msra.mxu0 %v1098
      %1838 = vmatprep.subr.mxu0 0.0
      %1839 = vmatpush1.msra.mxu0 %v1099
      %1840 = vmatprep.subr.mxu0 0.0
      %1841 = vmatpush1.msra.mxu0 %v1100
      %1842 = vmatprep.subr.mxu0 0.0
      %1843 = vmatpush1.msra.mxu0 %v1101
      %1844 = vmatprep.subr.mxu0 0.0
      %1845 = vmatpush1.msra.mxu0 %v1102
      %1846 = vmatprep.subr.mxu0 0.0
      %1847 = vmatpush1.msra.mxu0 %v1103
      %1848 = vmatprep.subr.mxu0 0.0
      %1849 = vmatpush1.msra.mxu0 %v1104
      %1850 = vmatprep.subr.mxu0 0.0
      %1851 = vmatpush1.msra.mxu0 %v1105
      %1852 = vmatprep.subr.mxu0 0.0
      %1853 = vmatpush1.msra.mxu0 %v1106
      %1854 = vmatprep.subr.mxu0 0.0
      %1855 = vmatpush1.msra.mxu0 %v1107
      %1856 = vmatprep.subr.mxu0 0.0
      %1857 = vmatpush1.msra.mxu0 %v1108
      %1858 = vmatprep.subr.mxu0 0.0
      %1859 = vmatpush1.msra.mxu0 %v1109
      %1860 = vmatprep.subr.mxu0 0.0
      %1861 = vmatpush1.msra.mxu0 %v1110
      %1862 = vmatprep.subr.mxu0 0.0
      %1863 = vmatpush1.msra.mxu0 %v1111
      %1864 = vmatprep.subr.mxu0 0.0
      %1865 = vmatpush1.msra.mxu0 %v1112
      %1866 = vmatprep.subr.mxu0 0.0
      %1867 = vmatpush1.msra.mxu0 %v1113
      %1868 = vmatprep.subr.mxu0 0.0
      %1869 = vmatpush1.msra.mxu0 %v1114
      %1870 = vmatprep.mubr.f32.mxu0 %v740
      %1871 = vmatmul.mubr.f32.gmra.mrb[0].mxu0 %v631
      %v1872 = vpop.f32.mrb[0].mxu0
      %v1873 = vadd.f32 %v1648, %v1872
      %v1874 = vpop.f32.mrb[0].mxu0
      %1875 = vmatprep.mubr.f32.mxu0 %v742
      %1876 = vmatmul.mubr.f32.gmra.mrb[0].mxu0 %v632
      %v1877 = vpop.f32.mrb[0].mxu0
      %v1878 = vadd.f32 %v1653, %v1877
      %v1879 = vpop.f32.mrb[0].mxu0
      %1880 = vmatprep.mubr.f32.mxu0 %v745
      %1881 = vmatmul.mubr.f32.gmra.mrb[0].mxu0 %v634
      %v1882 = vpop.f32.mrb[0].mxu0
      %v1883 = vadd.f32 %v1658, %v1882
      %v1884 = vpop.f32.mrb[0].mxu0
      %1885 = vmatprep.mubr.f32.mxu0 %v747
      %1886 = vmatmul.mubr.f32.gmra.mrb[0].mxu0 %v635
      %v1887 = vpop.f32.mrb[0].mxu0
      %v1888 = vadd.f32 %v1663, %v1887
      %v1889 = vpop.f32.mrb[0].mxu0
      %1890 = vmatprep.mubr.f32.mxu0 %v750
      %1891 = vmatmul.mubr.f32.gmra.mrb[0].mxu0 %v637
      %v1892 = vpop.f32.mrb[0].mxu0
      %v1893 = vadd.f32 %v1668, %v1892
      %v1894 = vpop.f32.mrb[0].mxu0
      %1895 = vmatprep.mubr.f32.mxu0 %v752
      %1896 = vmatmul.mubr.f32.gmra.mrb[0].mxu0 %v638
      %v1897 = vpop.f32.mrb[0].mxu0
      %v1898 = vadd.f32 %v1673, %v1897
      %v1899 = vpop.f32.mrb[0].mxu0
      %1900 = vmatprep.mubr.f32.mxu0 %v755
      %1901 = vmatmul.mubr.f32.gmra.mrb[0].mxu0 %v640
      %v1902 = vpop.f32.mrb[0].mxu0
      %v1903 = vadd.f32 %v1678, %v1902
      %v1904 = vpop.f32.mrb[0].mxu0
      %1905 = vmatprep.mubr.f32.mxu0 %v757
      %1906 = vmatmul.mubr.f32.gmra.mrb[0].mxu0 %v641
      %v1907 = vpop.f32.mrb[0].mxu0
      %v1908 = vadd.f32 %v1683, %v1907
      %v1909 = vpop.f32.mrb[0].mxu0
      %1910 = vmatprep.mubr.f32.mxu0 %v760
      %1911 = vmatmul.mubr.f32.gmra.mrb[0].mxu0 %v643
      %v1912 = vpop.f32.mrb[0].mxu0
      %v1913 = vadd.f32 %v1688, %v1912
      %v1914 = vpop.f32.mrb[0].mxu0
      %1915 = vmatprep.mubr.f32.mxu0 %v762
      %1916 = vmatmul.mubr.f32.gmra.mrb[0].mxu0 %v644
      %v1917 = vpop.f32.mrb[0].mxu0
      %v1918 = vadd.f32 %v1693, %v1917
      %v1919 = vpop.f32.mrb[0].mxu0
      %1920 = vmatprep.mubr.f32.mxu0 %v765
      %1921 = vmatmul.mubr.f32.gmra.mrb[0].mxu0 %v646
      %v1922 = vpop.f32.mrb[0].mxu0
      %v1923 = vadd.f32 %v1698, %v1922
      %v1924 = vpop.f32.mrb[0].mxu0
      %1925 = vmatprep.mubr.f32.mxu0 %v767
      %1926 = vmatmul.mubr.f32.gmra.mrb[0].mxu0 %v647
      %v1927 = vpop.f32.mrb[0].mxu0
      %v1928 = vadd.f32 %v1703, %v1927
      %v1929 = vpop.f32.mrb[0].mxu0
      %1930 = vmatprep.mubr.f32.mxu0 %v770
      %1931 = vmatmul.mubr.f32.gmra.mrb[0].mxu0 %v649
      %v1932 = vpop.f32.mrb[0].mxu0
      %v1933 = vadd.f32 %v1708, %v1932
      %v1934 = vpop.f32.mrb[0].mxu0
      %1935 = vmatprep.mubr.f32.mxu0 %v772
      %1936 = vmatmul.mubr.f32.gmra.mrb[0].mxu0 %v650
      %v1937 = vpop.f32.mrb[0].mxu0
      %v1938 = vadd.f32 %v1713, %v1937
      %v1939 = vpop.f32.mrb[0].mxu0
      %1940 = vmatprep.mubr.f32.mxu0 %v775
      %1941 = vmatmul.mubr.f32.gmra.mrb[0].mxu0 %v652
      %v1942 = vpop.f32.mrb[0].mxu0
      %v1943 = vadd.f32 %v1718, %v1942
      %v1944 = vpop.f32.mrb[0].mxu0
      %1945 = vmatprep.mubr.f32.mxu0 %v777
      %1946 = vmatmul.mubr.f32.gmra.mrb[0].mxu0 %v653
      %v1947 = vpop.f32.mrb[0].mxu0
      %v1948 = vadd.f32 %v1723, %v1947
      %v1949 = vpop.f32.mrb[0].mxu0
      %1950 = vmatprep.mubr.f32.mxu0 %v780
      %1951 = vmatmul.mubr.f32.gmra.mrb[0].mxu0 %v655
      %v1952 = vpop.f32.mrb[0].mxu0
      %v1953 = vadd.f32 %v1728, %v1952
      %v1954 = vpop.f32.mrb[0].mxu0
      %1955 = vmatprep.mubr.f32.mxu0 %v782
      %1956 = vmatmul.mubr.f32.gmra.mrb[0].mxu0 %v656
      %v1957 = vpop.f32.mrb[0].mxu0
      %v1958 = vadd.f32 %v1733, %v1957
      %v1959 = vpop.f32.mrb[0].mxu0
      %1960 = vmatprep.mubr.f32.mxu0 %v785
      %1961 = vmatmul.mubr.f32.gmra.mrb[0].mxu0 %v658
      %v1962 = vpop.f32.mrb[0].mxu0
      %v1963 = vadd.f32 %v1738, %v1962
      %v1964 = vpop.f32.mrb[0].mxu0
      %1965 = vmatprep.mubr.f32.mxu0 %v787
      %1966 = vmatmul.mubr.f32.gmra.mrb[0].mxu0 %v659
      %v1967 = vpop.f32.mrb[0].mxu0
      %v1968 = vadd.f32 %v1743, %v1967
      %v1969 = vpop.f32.mrb[0].mxu0
      %1970 = vmatprep.mubr.f32.mxu0 %v790
      %1971 = vmatmul.mubr.f32.gmra.mrb[0].mxu0 %v661
      %v1972 = vpop.f32.mrb[0].mxu0
      %v1973 = vadd.f32 %v1748, %v1972
      %v1974 = vpop.f32.mrb[0].mxu0
      %1975 = vmatprep.mubr.f32.mxu0 %v792
      %1976 = vmatmul.mubr.f32.gmra.mrb[0].mxu0 %v662
      %v1977 = vpop.f32.mrb[0].mxu0
      %v1978 = vadd.f32 %v1753, %v1977
      %v1979 = vpop.f32.mrb[0].mxu0
      %1980 = vmatprep.mubr.f32.mxu0 %v795
      %1981 = vmatmul.mubr.f32.gmra.mrb[0].mxu0 %v664
      %v1982 = vpop.f32.mrb[0].mxu0
      %v1983 = vadd.f32 %v1758, %v1982
      %v1984 = vpop.f32.mrb[0].mxu0
      %1985 = vmatprep.mubr.f32.mxu0 %v797
      %1986 = vmatmul.mubr.f32.gmra.mrb[0].mxu0 %v665
      %v1987 = vpop.f32.mrb[0].mxu0
      %v1988 = vadd.f32 %v1763, %v1987
      %v1989 = vpop.f32.mrb[0].mxu0
      %1990 = vmatprep.mubr.f32.mxu0 %v800
      %1991 = vmatmul.mubr.f32.gmra.mrb[0].mxu0 %v667
      %v1992 = vpop.f32.mrb[0].mxu0
      %v1993 = vadd.f32 %v1768, %v1992
      %v1994 = vpop.f32.mrb[0].mxu0
      %1995 = vmatprep.mubr.f32.mxu0 %v802
      %1996 = vmatmul.mubr.f32.gmra.mrb[0].mxu0 %v668
      %v1997 = vpop.f32.mrb[0].mxu0
      %v1998 = vadd.f32 %v1773, %v1997
      %v1999 = vpop.f32.mrb[0].mxu0
      %2000 = vmatprep.mubr.f32.mxu0 %v805
      %2001 = vmatmul.mubr.f32.gmra.mrb[0].mxu0 %v670
      %v2002 = vpop.f32.mrb[0].mxu0
      %v2003 = vadd.f32 %v1778, %v2002
      %v2004 = vpop.f32.mrb[0].mxu0
      %2005 = vmatprep.mubr.f32.mxu0 %v807
      %2006 = vmatmul.mubr.f32.gmra.mrb[0].mxu0 %v671
      %v2007 = vpop.f32.mrb[0].mxu0
      %v2008 = vadd.f32 %v1783, %v2007
      %v2009 = vpop.f32.mrb[0].mxu0
      %2010 = vmatprep.mubr.f32.mxu0 %v958
      %2011 = vmatmul.mubr.f32.gmra.mrb[0].mxu0 %v673
      %v2012 = vpop.f32.mrb[0].mxu0
      %v2013 = vadd.f32 %v1788, %v2012
      %v2014 = vpop.f32.mrb[0].mxu0
      %2015 = vmatprep.mubr.f32.mxu0 %v960
      %2016 = vmatmul.mubr.f32.gmra.mrb[0].mxu0 %v674
      %v2017 = vpop.f32.mrb[0].mxu0
      %v2018 = vadd.f32 %v1793, %v2017
      %v2019 = vpop.f32.mrb[0].mxu0
      %2020 = vmatprep.mubr.f32.mxu0 %v975
      %2021 = vmatmul.mubr.f32.gmra.mrb[0].mxu0 %v676
      %v2022 = vpop.f32.mrb[0].mxu0
      %v2023 = vadd.f32 %v1798, %v2022
      %v2024 = vpop.f32.mrb[0].mxu0
      %2025 = vmatprep.mubr.f32.mxu0 %v977
      %2026 = vmatmul.mubr.f32.gmra.mrb[0].mxu0 %v677
      %v2027 = vpop.f32.mrb[0].mxu0
      %v2028 = vadd.f32 %v1803, %v2027
      %v2029 = vpop.f32.mrb[0].mxu0
      %2030 = vdwg.mxu0
      %2031 = vmatprep.subr.mxu0 0.0
      %2032 = vmatpush1.msra.mxu0 %v1115
      %2033 = vmatprep.subr.mxu0 0.0
      %2034 = vmatpush1.msra.mxu0 %v1116
      %2035 = vmatprep.subr.mxu0 0.0
      %2036 = vmatpush1.msra.mxu0 %v1117
      %2037 = vmatprep.subr.mxu0 0.0
      %2038 = vmatpush1.msra.mxu0 %v1118
      %2039 = vmatprep.subr.mxu0 0.0
      %2040 = vmatpush1.msra.mxu0 %v1119
      %2041 = vmatprep.subr.mxu0 0.0
      %2042 = vmatpush1.msra.mxu0 %v1120
      %2043 = vmatprep.subr.mxu0 0.0
      %2044 = vmatpush1.msra.mxu0 %v1121
      %2045 = vmatprep.subr.mxu0 0.0
      %2046 = vmatpush1.msra.mxu0 %v1122
      %2047 = vmatprep.subr.mxu0 0.0
      %2048 = vmatpush1.msra.mxu0 %v1123
      %2049 = vmatprep.subr.mxu0 0.0
      %2050 = vmatpush1.msra.mxu0 %v1124
      %2051 = vmatprep.subr.mxu0 0.0
      %2052 = vmatpush1.msra.mxu0 %v1125
      %2053 = vmatprep.subr.mxu0 0.0
      %2054 = vmatpush1.msra.mxu0 %v1126
      %2055 = vmatprep.subr.mxu0 0.0
      %2056 = vmatpush1.msra.mxu0 %v1127
      %2057 = vmatprep.subr.mxu0 0.0
      %2058 = vmatpush1.msra.mxu0 %v1128
      %2059 = vmatprep.subr.mxu0 0.0
      %2060 = vmatpush1.msra.mxu0 %v1129
      %2061 = vmatprep.subr.mxu0 0.0
      %2062 = vmatpush1.msra.mxu0 %v1130
      %2063 = vmatprep.subr.mxu0 0.0
      %2064 = vmatpush1.msra.mxu0 0.0
      %2065 = vmatprep.subr.mxu0 0.0
      %2066 = vmatpush1.msra.mxu0 0.0
      %2067 = vmatprep.subr.mxu0 0.0
      %2068 = vmatpush1.msra.mxu0 0.0
      %2069 = vmatprep.subr.mxu0 0.0
      %2070 = vmatpush1.msra.mxu0 0.0
      %2071 = vmatprep.subr.mxu0 0.0
      %2072 = vmatpush1.msra.mxu0 0.0
      %2073 = vmatprep.subr.mxu0 0.0
      %2074 = vmatpush1.msra.mxu0 0.0
      %2075 = vmatprep.subr.mxu0 0.0
      %2076 = vmatpush1.msra.mxu0 0.0
      %2077 = vmatprep.subr.mxu0 0.0
      %2078 = vmatpush1.msra.mxu0 0.0
      %2079 = vmatprep.subr.mxu0 0.0
      %2080 = vmatpush1.msra.mxu0 0.0
      %2081 = vmatprep.subr.mxu0 0.0
      %2082 = vmatpush1.msra.mxu0 0.0
      %2083 = vmatprep.subr.mxu0 0.0
      %2084 = vmatpush1.msra.mxu0 0.0
      %2085 = vmatprep.subr.mxu0 0.0
      %2086 = vmatpush1.msra.mxu0 0.0
      %2087 = vmatprep.subr.mxu0 0.0
      %2088 = vmatpush1.msra.mxu0 0.0
      %2089 = vmatprep.subr.mxu0 0.0
      %2090 = vmatpush1.msra.mxu0 0.0
      %2091 = vmatprep.subr.mxu0 0.0
      %2092 = vmatpush1.msra.mxu0 0.0
      %2093 = vmatprep.subr.mxu0 0.0
      %2094 = vmatpush1.msra.mxu0 0.0
      %2095 = vmatprep.mubr.f32.mxu0 0.0
      %2096 = vmatmul.mubr.f32.gmra.mrb[0].mxu0 %v853
      %v2097 = vpop.f32.mrb[0].mxu0
      %v2098 = vadd.f32 %v1873, %v2097
      %v2099 = vpop.f32.mrb[0].mxu0
      %2100 = vmatprep.mubr.f32.mxu0 0.0
      %2101 = vmatmul.mubr.f32.gmra.mrb[0].mxu0 %v855
      %v2102 = vpop.f32.mrb[0].mxu0
      %v2103 = vadd.f32 %v1878, %v2102
      %v2104 = vpop.f32.mrb[0].mxu0
      %2105 = vmatprep.mubr.f32.mxu0 0.0
      %2106 = vmatmul.mubr.f32.gmra.mrb[0].mxu0 %v858
      %v2107 = vpop.f32.mrb[0].mxu0
      %v2108 = vadd.f32 %v1883, %v2107
      %v2109 = vpop.f32.mrb[0].mxu0
      %2110 = vmatprep.mubr.f32.mxu0 0.0
      %2111 = vmatmul.mubr.f32.gmra.mrb[0].mxu0 %v860
      %v2112 = vpop.f32.mrb[0].mxu0
      %v2113 = vadd.f32 %v1888, %v2112
      %v2114 = vpop.f32.mrb[0].mxu0
      %2115 = vmatprep.mubr.f32.mxu0 0.0
      %2116 = vmatmul.mubr.f32.gmra.mrb[0].mxu0 %v863
      %v2117 = vpop.f32.mrb[0].mxu0
      %v2118 = vadd.f32 %v1893, %v2117
      %v2119 = vpop.f32.mrb[0].mxu0
      %2120 = vmatprep.mubr.f32.mxu0 0.0
      %2121 = vmatmul.mubr.f32.gmra.mrb[0].mxu0 %v865
      %v2122 = vpop.f32.mrb[0].mxu0
      %v2123 = vadd.f32 %v1898, %v2122
      %v2124 = vpop.f32.mrb[0].mxu0
      %2125 = vmatprep.mubr.f32.mxu0 0.0
      %2126 = vmatmul.mubr.f32.gmra.mrb[0].mxu0 %v868
      %v2127 = vpop.f32.mrb[0].mxu0
      %v2128 = vadd.f32 %v1903, %v2127
      %v2129 = vpop.f32.mrb[0].mxu0
      %2130 = vmatprep.mubr.f32.mxu0 0.0
      %2131 = vmatmul.mubr.f32.gmra.mrb[0].mxu0 %v870
      %v2132 = vpop.f32.mrb[0].mxu0
      %v2133 = vadd.f32 %v1908, %v2132
      %v2134 = vpop.f32.mrb[0].mxu0
      %2135 = vmatprep.mubr.f32.mxu0 0.0
      %2136 = vmatmul.mubr.f32.gmra.mrb[0].mxu0 %v873
      %v2137 = vpop.f32.mrb[0].mxu0
      %v2138 = vadd.f32 %v1913, %v2137
      %v2139 = vpop.f32.mrb[0].mxu0
      %2140 = vmatprep.mubr.f32.mxu0 0.0
      %2141 = vmatmul.mubr.f32.gmra.mrb[0].mxu0 %v875
      %v2142 = vpop.f32.mrb[0].mxu0
      %v2143 = vadd.f32 %v1918, %v2142
      %v2144 = vpop.f32.mrb[0].mxu0
      %2145 = vmatprep.mubr.f32.mxu0 0.0
      %2146 = vmatmul.mubr.f32.gmra.mrb[0].mxu0 %v878
      %v2147 = vpop.f32.mrb[0].mxu0
      %v2148 = vadd.f32 %v1923, %v2147
      %v2149 = vpop.f32.mrb[0].mxu0
      %2150 = vmatprep.mubr.f32.mxu0 0.0
      %2151 = vmatmul.mubr.f32.gmra.mrb[0].mxu0 %v880
      %v2152 = vpop.f32.mrb[0].mxu0
      %v2153 = vadd.f32 %v1928, %v2152
      %v2154 = vpop.f32.mrb[0].mxu0
      %2155 = vmatprep.mubr.f32.mxu0 0.0
      %2156 = vmatmul.mubr.f32.gmra.mrb[0].mxu0 %v883
      %v2157 = vpop.f32.mrb[0].mxu0
      %v2158 = vadd.f32 %v1933, %v2157
      %v2159 = vpop.f32.mrb[0].mxu0
      %2160 = vmatprep.mubr.f32.mxu0 0.0
      %2161 = vmatmul.mubr.f32.gmra.mrb[0].mxu0 %v885
      %v2162 = vpop.f32.mrb[0].mxu0
      %v2163 = vadd.f32 %v1938, %v2162
      %v2164 = vpop.f32.mrb[0].mxu0
      %2165 = vmatprep.mubr.f32.mxu0 0.0
      %2166 = vmatmul.mubr.f32.gmra.mrb[0].mxu0 %v888
      %v2167 = vpop.f32.mrb[0].mxu0
      %v2168 = vadd.f32 %v1943, %v2167
      %v2169 = vpop.f32.mrb[0].mxu0
      %2170 = vmatprep.mubr.f32.mxu0 0.0
      %2171 = vmatmul.mubr.f32.gmra.mrb[0].mxu0 %v890
      %v2172 = vpop.f32.mrb[0].mxu0
      %v2173 = vadd.f32 %v1948, %v2172
      %v2174 = vpop.f32.mrb[0].mxu0
      %2175 = vmatprep.mubr.f32.mxu0 0.0
      %2176 = vmatmul.mubr.f32.gmra.mrb[0].mxu0 %v893
      %v2177 = vpop.f32.mrb[0].mxu0
      %v2178 = vadd.f32 %v1953, %v2177
      %v2179 = vpop.f32.mrb[0].mxu0
      %2180 = vmatprep.mubr.f32.mxu0 0.0
      %2181 = vmatmul.mubr.f32.gmra.mrb[0].mxu0 %v895
      %v2182 = vpop.f32.mrb[0].mxu0
      %v2183 = vadd.f32 %v1958, %v2182
      %v2184 = vpop.f32.mrb[0].mxu0
      %2185 = vmatprep.mubr.f32.mxu0 0.0
      %2186 = vmatmul.mubr.f32.gmra.mrb[0].mxu0 %v898
      %v2187 = vpop.f32.mrb[0].mxu0
      %v2188 = vadd.f32 %v1963, %v2187
      %v2189 = vpop.f32.mrb[0].mxu0
      %2190 = vmatprep.mubr.f32.mxu0 0.0
      %2191 = vmatmul.mubr.f32.gmra.mrb[0].mxu0 %v900
      %v2192 = vpop.f32.mrb[0].mxu0
      %v2193 = vadd.f32 %v1968, %v2192
      %v2194 = vpop.f32.mrb[0].mxu0
      %2195 = vmatprep.mubr.f32.mxu0 0.0
      %2196 = vmatmul.mubr.f32.gmra.mrb[0].mxu0 %v903
      %v2197 = vpop.f32.mrb[0].mxu0
      %v2198 = vadd.f32 %v1973, %v2197
      %v2199 = vpop.f32.mrb[0].mxu0
      %2200 = vmatprep.mubr.f32.mxu0 0.0
      %2201 = vmatmul.mubr.f32.gmra.mrb[0].mxu0 %v905
      %v2202 = vpop.f32.mrb[0].mxu0
      %v2203 = vadd.f32 %v1978, %v2202
      %v2204 = vpop.f32.mrb[0].mxu0
      %2205 = vmatprep.mubr.f32.mxu0 0.0
      %2206 = vmatmul.mubr.f32.gmra.mrb[0].mxu0 %v908
      %v2207 = vpop.f32.mrb[0].mxu0
      %v2208 = vadd.f32 %v1983, %v2207
      %v2209 = vpop.f32.mrb[0].mxu0
      %2210 = vmatprep.mubr.f32.mxu0 0.0
      %2211 = vmatmul.mubr.f32.gmra.mrb[0].mxu0 %v910
      %v2212 = vpop.f32.mrb[0].mxu0
      %v2213 = vadd.f32 %v1988, %v2212
      %v2214 = vpop.f32.mrb[0].mxu0
      %2215 = vmatprep.mubr.f32.mxu0 0.0
      %2216 = vmatmul.mubr.f32.gmra.mrb[0].mxu0 %v913
      %v2217 = vpop.f32.mrb[0].mxu0
      %v2218 = vadd.f32 %v1993, %v2217
      %v2219 = vpop.f32.mrb[0].mxu0
      %2220 = vmatprep.mubr.f32.mxu0 0.0
      %2221 = vmatmul.mubr.f32.gmra.mrb[0].mxu0 %v915
      %v2222 = vpop.f32.mrb[0].mxu0
      %v2223 = vadd.f32 %v1998, %v2222
      %v2224 = vpop.f32.mrb[0].mxu0
      %2225 = vmatprep.mubr.f32.mxu0 0.0
      %2226 = vmatmul.mubr.f32.gmra.mrb[0].mxu0 %v918
      %v2227 = vpop.f32.mrb[0].mxu0
      %v2228 = vadd.f32 %v2003, %v2227
      %v2229 = vpop.f32.mrb[0].mxu0
      %2230 = vmatprep.mubr.f32.mxu0 0.0
      %2231 = vmatmul.mubr.f32.gmra.mrb[0].mxu0 %v920
      %v2232 = vpop.f32.mrb[0].mxu0
      %v2233 = vadd.f32 %v2008, %v2232
      %v2234 = vpop.f32.mrb[0].mxu0
      %2235 = vmatprep.mubr.f32.mxu0 0.0
      %2236 = vmatmul.mubr.f32.gmra.mrb[0].mxu0 %v965
      %v2237 = vpop.f32.mrb[0].mxu0
      %v2238 = vadd.f32 %v2013, %v2237
      %v2239 = vpop.f32.mrb[0].mxu0
      %2240 = vmatprep.mubr.f32.mxu0 0.0
      %2241 = vmatmul.mubr.f32.gmra.mrb[0].mxu0 %v967
      %v2242 = vpop.f32.mrb[0].mxu0
      %v2243 = vadd.f32 %v2018, %v2242
      %v2244 = vpop.f32.mrb[0].mxu0
      %2245 = vmatprep.mubr.f32.mxu0 0.0
      %2246 = vmatmul.mubr.f32.gmra.mrb[0].mxu0 %v982
      %v2247 = vpop.f32.mrb[0].mxu0
      %v2248 = vadd.f32 %v2023, %v2247
      %v2249 = vpop.f32.mrb[0].mxu0
      %2250 = vmatprep.mubr.f32.mxu0 0.0
      %2251 = vmatmul.mubr.f32.gmra.mrb[0].mxu0 %v984
      %v2252 = vpop.f32.mrb[0].mxu0
      %v2253 = vadd.f32 %v2028, %v2252
      %v2254 = vpop.f32.mrb[0].mxu0
      %2255 = vdwg.mxu0
      %v2256 = vadd.f32 %v2098, %v2103
      %v2257 = vadd.f32 %v2256, %v2108
      %v2258 = vadd.f32 %v2257, %v2113
      %v2259 = vadd.f32 %v2258, %v2118
      %v2260 = vadd.f32 %v2259, %v2123
      %v2261 = vadd.f32 %v2260, %v2128
      %v2262 = vadd.f32 %v2261, %v2133
      %v2263 = vadd.f32 %v2262, %v2138
      %v2264 = vadd.f32 %v2263, %v2143
      %v2265 = vadd.f32 %v2264, %v2148
      %v2266 = vadd.f32 %v2265, %v2153
      %v2267 = vadd.f32 %v2266, %v2158
      %v2268 = vadd.f32 %v2267, %v2163
      %v2269 = vadd.f32 %v2268, %v2168
      %v2270 = vadd.f32 %v2269, %v2173
      %v2271 = vadd.f32 %v2270, %v2178
      %v2272 = vadd.f32 %v2271, %v2183
      %v2273 = vadd.f32 %v2272, %v2188
      %v2274 = vadd.f32 %v2273, %v2193
      %v2275 = vadd.f32 %v2274, %v2198
      %v2276 = vadd.f32 %v2275, %v2203
      %v2277 = vadd.f32 %v2276, %v2208
      %v2278 = vadd.f32 %v2277, %v2213
      %v2279 = vadd.f32 %v2278, %v2218
      %v2280 = vadd.f32 %v2279, %v2223
      %v2281 = vadd.f32 %v2280, %v2228
      %v2282 = vadd.f32 %v2281, %v2233
      %v2283 = vadd.f32 %v2282, %v2238
      %v2284 = vadd.f32 %v2283, %v2243
      %v2285 = vadd.f32 %v2284, %v2248
      %v2286 = vadd.f32 %v2285, %v2253
      %v2287 = vrot.slane %v2286, 4
      %v2288 = vadd.f32 %v2286, %v2287
      %v2289 = vrot.slane %v2288, 2
      %v2290 = vadd.f32 %v2288, %v2289
      %v2291 = vrot.slane %v2290, 1
      %v2292 = vadd.f32 %v2290, %v2291
      %v2293 = vmul.f32 %v2292, 0.00390625
      %v2294 = vsub.f32 %v2098, %v2293
      %v2295 = vsub.f32 %v2103, %v2293
      %v2296 = vsub.f32 %v2108, %v2293
      %v2297 = vsub.f32 %v2113, %v2293
      %v2298 = vsub.f32 %v2118, %v2293
      %v2299 = vsub.f32 %v2123, %v2293
      %v2300 = vsub.f32 %v2128, %v2293
      %v2301 = vsub.f32 %v2133, %v2293
      %v2302 = vsub.f32 %v2138, %v2293
      %v2303 = vsub.f32 %v2143, %v2293
      %v2304 = vsub.f32 %v2148, %v2293
      %v2305 = vsub.f32 %v2153, %v2293
      %v2306 = vsub.f32 %v2158, %v2293
      %v2307 = vsub.f32 %v2163, %v2293
      %v2308 = vsub.f32 %v2168, %v2293
      %v2309 = vsub.f32 %v2173, %v2293
      %v2310 = vsub.f32 %v2178, %v2293
      %v2311 = vsub.f32 %v2183, %v2293
      %v2312 = vsub.f32 %v2188, %v2293
      %v2313 = vsub.f32 %v2193, %v2293
      %v2314 = vsub.f32 %v2198, %v2293
      %v2315 = vsub.f32 %v2203, %v2293
      %v2316 = vsub.f32 %v2208, %v2293
      %v2317 = vsub.f32 %v2213, %v2293
      %v2318 = vsub.f32 %v2218, %v2293
      %v2319 = vsub.f32 %v2223, %v2293
      %v2320 = vsub.f32 %v2228, %v2293
      %v2321 = vsub.f32 %v2233, %v2293
      %v2322 = vsub.f32 %v2238, %v2293
      %v2323 = vsub.f32 %v2243, %v2293
      %v2324 = vsub.f32 %v2248, %v2293
      %v2325 = vsub.f32 %v2253, %v2293
      %v2326 = vmul.f32 %v2294, %v2294
      %v2327 = vmul.f32 %v2295, %v2295
      %v2328 = vmul.f32 %v2296, %v2296
      %v2329 = vmul.f32 %v2297, %v2297
      %v2330 = vmul.f32 %v2298, %v2298
      %v2331 = vmul.f32 %v2299, %v2299
      %v2332 = vmul.f32 %v2300, %v2300
      %v2333 = vmul.f32 %v2301, %v2301
      %v2334 = vmul.f32 %v2302, %v2302
      %v2335 = vmul.f32 %v2303, %v2303
      %v2336 = vmul.f32 %v2304, %v2304
      %v2337 = vmul.f32 %v2305, %v2305
      %v2338 = vmul.f32 %v2306, %v2306
      %v2339 = vmul.f32 %v2307, %v2307
      %v2340 = vmul.f32 %v2308, %v2308
      %v2341 = vmul.f32 %v2309, %v2309
      %v2342 = vmul.f32 %v2310, %v2310
      %v2343 = vmul.f32 %v2311, %v2311
      %v2344 = vmul.f32 %v2312, %v2312
      %v2345 = vmul.f32 %v2313, %v2313
      %v2346 = vmul.f32 %v2314, %v2314
      %v2347 = vmul.f32 %v2315, %v2315
      %v2348 = vmul.f32 %v2316, %v2316
      %v2349 = vmul.f32 %v2317, %v2317
      %v2350 = vmul.f32 %v2318, %v2318
      %v2351 = vmul.f32 %v2319, %v2319
      %v2352 = vmul.f32 %v2320, %v2320
      %v2353 = vmul.f32 %v2321, %v2321
      %v2354 = vmul.f32 %v2322, %v2322
      %v2355 = vmul.f32 %v2323, %v2323
      %v2356 = vmul.f32 %v2324, %v2324
      %v2357 = vmul.f32 %v2325, %v2325
      %v2358 = vadd.f32 %v2326, %v2327
      %v2359 = vadd.f32 %v2358, %v2328
      %v2360 = vadd.f32 %v2359, %v2329
      %v2361 = vadd.f32 %v2360, %v2330
      %v2362 = vadd.f32 %v2361, %v2331
      %v2363 = vadd.f32 %v2362, %v2332
      %v2364 = vadd.f32 %v2363, %v2333
      %v2365 = vadd.f32 %v2364, %v2334
      %v2366 = vadd.f32 %v2365, %v2335
      %v2367 = vadd.f32 %v2366, %v2336
      %v2368 = vadd.f32 %v2367, %v2337
      %v2369 = vadd.f32 %v2368, %v2338
      %v2370 = vadd.f32 %v2369, %v2339
      %v2371 = vadd.f32 %v2370, %v2340
      %v2372 = vadd.f32 %v2371, %v2341
      %v2373 = vadd.f32 %v2372, %v2342
      %v2374 = vadd.f32 %v2373, %v2343
      %v2375 = vadd.f32 %v2374, %v2344
      %v2376 = vadd.f32 %v2375, %v2345
      %v2377 = vadd.f32 %v2376, %v2346
      %v2378 = vadd.f32 %v2377, %v2347
      %v2379 = vadd.f32 %v2378, %v2348
      %v2380 = vadd.f32 %v2379, %v2349
      %v2381 = vadd.f32 %v2380, %v2350
      %v2382 = vadd.f32 %v2381, %v2351
      %v2383 = vadd.f32 %v2382, %v2352
      %v2384 = vadd.f32 %v2383, %v2353
      %v2385 = vadd.f32 %v2384, %v2354
      %v2386 = vadd.f32 %v2385, %v2355
      %v2387 = vadd.f32 %v2386, %v2356
      %v2388 = vadd.f32 %v2387, %v2357
      %v2389 = vrot.slane %v2388, 4
      %v2390 = vadd.f32 %v2388, %v2389
      %v2391 = vrot.slane %v2390, 2
      %v2392 = vadd.f32 %v2390, %v2391
      %v2393 = vrot.slane %v2392, 1
      %v2394 = vadd.f32 %v2392, %v2393
      %2395 = vst [vmem:[%s235] sm:$0x1] %v2293
      %2396 = vst [vmem:[%s235 + $0x1] sm:$0x1] %v2394
      %2397 = vst [vmem:[%s231] sm:$0xff] %v2098
      %2398 = vst [vmem:[%s231 + $0x8] sm:$0xff] %v2103
      %2399 = vst [vmem:[%s231 + $0x10] sm:$0xff] %v2108
      %2400 = vst [vmem:[%s231 + $0x18] sm:$0xff] %v2113
      %2401 = vst [vmem:[%s231 + $0x20] sm:$0xff] %v2118
      %2402 = vst [vmem:[%s231 + $0x28] sm:$0xff] %v2123
      %2403 = vst [vmem:[%s231 + $0x30] sm:$0xff] %v2128
      %2404 = vst [vmem:[%s231 + $0x38] sm:$0xff] %v2133
      %2405 = vst [vmem:[%s231 + $0x40] sm:$0xff] %v2138
      %2406 = vst [vmem:[%s231 + $0x48] sm:$0xff] %v2143
      %2407 = vst [vmem:[%s231 + $0x50] sm:$0xff] %v2148
      %2408 = vst [vmem:[%s231 + $0x58] sm:$0xff] %v2153
      %2409 = vst [vmem:[%s231 + $0x60] sm:$0xff] %v2158
      %2410 = vst [vmem:[%s231 + $0x68] sm:$0xff] %v2163
      %2411 = vst [vmem:[%s231 + $0x70] sm:$0xff] %v2168
      %2412 = vst [vmem:[%s231 + $0x78] sm:$0xff] %v2173
      %2413 = vst [vmem:[%s231 + $0x80] sm:$0xff] %v2178
      %2414 = vst [vmem:[%s231 + $0x88] sm:$0xff] %v2183
      %2415 = vst [vmem:[%s231 + $0x90] sm:$0xff] %v2188
      %2416 = vst [vmem:[%s231 + $0x98] sm:$0xff] %v2193
      %2417 = vst [vmem:[%s231 + $0xa0] sm:$0xff] %v2198
      %2418 = vst [vmem:[%s231 + $0xa8] sm:$0xff] %v2203
      %2419 = vst [vmem:[%s231 + $0xb0] sm:$0xff] %v2208
      %2420 = vst [vmem:[%s231 + $0xb8] sm:$0xff] %v2213
      %2421 = vst [vmem:[%s231 + $0xc0] sm:$0xff] %v2218
      %2422 = vst [vmem:[%s231 + $0xc8] sm:$0xff] %v2223
      %2423 = vst [vmem:[%s231 + $0xd0] sm:$0xff] %v2228
      %2424 = vst [vmem:[%s231 + $0xd8] sm:$0xff] %v2233
      %2425 = vst [vmem:[%s231 + $0xe0] sm:$0xff] %v2238
      %2426 = vst [vmem:[%s231 + $0xe8] sm:$0xff] %v2243
      %2427 = vst [vmem:[%s231 + $0xf0] sm:$0xff] %v2248
      %2428 = vst [vmem:[%s231 + $0xf8] sm:$0xff] %v2253
      %p2429 = scmp.lt.s32.totalorder %s17, 1
      %s2430 = scalar_select %p2429, %s17, 1
      %s2431 = smul.addr %s2430, 32
      %s2432 = smul.addr %s2431, 8
      %s2433 = scalar_lea.vmem %s4, %s2432
      %p2434 = scmp.lt.s32.totalorder %s17, 1
      %s2435 = scalar_select %p2434, %s17, 1
      %s2436 = smul.addr %s2435, 2
      %s2437 = scalar_lea.vmem %s5, %s2436
      // Predicated region
      $region37: #{res_block_forward.4} parent=35 // pred_check
        %p2438 = pneg %p124
      $region38: #{res_block_forward.4} parent=35 // pred_check_branch
        %2440 = sbr.rel (%p2438) target = $region40
      $region39: #{res_block_forward.4} parent=35 // pred_region
        _
      $region40: #{res_block_forward.4} parent=35 // pred_fallthru
        _
      // Predicated region
      $region41: #{res_block_forward.4} parent=35 // pred_check
        %p2441 = pneg %p150
      $region42: #{res_block_forward.4} parent=35 // pred_check_branch
        %2443 = sbr.rel (%p2441) target = $region44
      $region43: #{res_block_forward.4} parent=35 // pred_region
        _
      $region44: #{res_block_forward.4} parent=35 // pred_fallthru
        _
    $region36: #{res_block_forward.4} parent=5 // pred_fallthru
      _
    %p2444 = scmp.le.s32.totalorder 2, %s12
    // Predicated region
    $region45: #{res_block_forward.4} parent=5 // pred_check
      %p2445 = pneg %p2444
    $region46: #{res_block_forward.4} parent=5 // pred_check_branch
      %2447 = sbr.rel (%p2445) target = $region48
    $region47: #{res_block_forward.4} parent=5 // pred_region
      %s2448 = ssub.s32 %s12, 2
      // Predicated region
      $region49: #{res_block_forward.4} parent=47 // pred_check
        %p2449 = pneg %p130
      $region50: #{res_block_forward.4} parent=47 // pred_check_branch
        %2451 = sbr.rel (%p2449) target = $region52
      $region51: #{res_block_forward.4} parent=47 // pred_region
        %p2452 = scmp.lt.s32.totalorder %s18, 1
        %s2453 = scalar_select %p2452, %s18, 1
        %s2454 = smul.addr %s2453, 32
        %s2455 = smul.addr %s2454, 8
        %s2456 = scalar_lea.vmem %s4, %s2455
      $region52: #{res_block_forward.4} parent=47 // pred_fallthru
        _
      // Predicated region
      $region53: #{res_block_forward.4} parent=47 // pred_check
        %p2457 = pneg %p156
      $region54: #{res_block_forward.4} parent=47 // pred_check_branch
        %2459 = sbr.rel (%p2457) target = $region56
      $region55: #{res_block_forward.4} parent=47 // pred_region
        %p2460 = scmp.lt.s32.totalorder %s18, 1
        %s2461 = scalar_select %p2460, %s18, 1
        %s2462 = smul.addr %s2461, 2
        %s2463 = scalar_lea.vmem %s5, %s2462
      $region56: #{res_block_forward.4} parent=47 // pred_fallthru
        _
    $region48: #{res_block_forward.4} parent=5 // pred_fallthru
      _
  $region6: #{res_block_forward.4} parent=0 // loop_footer
    %s16 = sadd.s32 1, %s12
  $region7: #{res_block_forward.4} parent=0 // loop_footer_branch
    %11 = sbr.rel target = $region3
  $region8: #{res_block_forward.4} parent=0 // loop_exit
    _

</llo_original>
